<compile_context>
chip_gen: v6e
topology: v6e:2x2x1
jax: 0.10.0
libtpu: 0.0.40
codegen_flags: <defaults>
</compile_context>

<pallas_src>
import functools

import jax
import jax.numpy as jnp
from jax.experimental import pallas as pl
from jax.experimental.pallas import tpu as pltpu  # noqa: F401  (CompilerParams needed only at GEN_SIZE=1024)

# Hyperparameters (generator_size scaled down from 1024 -> 128 for the demo).
LATENT_SIZE = 32
GEN_SIZE = 128
BATCH = 2
BN_EPS = 1e-5

# (name, kernel, stride, pad, Cin, Cout) — mirrors the PyTorch tcnn Sequential.
CONV_CFG = [
    ("ct1", 4, 1, 0, GEN_SIZE, GEN_SIZE),
    ("ct2", 3, 2, 1, GEN_SIZE, GEN_SIZE // 2),
    ("ct3", 4, 2, 1, GEN_SIZE // 2, GEN_SIZE // 4),
    ("ct4", 4, 2, 1, GEN_SIZE // 4, 1),
]


# ----------------------------- Pallas kernels ------------------------------

def _head_kernel(lat_ref, ew_ref, eb_ref, w1_ref, o_ref):
    """latent_embedding (Linear) + ct1 tap matmul, both on the MXU.

    ct1 has a 1x1 input, so its transposed conv is exactly h @ W1_mat with
    W1_mat = (Cin, k*k*Cout); the taps ARE the 4x4 output pixels (pre-bias).
    """
    h = jnp.dot(lat_ref[...], ew_ref[...], preferred_element_type=jnp.float32)
    h = h + eb_ref[...]
    o_ref[...] = jnp.dot(h, w1_ref[...], preferred_element_type=jnp.float32)


def _bn_relu_matmul_kernel(y_ref, b_ref, g_ref, beta_ref, w_ref, o_ref, *, eps):
    """Fused (conv bias + BatchNorm(train stats) + ReLU) prologue of layer i
    followed by layer i+1's direct transposed-conv matmul.

    y_ref: (M, C) pre-bias conv output (M = B*H*W); single full block, so the
           batch statistics are computed in-kernel on the VPU/XLU.
    w_ref: (C, k*k*Cout_next) direct-deconv weight of the NEXT layer.
    """
    y = y_ref[...] + b_ref[...]
    m = y.shape[0]
    mean = jnp.sum(y, axis=0, keepdims=True) * (1.0 / m)
    cen = y - mean
    var = jnp.sum(cen * cen, axis=0, keepdims=True) * (1.0 / m)  # biased var (torch training mode)
    xhat = cen * jax.lax.rsqrt(var + eps)
    x = jnp.maximum(xhat * g_ref[...] + beta_ref[...], 0.0)
    o_ref[...] = jnp.dot(x, w_ref[...], preferred_element_type=jnp.float32)


def _bias_tanh_kernel(y_ref, b_ref, o_ref):
    """Final conv bias + Tanh epilogue (applied after the overlap-add)."""
    o_ref[...] = jnp.tanh(y_ref[...] + b_ref[...])


# ------------------------------- glue (JAX) --------------------------------

def _deconv_weight_mat(w_pt):
    """torch ConvTranspose2d weight (Cin, Cout, kh, kw) -> (Cin, kh*kw*Cout)."""
    cin, cout, kh, kw = w_pt.shape
    return jnp.transpose(w_pt, (0, 2, 3, 1)).reshape(cin, kh * kw * cout)


def _col2im_add(taps, B, H, W, k, s, p, cout, Hout, Wout):
    """Overlap-add of per-input-pixel taps (B*H*W, k*k*cout) -> NHWC output.

    # TODO(synk): the strided scatter-add (col2im) stays in XLA — there is no
    # robust strided-store Pallas formulation at these odd spatial sizes.
    """
    t6 = taps.reshape(B, H, W, k, k, cout)
    acc = jnp.zeros((B, (H - 1) * s + k, (W - 1) * s + k, cout), taps.dtype)
    for kh in range(k):
        for kw in range(k):
            acc = acc.at[:, kh:kh + (H - 1) * s + 1:s,
                         kw:kw + (W - 1) * s + 1:s, :].add(t6[:, :, :, kh, kw, :])
    return acc[:, p:p + Hout, p:p + Wout, :]


def generator_forward(params, latent):
    B = latent.shape[0]
    wmats = {name: _deconv_weight_mat(params[name + "_w"]) for (name, *_r) in CONV_CFG}

    # Kernel 1: latent_embedding + ct1 taps (1x1 input -> taps == output pixels).
    name1, k1, _s1, _p1, _cin1, cout1 = CONV_CFG[0]
    taps1 = pl.pallas_call(
        _head_kernel,
        out_shape=jax.ShapeDtypeStruct((B, k1 * k1 * cout1), jnp.float32),
    )(latent, params["emb_w"], params["emb_b"].reshape(1, -1), wmats[name1])
    y = taps1.reshape(B * k1 * k1, cout1)      # NHWC (B, 4, 4, C) flattened, pre-bias
    Hc = Wc = k1

    # Kernels 2-4: fused (bias+BN+ReLU of layer i) + (matmul of layer i+1),
    # each followed by the overlap-add in the wrapper.
    for i in range(3):
        name_i, _, _, _, _, cout_i = CONV_CFG[i]
        name_n, k_n, s_n, p_n, _, cout_n = CONV_CFG[i + 1]
        taps = pl.pallas_call(
            functools.partial(_bn_relu_matmul_kernel, eps=BN_EPS),
            out_shape=jax.ShapeDtypeStruct((y.shape[0], k_n * k_n * cout_n), jnp.float32),
        )(y,
          params[name_i + "_b"].reshape(1, cout_i),
          params[name_i + "_bn_g"].reshape(1, cout_i),
          params[name_i + "_bn_b"].reshape(1, cout_i),
          wmats[name_n])
        Hout = (Hc - 1) * s_n - 2 * p_n + k_n
        Wout = (Wc - 1) * s_n - 2 * p_n + k_n
        ynhwc = _col2im_add(taps, B, Hc, Wc, k_n, s_n, p_n, cout_n, Hout, Wout)
        Hc, Wc = Hout, Wout
        y = ynhwc.reshape(B * Hc * Wc, cout_n)

    # Kernel 5: final bias + Tanh.  ct4 has Cout=1, so NHWC->NCHW is a pure reshape.
    img = y.reshape(B, Hc, Wc)
    out = pl.pallas_call(
        _bias_tanh_kernel,
        out_shape=jax.ShapeDtypeStruct((B, Hc, Wc), jnp.float32),
    )(img, params["ct4_b"].reshape(1, 1, 1))
    return out.reshape(B, 1, Hc, Wc)           # NCHW, matches PyTorch


# ------------------------- pure-JAX reference check -------------------------

def _conv_transpose_ref(x, w_pt, b, k, s, p):
    B, H, W, Cin = x.shape
    Cout = w_pt.shape[1]
    Hout = (H - 1) * s - 2 * p + k
    Wout = (W - 1) * s - 2 * p + k
    acc = jnp.zeros((B, (H - 1) * s + k, (W - 1) * s + k, Cout), jnp.float32)
    for kh in range(k):
        for kw in range(k):
            contrib = jnp.einsum("bhwc,cd->bhwd", x, w_pt[:, :, kh, kw], precision="highest")
            acc = acc.at[:, kh:kh + (H - 1) * s + 1:s, kw:kw + (W - 1) * s + 1:s, :].add(contrib)
    return acc[:, p:p + Hout, p:p + Wout, :] + b


def generator_forward_ref(params, latent):
    B = latent.shape[0]
    h = jnp.einsum("bk,kn->bn", latent, params["emb_w"], precision="highest") + params["emb_b"]
    x = h.reshape(B, 1, 1, GEN_SIZE)
    for name, k, s, p, _, _ in CONV_CFG[:-1]:
        y = _conv_transpose_ref(x, params[name + "_w"], params[name + "_b"], k, s, p)
        mean = jnp.mean(y, axis=(0, 1, 2))
        var = jnp.mean((y - mean) ** 2, axis=(0, 1, 2))
        y = (y - mean) / jnp.sqrt(var + BN_EPS)
        y = y * params[name + "_bn_g"] + params[name + "_bn_b"]
        x = jnp.maximum(y, 0.0)
    name, k, s, p, _, _ = CONV_CFG[-1]
    y = jnp.tanh(_conv_transpose_ref(x, params[name + "_w"], params[name + "_b"], k, s, p))
    return jnp.transpose(y, (0, 3, 1, 2))


# ------------------------------ params / main -------------------------------

def init_params(key):
    ks = jax.random.split(key, 16)

    def nrm(k, shape, scale=0.05):
        return scale * jax.random.normal(k, shape, jnp.float32)

    params = {
        "emb_w": nrm(ks[0], (LATENT_SIZE, GEN_SIZE)),
        "emb_b": nrm(ks[1], (GEN_SIZE,), 0.01),
    }
    for idx, (name, k, _, _, cin, cout) in enumerate(CONV_CFG):
        params[name + "_w"] = nrm(ks[2 + 2 * idx], (cin, cout, k, k))
        params[name + "_b"] = nrm(ks[3 + 2 * idx], (cout,), 0.01)
        if name != "ct4":  # last layer has no BatchNorm
            params[name + "_bn_g"] = jnp.ones((cout,), jnp.float32)   # torch default init
            params[name + "_bn_b"] = jnp.zeros((cout,), jnp.float32)
    return params


if __name__ == "__main__":
    key = jax.random.PRNGKey(0)
    pkey, lkey = jax.random.split(key)
    params = init_params(pkey)
    latent = jax.random.normal(lkey, (BATCH, LATENT_SIZE), jnp.float32)

    out = jax.jit(generator_forward)(params, latent)
    out = jax.block_until_ready(out)
    assert out.shape == (BATCH, 1, 28, 28), out.shape

    ref = generator_forward_ref(params, latent)
    max_err = float(jnp.max(jnp.abs(out - ref)))
    if max_err > 5e-3:
        raise AssertionError(f"Pallas output mismatch vs reference, max abs err = {max_err}")

    print("KERNEL_OK")
</pallas_src>

<mosaic_0001>
module attributes {stable_mosaic.version = 11 : i64} {
  func.func @_head_kernel(%arg0: memref<2x32xf32, #tpu.memory_space<vmem>>, %arg1: memref<32x128xf32, #tpu.memory_space<vmem>>, %arg2: memref<1x128xf32, #tpu.memory_space<vmem>>, %arg3: memref<128x2048xf32, #tpu.memory_space<vmem>>, %arg4: memref<2x2048xf32, #tpu.memory_space<vmem>>) attributes {dimension_semantics = [], scalar_prefetch = 0 : i64, scratch_operands = 0 : i64, tpu.core_type = #tpu.core_type<tc>} {
    %c0 = arith.constant 0 : index
    %c0_0 = arith.constant 0 : index
    %0 = vector.load %arg0[%c0, %c0_0] : memref<2x32xf32, #tpu.memory_space<vmem>>, vector<2x32xf32>
    %c0_1 = arith.constant 0 : index
    %c0_2 = arith.constant 0 : index
    %1 = vector.load %arg1[%c0_1, %c0_2] : memref<32x128xf32, #tpu.memory_space<vmem>>, vector<32x128xf32>
    %cst = arith.constant dense<0.000000e+00> : vector<2x128xf32>
    %2 = tpu.matmul %0, %1, %cst {dimension_numbers = #tpu.dot_dimension_numbers<[1], [0], [0], [1], [0, 0, 1, 1], [], []>} : vector<2x32xf32>, vector<32x128xf32>, vector<2x128xf32> -> vector<2x128xf32>
    %c0_3 = arith.constant 0 : index
    %c0_4 = arith.constant 0 : index
    %3 = vector.load %arg2[%c0_3, %c0_4] : memref<1x128xf32, #tpu.memory_space<vmem>>, vector<1x128xf32>
    %4 = vector.broadcast %3 : vector<1x128xf32> to vector<2x128xf32>
    %5 = arith.addf %2, %4 : vector<2x128xf32>
    %c0_5 = arith.constant 0 : index
    %c0_6 = arith.constant 0 : index
    %6 = vector.load %arg3[%c0_5, %c0_6] : memref<128x2048xf32, #tpu.memory_space<vmem>>, vector<128x2048xf32>
    %cst_7 = arith.constant dense<0.000000e+00> : vector<2x2048xf32>
    %7 = tpu.matmul %5, %6, %cst_7 {dimension_numbers = #tpu.dot_dimension_numbers<[1], [0], [0], [1], [0, 0, 1, 1], [], []>} : vector<2x128xf32>, vector<128x2048xf32>, vector<2x2048xf32> -> vector<2x2048xf32>
    %c0_8 = arith.constant 0 : index
    %c0_9 = arith.constant 0 : index
    %8 = vector.load %arg4[%c0_8, %c0_9] : memref<2x2048xf32, #tpu.memory_space<vmem>>, vector<2x2048xf32>
    tpu.vector_store %arg4[%c0_8, %c0_9], %7 {strides = array<i32>} : memref<2x2048xf32, #tpu.memory_space<vmem>>, vector<2x2048xf32>,
    return
  }
}

module attributes {stable_mosaic.version = 11 : i64} {
  func.func @_bn_relu_matmul_kernel(%arg0: memref<32x128xf32, #tpu.memory_space<vmem>>, %arg1: memref<1x128xf32, #tpu.memory_space<vmem>>, %arg2: memref<1x128xf32, #tpu.memory_space<vmem>>, %arg3: memref<1x128xf32, #tpu.memory_space<vmem>>, %arg4: memref<128x576xf32, #tpu.memory_space<vmem>>, %arg5: memref<32x576xf32, #tpu.memory_space<vmem>>) attributes {dimension_semantics = [], scalar_prefetch = 0 : i64, scratch_operands = 0 : i64, tpu.core_type = #tpu.core_type<tc>} {
    %c0 = arith.constant 0 : index
    %c0_0 = arith.constant 0 : index
    %0 = vector.load %arg0[%c0, %c0_0] : memref<32x128xf32, #tpu.memory_space<vmem>>, vector<32x128xf32>
    %c0_1 = arith.constant 0 : index
    %c0_2 = arith.constant 0 : index
    %1 = vector.load %arg1[%c0_1, %c0_2] : memref<1x128xf32, #tpu.memory_space<vmem>>, vector<1x128xf32>
    %2 = vector.broadcast %1 : vector<1x128xf32> to vector<32x128xf32>
    %3 = arith.addf %0, %2 : vector<32x128xf32>
    %cst = arith.constant dense<0.000000e+00> : vector<128xf32>
    %4 = vector.multi_reduction <add>, %3, %cst [0] : vector<32x128xf32> to vector<128xf32>
    %5 = vector.shape_cast %4 : vector<128xf32> to vector<1x128xf32>
    %cst_3 = arith.constant 3.125000e-02 : f32
    %6 = vector.broadcast %cst_3 : f32 to vector<1x128xf32>
    %7 = arith.mulf %5, %6 : vector<1x128xf32>
    %8 = vector.broadcast %7 : vector<1x128xf32> to vector<32x128xf32>
    %9 = arith.subf %3, %8 : vector<32x128xf32>
    %10 = arith.mulf %9, %9 : vector<32x128xf32>
    %cst_4 = arith.constant dense<0.000000e+00> : vector<128xf32>
    %11 = vector.multi_reduction <add>, %10, %cst_4 [0] : vector<32x128xf32> to vector<128xf32>
    %12 = vector.shape_cast %11 : vector<128xf32> to vector<1x128xf32>
    %cst_5 = arith.constant 3.125000e-02 : f32
    %13 = vector.broadcast %cst_5 : f32 to vector<1x128xf32>
    %14 = arith.mulf %12, %13 : vector<1x128xf32>
    %cst_6 = arith.constant 9.99999974E-6 : f32
    %15 = vector.broadcast %cst_6 : f32 to vector<1x128xf32>
    %16 = arith.addf %14, %15 : vector<1x128xf32>
    %17 = math.rsqrt %16 : vector<1x128xf32>
    %18 = vector.broadcast %17 : vector<1x128xf32> to vector<32x128xf32>
    %19 = arith.mulf %9, %18 : vector<32x128xf32>
    %c0_7 = arith.constant 0 : index
    %c0_8 = arith.constant 0 : index
    %20 = vector.load %arg2[%c0_7, %c0_8] : memref<1x128xf32, #tpu.memory_space<vmem>>, vector<1x128xf32>
    %21 = vector.broadcast %20 : vector<1x128xf32> to vector<32x128xf32>
    %22 = arith.mulf %19, %21 : vector<32x128xf32>
    %c0_9 = arith.constant 0 : index
    %c0_10 = arith.constant 0 : index
    %23 = vector.load %arg3[%c0_9, %c0_10] : memref<1x128xf32, #tpu.memory_space<vmem>>, vector<1x128xf32>
    %24 = vector.broadcast %23 : vector<1x128xf32> to vector<32x128xf32>
    %25 = arith.addf %22, %24 : vector<32x128xf32>
    %cst_11 = arith.constant 0.000000e+00 : f32
    %26 = vector.broadcast %cst_11 : f32 to vector<32x128xf32>
    %27 = arith.maximumf %25, %26 : vector<32x128xf32>
    %c0_12 = arith.constant 0 : index
    %c0_13 = arith.constant 0 : index
    %28 = vector.load %arg4[%c0_12, %c0_13] : memref<128x576xf32, #tpu.memory_space<vmem>>, vector<128x576xf32>
    %cst_14 = arith.constant dense<0.000000e+00> : vector<32x576xf32>
    %29 = tpu.matmul %27, %28, %cst_14 {dimension_numbers = #tpu.dot_dimension_numbers<[1], [0], [0], [1], [0, 0, 1, 1], [], []>} : vector<32x128xf32>, vector<128x576xf32>, vector<32x576xf32> -> vector<32x576xf32>
    %c0_15 = arith.constant 0 : index
    %c0_16 = arith.constant 0 : index
    %30 = vector.load %arg5[%c0_15, %c0_16] : memref<32x576xf32, #tpu.memory_space<vmem>>, vector<32x576xf32>
    tpu.vector_store %arg5[%c0_15, %c0_16], %29 {strides = array<i32>} : memref<32x576xf32, #tpu.memory_space<vmem>>, vector<32x576xf32>,
    return
  }
}

module attributes {stable_mosaic.version = 11 : i64} {
  func.func @_bn_relu_matmul_kernel(%arg0: memref<98x64xf32, #tpu.memory_space<vmem>>, %arg1: memref<1x64xf32, #tpu.memory_space<vmem>>, %arg2: memref<1x64xf32, #tpu.memory_space<vmem>>, %arg3: memref<1x64xf32, #tpu.memory_space<vmem>>, %arg4: memref<64x512xf32, #tpu.memory_space<vmem>>, %arg5: memref<98x512xf32, #tpu.memory_space<vmem>>) attributes {dimension_semantics = [], scalar_prefetch = 0 : i64, scratch_operands = 0 : i64, tpu.core_type = #tpu.core_type<tc>} {
    %c0 = arith.constant 0 : index
    %c0_0 = arith.constant 0 : index
    %0 = vector.load %arg0[%c0, %c0_0] : memref<98x64xf32, #tpu.memory_space<vmem>>, vector<98x64xf32>
    %c0_1 = arith.constant 0 : index
    %c0_2 = arith.constant 0 : index
    %1 = vector.load %arg1[%c0_1, %c0_2] : memref<1x64xf32, #tpu.memory_space<vmem>>, vector<1x64xf32>
    %2 = vector.broadcast %1 : vector<1x64xf32> to vector<98x64xf32>
    %3 = arith.addf %0, %2 : vector<98x64xf32>
    %cst = arith.constant dense<0.000000e+00> : vector<64xf32>
    %4 = vector.multi_reduction <add>, %3, %cst [0] : vector<98x64xf32> to vector<64xf32>
    %5 = vector.shape_cast %4 : vector<64xf32> to vector<1x64xf32>
    %cst_3 = arith.constant 0.0102040814 : f32
    %6 = vector.broadcast %cst_3 : f32 to vector<1x64xf32>
    %7 = arith.mulf %5, %6 : vector<1x64xf32>
    %8 = vector.broadcast %7 : vector<1x64xf32> to vector<98x64xf32>
    %9 = arith.subf %3, %8 : vector<98x64xf32>
    %10 = arith.mulf %9, %9 : vector<98x64xf32>
    %cst_4 = arith.constant dense<0.000000e+00> : vector<64xf32>
    %11 = vector.multi_reduction <add>, %10, %cst_4 [0] : vector<98x64xf32> to vector<64xf32>
    %12 = vector.shape_cast %11 : vector<64xf32> to vector<1x64xf32>
    %cst_5 = arith.constant 0.0102040814 : f32
    %13 = vector.broadcast %cst_5 : f32 to vector<1x64xf32>
    %14 = arith.mulf %12, %13 : vector<1x64xf32>
    %cst_6 = arith.constant 9.99999974E-6 : f32
    %15 = vector.broadcast %cst_6 : f32 to vector<1x64xf32>
    %16 = arith.addf %14, %15 : vector<1x64xf32>
    %17 = math.rsqrt %16 : vector<1x64xf32>
    %18 = vector.broadcast %17 : vector<1x64xf32> to vector<98x64xf32>
    %19 = arith.mulf %9, %18 : vector<98x64xf32>
    %c0_7 = arith.constant 0 : index
    %c0_8 = arith.constant 0 : index
    %20 = vector.load %arg2[%c0_7, %c0_8] : memref<1x64xf32, #tpu.memory_space<vmem>>, vector<1x64xf32>
    %21 = vector.broadcast %20 : vector<1x64xf32> to vector<98x64xf32>
    %22 = arith.mulf %19, %21 : vector<98x64xf32>
    %c0_9 = arith.constant 0 : index
    %c0_10 = arith.constant 0 : index
    %23 = vector.load %arg3[%c0_9, %c0_10] : memref<1x64xf32, #tpu.memory_space<vmem>>, vector<1x64xf32>
    %24 = vector.broadcast %23 : vector<1x64xf32> to vector<98x64xf32>
    %25 = arith.addf %22, %24 : vector<98x64xf32>
    %cst_11 = arith.constant 0.000000e+00 : f32
    %26 = vector.broadcast %cst_11 : f32 to vector<98x64xf32>
    %27 = arith.maximumf %25, %26 : vector<98x64xf32>
    %c0_12 = arith.constant 0 : index
    %c0_13 = arith.constant 0 : index
    %28 = vector.load %arg4[%c0_12, %c0_13] : memref<64x512xf32, #tpu.memory_space<vmem>>, vector<64x512xf32>
    %cst_14 = arith.constant dense<0.000000e+00> : vector<98x512xf32>
    %29 = tpu.matmul %27, %28, %cst_14 {dimension_numbers = #tpu.dot_dimension_numbers<[1], [0], [0], [1], [0, 0, 1, 1], [], []>} : vector<98x64xf32>, vector<64x512xf32>, vector<98x512xf32> -> vector<98x512xf32>
    %c0_15 = arith.constant 0 : index
    %c0_16 = arith.constant 0 : index
    %30 = vector.load %arg5[%c0_15, %c0_16] : memref<98x512xf32, #tpu.memory_space<vmem>>, vector<98x512xf32>
    tpu.vector_store %arg5[%c0_15, %c0_16], %29 {strides = array<i32>} : memref<98x512xf32, #tpu.memory_space<vmem>>, vector<98x512xf32>,
    return
  }
}

module attributes {stable_mosaic.version = 11 : i64} {
  func.func @_bn_relu_matmul_kernel(%arg0: memref<392x32xf32, #tpu.memory_space<vmem>>, %arg1: memref<1x32xf32, #tpu.memory_space<vmem>>, %arg2: memref<1x32xf32, #tpu.memory_space<vmem>>, %arg3: memref<1x32xf32, #tpu.memory_space<vmem>>, %arg4: memref<32x16xf32, #tpu.memory_space<vmem>>, %arg5: memref<392x16xf32, #tpu.memory_space<vmem>>) attributes {dimension_semantics = [], scalar_prefetch = 0 : i64, scratch_operands = 0 : i64, tpu.core_type = #tpu.core_type<tc>} {
    %c0 = arith.constant 0 : index
    %c0_0 = arith.constant 0 : index
    %0 = vector.load %arg0[%c0, %c0_0] : memref<392x32xf32, #tpu.memory_space<vmem>>, vector<392x32xf32>
    %c0_1 = arith.constant 0 : index
    %c0_2 = arith.constant 0 : index
    %1 = vector.load %arg1[%c0_1, %c0_2] : memref<1x32xf32, #tpu.memory_space<vmem>>, vector<1x32xf32>
    %2 = vector.broadcast %1 : vector<1x32xf32> to vector<392x32xf32>
    %3 = arith.addf %0, %2 : vector<392x32xf32>
    %cst = arith.constant dense<0.000000e+00> : vector<32xf32>
    %4 = vector.multi_reduction <add>, %3, %cst [0] : vector<392x32xf32> to vector<32xf32>
    %5 = vector.shape_cast %4 : vector<32xf32> to vector<1x32xf32>
    %cst_3 = arith.constant 0.00255102036 : f32
    %6 = vector.broadcast %cst_3 : f32 to vector<1x32xf32>
    %7 = arith.mulf %5, %6 : vector<1x32xf32>
    %8 = vector.broadcast %7 : vector<1x32xf32> to vector<392x32xf32>
    %9 = arith.subf %3, %8 : vector<392x32xf32>
    %10 = arith.mulf %9, %9 : vector<392x32xf32>
    %cst_4 = arith.constant dense<0.000000e+00> : vector<32xf32>
    %11 = vector.multi_reduction <add>, %10, %cst_4 [0] : vector<392x32xf32> to vector<32xf32>
    %12 = vector.shape_cast %11 : vector<32xf32> to vector<1x32xf32>
    %cst_5 = arith.constant 0.00255102036 : f32
    %13 = vector.broadcast %cst_5 : f32 to vector<1x32xf32>
    %14 = arith.mulf %12, %13 : vector<1x32xf32>
    %cst_6 = arith.constant 9.99999974E-6 : f32
    %15 = vector.broadcast %cst_6 : f32 to vector<1x32xf32>
    %16 = arith.addf %14, %15 : vector<1x32xf32>
    %17 = math.rsqrt %16 : vector<1x32xf32>
    %18 = vector.broadcast %17 : vector<1x32xf32> to vector<392x32xf32>
    %19 = arith.mulf %9, %18 : vector<392x32xf32>
    %c0_7 = arith.constant 0 : index
    %c0_8 = arith.constant 0 : index
    %20 = vector.load %arg2[%c0_7, %c0_8] : memref<1x32xf32, #tpu.memory_space<vmem>>, vector<1x32xf32>
    %21 = vector.broadcast %20 : vector<1x32xf32> to vector<392x32xf32>
    %22 = arith.mulf %19, %21 : vector<392x32xf32>
    %c0_9 = arith.constant 0 : index
    %c0_10 = arith.constant 0 : index
    %23 = vector.load %arg3[%c0_9, %c0_10] : memref<1x32xf32, #tpu.memory_space<vmem>>, vector<1x32xf32>
    %24 = vector.broadcast %23 : vector<1x32xf32> to vector<392x32xf32>
    %25 = arith.addf %22, %24 : vector<392x32xf32>
    %cst_11 = arith.constant 0.000000e+00 : f32
    %26 = vector.broadcast %cst_11 : f32 to vector<392x32xf32>
    %27 = arith.maximumf %25, %26 : vector<392x32xf32>
    %c0_12 = arith.constant 0 : index
    %c0_13 = arith.constant 0 : index
    %28 = vector.load %arg4[%c0_12, %c0_13] : memref<32x16xf32, #tpu.memory_space<vmem>>, vector<32x16xf32>
    %cst_14 = arith.constant dense<0.000000e+00> : vector<392x16xf32>
    %29 = tpu.matmul %27, %28, %cst_14 {dimension_numbers = #tpu.dot_dimension_numbers<[1], [0], [0], [1], [0, 0, 1, 1], [], []>} : vector<392x32xf32>, vector<32x16xf32>, vector<392x16xf32> -> vector<392x16xf32>
    %c0_15 = arith.constant 0 : index
    %c0_16 = arith.constant 0 : index
    %30 = vector.load %arg5[%c0_15, %c0_16] : memref<392x16xf32, #tpu.memory_space<vmem>>, vector<392x16xf32>
    tpu.vector_store %arg5[%c0_15, %c0_16], %29 {strides = array<i32>} : memref<392x16xf32, #tpu.memory_space<vmem>>, vector<392x16xf32>,
    return
  }
}

module attributes {stable_mosaic.version = 11 : i64} {
  func.func @_bias_tanh_kernel(%arg0: memref<2x28x28xf32, #tpu.memory_space<vmem>>, %arg1: memref<1x1x1xf32, #tpu.memory_space<vmem>>, %arg2: memref<2x28x28xf32, #tpu.memory_space<vmem>>) attributes {dimension_semantics = [], scalar_prefetch = 0 : i64, scratch_operands = 0 : i64, tpu.core_type = #tpu.core_type<tc>} {
    %c0 = arith.constant 0 : index
    %c0_0 = arith.constant 0 : index
    %c0_1 = arith.constant 0 : index
    %0 = vector.load %arg0[%c0, %c0_0, %c0_1] : memref<2x28x28xf32, #tpu.memory_space<vmem>>, vector<2x28x28xf32>
    %c0_2 = arith.constant 0 : index
    %c0_3 = arith.constant 0 : index
    %c0_4 = arith.constant 0 : index
    %1 = vector.load %arg1[%c0_2, %c0_3, %c0_4] : memref<1x1x1xf32, #tpu.memory_space<vmem>>, vector<1x1x1xf32>
    %2 = vector.broadcast %1 : vector<1x1x1xf32> to vector<2x28x28xf32>
    %3 = arith.addf %0, %2 : vector<2x28x28xf32>
    %4 = math.tanh %3 : vector<2x28x28xf32>
    %c0_5 = arith.constant 0 : index
    %c0_6 = arith.constant 0 : index
    %c0_7 = arith.constant 0 : index
    %5 = vector.load %arg2[%c0_5, %c0_6, %c0_7] : memref<2x28x28xf32, #tpu.memory_space<vmem>>, vector<2x28x28xf32>
    tpu.vector_store %arg2[%c0_5, %c0_6, %c0_7], %4 {strides = array<i32>} : memref<2x28x28xf32, #tpu.memory_space<vmem>>, vector<2x28x28xf32>,
    return
  }
}

</mosaic_0001>

<llo_original>
// kernel: generator_forward.6
$region0: #{generator_forward.6}
  #allocation0 [shape = 'u32[]', space=smem, size = 0x4, offset = 0x4, fixed_abs, tag = 'smem constant byte address 0x4 - core index']
  #allocation1 [shape = 'u32[144,128]{1,0:T(1,128)}', space=vmem, size = 0x12000, scoped, tag = 'internal scratch']
  %s0 = inlined_call_operand.vmem [shape: f32[32,128], index: 0, kind: input, shape index: {}]
  %s1 = inlined_call_operand.vmem [shape: f32[1,128], index: 1, kind: input, shape index: {}]
  %s2 = inlined_call_operand.vmem [shape: f32[1,128], index: 2, kind: input, shape index: {}]
  %s3 = inlined_call_operand.vmem [shape: f32[1,128], index: 3, kind: input, shape index: {}]
  %s4 = inlined_call_operand.vmem [shape: f32[128,576], index: 4, kind: input, shape index: {}]
  %s5 = inlined_call_operand.vmem [shape: f32[32,576], index: 5, kind: output, shape index: {}]
  %s6 = sld [smem:[#allocation0]]
  $region30: #{generator_forward.6} parent=0
    _
  %s8 = ssub.s32 1, %s6
  %s9 = scalar_select 0, %s8, %s6
  // Predicated region
  $region2: #{generator_forward.6} parent=0 // pred_check
    _
  $region3: #{generator_forward.6} parent=0 // pred_check_branch
    %11 = sbr.rel (0) target = $region5
  $region4: #{generator_forward.6} parent=0 // pred_region
    _
  $region5: #{generator_forward.6} parent=0 // pred_fallthru
    _
  // Predicated region
  $region6: #{generator_forward.6} parent=0 // pred_check
    _
  $region7: #{generator_forward.6} parent=0 // pred_check_branch
    %13 = sbr.rel (0) target = $region9
  $region8: #{generator_forward.6} parent=0 // pred_region
    _
  $region9: #{generator_forward.6} parent=0 // pred_fallthru
    _
  // Predicated region
  $region10: #{generator_forward.6} parent=0 // pred_check
    _
  $region11: #{generator_forward.6} parent=0 // pred_check_branch
    %15 = sbr.rel (0) target = $region13
  $region12: #{generator_forward.6} parent=0 // pred_region
    _
  $region13: #{generator_forward.6} parent=0 // pred_fallthru
    _
  // Predicated region
  $region14: #{generator_forward.6} parent=0 // pred_check
    _
  $region15: #{generator_forward.6} parent=0 // pred_check_branch
    %17 = sbr.rel (0) target = $region17
  $region16: #{generator_forward.6} parent=0 // pred_region
    _
  $region17: #{generator_forward.6} parent=0 // pred_fallthru
    _
  // Predicated region
  $region18: #{generator_forward.6} parent=0 // pred_check
    _
  $region19: #{generator_forward.6} parent=0 // pred_check_branch
    %19 = sbr.rel (0) target = $region21
  $region20: #{generator_forward.6} parent=0 // pred_region
    _
  $region21: #{generator_forward.6} parent=0 // pred_fallthru
    _
  %v20 = vld [vmem:[%s0] sm:$0xff]
  %v21 = vld [vmem:[%s0 + $0x8] sm:$0xff]
  %v22 = vld [vmem:[%s0 + $0x10] sm:$0xff]
  %v23 = vld [vmem:[%s0 + $0x18] sm:$0xff]
  %v24 = vld [vmem:[%s1] sm:$0x1]
  %v26 = vlaneseq
  %v27 = vshrl.u32 %v26, 7
  %v28 = vsub.s32 0, %v27
  %v29 = vrot.slane %v24, %v28
  %v31 = vadd.f32 %v20, %v29
  %v32 = vadd.f32 %v21, %v29
  %v33 = vadd.f32 %v22, %v29
  %v34 = vadd.f32 %v23, %v29
  %v35 = vadd.f32 %v31, %v32
  %v36 = vadd.f32 %v35, %v33
  %v37 = vadd.f32 %v36, %v34
  %v38 = vrot.slane %v37, 4
  %v39 = vadd.f32 %v37, %v38
  %v40 = vrot.slane %v39, 2
  %v41 = vadd.f32 %v39, %v40
  %v42 = vrot.slane %v41, 1
  %v43 = vadd.f32 %v41, %v42
  %v44 = vmul.f32 %v43, 0.03125
  %v45 = vsub.f32 %v31, %v44
  %v46 = vsub.f32 %v32, %v44
  %v47 = vsub.f32 %v33, %v44
  %v48 = vsub.f32 %v34, %v44
  %v49 = vmul.f32 %v45, %v45
  %v50 = vmul.f32 %v46, %v46
  %v51 = vmul.f32 %v47, %v47
  %v52 = vmul.f32 %v48, %v48
  %v53 = vadd.f32 %v49, %v50
  %v54 = vadd.f32 %v53, %v51
  %v55 = vadd.f32 %v54, %v52
  %v56 = vrot.slane %v55, 4
  %v57 = vadd.f32 %v55, %v56
  %v58 = vrot.slane %v57, 2
  %v59 = vadd.f32 %v57, %v58
  %v60 = vrot.slane %v59, 1
  %v61 = vadd.f32 %v59, %v60
  %v62 = vmul.f32 %v61, 0.03125
  %v63 = vadd.f32 %v62, 1e-05
  %v64 = vrsqrt.pop %v63
  %v65 = vmul.f32 %v45, %v64
  %v66 = vmul.f32 %v46, %v64
  %v67 = vmul.f32 %v47, %v64
  %v68 = vmul.f32 %v48, %v64
  %v69 = vld [vmem:[%s2] sm:$0x1]
  %v71 = vlaneseq
  %v72 = vshrl.u32 %v71, 7
  %v73 = vsub.s32 0, %v72
  %v74 = vrot.slane %v69, %v73
  %v76 = vmul.f32 %v65, %v74
  %v77 = vmul.f32 %v66, %v74
  %v78 = vmul.f32 %v67, %v74
  %v79 = vmul.f32 %v68, %v74
  %v80 = vld [vmem:[%s3] sm:$0x1]
  %v82 = vlaneseq
  %v83 = vshrl.u32 %v82, 7
  %v84 = vsub.s32 0, %v83
  %v85 = vrot.slane %v80, %v84
  %v87 = vadd.f32 %v76, %v85
  %v88 = vadd.f32 %v77, %v85
  %v89 = vadd.f32 %v78, %v85
  %v90 = vadd.f32 %v79, %v85
  %v91 = vmax.f32 %v87, 0.0
  %v92 = vmax.f32 %v88, 0.0
  %v93 = vmax.f32 %v89, 0.0
  %v94 = vmax.f32 %v90, 0.0
  %v95 = vld [vmem:[%s4] sm:$0xff]
  %v96 = vld [vmem:[%s4 + $0x8] sm:$0xff]
  %v97 = vld [vmem:[%s4 + $0x10] sm:$0xff]
  %v98 = vld [vmem:[%s4 + $0x18] sm:$0xff]
  %v99 = vld [vmem:[%s4 + $0x20] sm:$0xff]
  %v100 = vld [vmem:[%s4 + $0x28] sm:$0xff]
  %v101 = vld [vmem:[%s4 + $0x30] sm:$0xff]
  %v102 = vld [vmem:[%s4 + $0x38] sm:$0xff]
  %v103 = vld [vmem:[%s4 + $0x40] sm:$0xff]
  %v104 = vld [vmem:[%s4 + $0x48] sm:$0xff]
  %v105 = vld [vmem:[%s4 + $0x50] sm:$0xff]
  %v106 = vld [vmem:[%s4 + $0x58] sm:$0xff]
  %v107 = vld [vmem:[%s4 + $0x60] sm:$0xff]
  %v108 = vld [vmem:[%s4 + $0x68] sm:$0xff]
  %v109 = vld [vmem:[%s4 + $0x70] sm:$0xff]
  %v110 = vld [vmem:[%s4 + $0x78] sm:$0xff]
  %v111 = vld [vmem:[%s4 + $0x80] sm:$0xff]
  %v112 = vld [vmem:[%s4 + $0x88] sm:$0xff]
  %v113 = vld [vmem:[%s4 + $0x90] sm:$0xff]
  %v114 = vld [vmem:[%s4 + $0x98] sm:$0xff]
  %v115 = vld [vmem:[%s4 + $0xa0] sm:$0xff]
  %v116 = vld [vmem:[%s4 + $0xa8] sm:$0xff]
  %v117 = vld [vmem:[%s4 + $0xb0] sm:$0xff]
  %v118 = vld [vmem:[%s4 + $0xb8] sm:$0xff]
  %v119 = vld [vmem:[%s4 + $0xc0] sm:$0xff]
  %v120 = vld [vmem:[%s4 + $0xc8] sm:$0xff]
  %v121 = vld [vmem:[%s4 + $0xd0] sm:$0xff]
  %v122 = vld [vmem:[%s4 + $0xd8] sm:$0xff]
  %v123 = vld [vmem:[%s4 + $0xe0] sm:$0xff]
  %v124 = vld [vmem:[%s4 + $0xe8] sm:$0xff]
  %v125 = vld [vmem:[%s4 + $0xf0] sm:$0xff]
  %v126 = vld [vmem:[%s4 + $0xf8] sm:$0xff]
  %v127 = vld [vmem:[%s4 + $0x100] sm:$0xff]
  %v128 = vld [vmem:[%s4 + $0x108] sm:$0xff]
  %v129 = vld [vmem:[%s4 + $0x110] sm:$0xff]
  %v130 = vld [vmem:[%s4 + $0x118] sm:$0xff]
  %v131 = vld [vmem:[%s4 + $0x120] sm:$0xff]
  %v132 = vld [vmem:[%s4 + $0x128] sm:$0xff]
  %v133 = vld [vmem:[%s4 + $0x130] sm:$0xff]
  %v134 = vld [vmem:[%s4 + $0x138] sm:$0xff]
  %v135 = vld [vmem:[%s4 + $0x140] sm:$0xff]
  %v136 = vld [vmem:[%s4 + $0x148] sm:$0xff]
  %v137 = vld [vmem:[%s4 + $0x150] sm:$0xff]
  %v138 = vld [vmem:[%s4 + $0x158] sm:$0xff]
  %v139 = vld [vmem:[%s4 + $0x160] sm:$0xff]
  %v140 = vld [vmem:[%s4 + $0x168] sm:$0xff]
  %v141 = vld [vmem:[%s4 + $0x170] sm:$0xff]
  %v142 = vld [vmem:[%s4 + $0x178] sm:$0xff]
  %v143 = vld [vmem:[%s4 + $0x180] sm:$0xff]
  %v144 = vld [vmem:[%s4 + $0x188] sm:$0xff]
  %v145 = vld [vmem:[%s4 + $0x190] sm:$0xff]
  %v146 = vld [vmem:[%s4 + $0x198] sm:$0xff]
  %v147 = vld [vmem:[%s4 + $0x1a0] sm:$0xff]
  %v148 = vld [vmem:[%s4 + $0x1a8] sm:$0xff]
  %v149 = vld [vmem:[%s4 + $0x1b0] sm:$0xff]
  %v150 = vld [vmem:[%s4 + $0x1b8] sm:$0xff]
  %v151 = vld [vmem:[%s4 + $0x1c0] sm:$0xff]
  %v152 = vld [vmem:[%s4 + $0x1c8] sm:$0xff]
  %v153 = vld [vmem:[%s4 + $0x1d0] sm:$0xff]
  %v154 = vld [vmem:[%s4 + $0x1d8] sm:$0xff]
  %v155 = vld [vmem:[%s4 + $0x1e0] sm:$0xff]
  %v156 = vld [vmem:[%s4 + $0x1e8] sm:$0xff]
  %v157 = vld [vmem:[%s4 + $0x1f0] sm:$0xff]
  %v158 = vld [vmem:[%s4 + $0x1f8] sm:$0xff]
  %v159 = vld [vmem:[%s4 + $0x200] sm:$0xff]
  %v160 = vld [vmem:[%s4 + $0x208] sm:$0xff]
  %v161 = vld [vmem:[%s4 + $0x210] sm:$0xff]
  %v162 = vld [vmem:[%s4 + $0x218] sm:$0xff]
  %v163 = vld [vmem:[%s4 + $0x220] sm:$0xff]
  %v164 = vld [vmem:[%s4 + $0x228] sm:$0xff]
  %v165 = vld [vmem:[%s4 + $0x230] sm:$0xff]
  %v166 = vld [vmem:[%s4 + $0x238] sm:$0xff]
  %v167 = vld [vmem:[%s4 + $0x240] sm:$0xff]
  %v168 = vld [vmem:[%s4 + $0x248] sm:$0xff]
  %v169 = vld [vmem:[%s4 + $0x250] sm:$0xff]
  %v170 = vld [vmem:[%s4 + $0x258] sm:$0xff]
  %v171 = vld [vmem:[%s4 + $0x260] sm:$0xff]
  %v172 = vld [vmem:[%s4 + $0x268] sm:$0xff]
  %v173 = vld [vmem:[%s4 + $0x270] sm:$0xff]
  %v174 = vld [vmem:[%s4 + $0x278] sm:$0xff]
  %175 = vmatprep.subr.mxu0 %v171
  %176 = vmatpush1.msra.mxu0 %v170
  %177 = vmatprep.subr.mxu0 %v166
  %178 = vmatpush1.msra.mxu0 %v165
  %179 = vmatprep.subr.mxu0 %v161
  %180 = vmatpush1.msra.mxu0 %v160
  %181 = vmatprep.subr.mxu0 %v156
  %182 = vmatpush1.msra.mxu0 %v155
  %183 = vmatprep.subr.mxu0 %v151
  %184 = vmatpush1.msra.mxu0 %v150
  %185 = vmatprep.subr.mxu0 %v146
  %186 = vmatpush1.msra.mxu0 %v145
  %187 = vmatprep.subr.mxu0 %v141
  %188 = vmatpush1.msra.mxu0 %v140
  %189 = vmatprep.subr.mxu0 %v136
  %190 = vmatpush1.msra.mxu0 %v135
  %191 = vmatprep.subr.mxu0 %v131
  %192 = vmatpush1.msra.mxu0 %v130
  %193 = vmatprep.subr.mxu0 %v126
  %194 = vmatpush1.msra.mxu0 %v125
  %195 = vmatprep.subr.mxu0 %v121
  %196 = vmatpush1.msra.mxu0 %v120
  %197 = vmatprep.subr.mxu0 %v116
  %198 = vmatpush1.msra.mxu0 %v115
  %199 = vmatprep.subr.mxu0 %v111
  %200 = vmatpush1.msra.mxu0 %v110
  %201 = vmatprep.subr.mxu0 %v106
  %202 = vmatpush1.msra.mxu0 %v105
  %203 = vmatprep.subr.mxu0 %v101
  %204 = vmatpush1.msra.mxu0 %v100
  %205 = vmatprep.subr.mxu0 %v96
  %206 = vmatpush1.msra.mxu0 %v95
  %207 = vmatprep.subr.mxu0 0.0
  %208 = vmatpush2.msra.mxu0 0.0
  %209 = vmatprep.subr.mxu0 0.0
  %210 = vmatpush2.msra.mxu0 0.0
  %211 = vmatprep.subr.mxu0 0.0
  %212 = vmatpush2.msra.mxu0 0.0
  %213 = vmatprep.subr.mxu0 0.0
  %214 = vmatpush2.msra.mxu0 0.0
  %215 = vmatprep.subr.mxu0 0.0
  %216 = vmatpush2.msra.mxu0 0.0
  %217 = vmatprep.subr.mxu0 0.0
  %218 = vmatpush2.msra.mxu0 0.0
  %219 = vmatprep.subr.mxu0 0.0
  %220 = vmatpush2.msra.mxu0 0.0
  %221 = vmatprep.subr.mxu0 0.0
  %222 = vmatpush2.msra.mxu0 0.0
  %223 = vmatprep.subr.mxu0 0.0
  %224 = vmatpush2.msra.mxu0 0.0
  %225 = vmatprep.subr.mxu0 0.0
  %226 = vmatpush2.msra.mxu0 0.0
  %227 = vmatprep.subr.mxu0 0.0
  %228 = vmatpush2.msra.mxu0 0.0
  %229 = vmatprep.subr.mxu0 0.0
  %230 = vmatpush2.msra.mxu0 0.0
  %231 = vmatprep.subr.mxu0 0.0
  %232 = vmatpush2.msra.mxu0 0.0
  %233 = vmatprep.subr.mxu0 0.0
  %234 = vmatpush2.msra.mxu0 0.0
  %235 = vmatprep.subr.mxu0 0.0
  %236 = vmatpush2.msra.mxu0 0.0
  %237 = vmatprep.subr.mxu0 0.0
  %238 = vmatpush2.msra.mxu0 0.0
  %239 = vmatprep.mubr.f32.mxu0 0.0
  %240 = vmatmul.mubr.f32.gmra.mxu0 %v91
  %v241 = vpop.f32.mrf.mxu0
  %v242 = vadd.f32 0.0, %v241
  %v243 = vpop.f32.mrf.mxu0
  %v244 = vadd.f32 0.0, %v243
  %245 = vmatprep.mubr.f32.mxu0 0.0
  %246 = vmatmul.mubr.f32.gmra.mxu0 %v92
  %v247 = vpop.f32.mrf.mxu0
  %v248 = vadd.f32 0.0, %v247
  %v249 = vpop.f32.mrf.mxu0
  %v250 = vadd.f32 0.0, %v249
  %251 = vmatprep.mubr.f32.mxu0 0.0
  %252 = vmatmul.mubr.f32.gmra.mxu0 %v93
  %v253 = vpop.f32.mrf.mxu0
  %v254 = vadd.f32 0.0, %v253
  %v255 = vpop.f32.mrf.mxu0
  %v256 = vadd.f32 0.0, %v255
  %257 = vmatprep.mubr.f32.mxu0 0.0
  %258 = vmatmul.mubr.f32.gmra.mxu0 %v94
  %v259 = vpop.f32.mrf.mxu0
  %v260 = vadd.f32 0.0, %v259
  %v261 = vpop.f32.mrf.mxu0
  %v262 = vadd.f32 0.0, %v261
  %263 = vdwg.mxu0
  %264 = vmatprep.subr.mxu0 %v173
  %265 = vmatpush1.msra.mxu0 %v172
  %266 = vmatprep.subr.mxu0 %v168
  %267 = vmatpush1.msra.mxu0 %v167
  %268 = vmatprep.subr.mxu0 %v163
  %269 = vmatpush1.msra.mxu0 %v162
  %270 = vmatprep.subr.mxu0 %v158
  %271 = vmatpush1.msra.mxu0 %v157
  %272 = vmatprep.subr.mxu0 %v153
  %273 = vmatpush1.msra.mxu0 %v152
  %274 = vmatprep.subr.mxu0 %v148
  %275 = vmatpush1.msra.mxu0 %v147
  %276 = vmatprep.subr.mxu0 %v143
  %277 = vmatpush1.msra.mxu0 %v142
  %278 = vmatprep.subr.mxu0 %v138
  %279 = vmatpush1.msra.mxu0 %v137
  %280 = vmatprep.subr.mxu0 %v133
  %281 = vmatpush1.msra.mxu0 %v132
  %282 = vmatprep.subr.mxu0 %v128
  %283 = vmatpush1.msra.mxu0 %v127
  %284 = vmatprep.subr.mxu0 %v123
  %285 = vmatpush1.msra.mxu0 %v122
  %286 = vmatprep.subr.mxu0 %v118
  %287 = vmatpush1.msra.mxu0 %v117
  %288 = vmatprep.subr.mxu0 %v113
  %289 = vmatpush1.msra.mxu0 %v112
  %290 = vmatprep.subr.mxu0 %v108
  %291 = vmatpush1.msra.mxu0 %v107
  %292 = vmatprep.subr.mxu0 %v103
  %293 = vmatpush1.msra.mxu0 %v102
  %294 = vmatprep.subr.mxu0 %v98
  %295 = vmatpush1.msra.mxu0 %v97
  %296 = vmatprep.subr.mxu0 0.0
  %297 = vmatpush2.msra.mxu0 0.0
  %298 = vmatprep.subr.mxu0 0.0
  %299 = vmatpush2.msra.mxu0 0.0
  %300 = vmatprep.subr.mxu0 0.0
  %301 = vmatpush2.msra.mxu0 0.0
  %302 = vmatprep.subr.mxu0 0.0
  %303 = vmatpush2.msra.mxu0 0.0
  %304 = vmatprep.subr.mxu0 0.0
  %305 = vmatpush2.msra.mxu0 0.0
  %306 = vmatprep.subr.mxu0 0.0
  %307 = vmatpush2.msra.mxu0 0.0
  %308 = vmatprep.subr.mxu0 0.0
  %309 = vmatpush2.msra.mxu0 0.0
  %310 = vmatprep.subr.mxu0 0.0
  %311 = vmatpush2.msra.mxu0 0.0
  %312 = vmatprep.subr.mxu0 0.0
  %313 = vmatpush2.msra.mxu0 0.0
  %314 = vmatprep.subr.mxu0 0.0
  %315 = vmatpush2.msra.mxu0 0.0
  %316 = vmatprep.subr.mxu0 0.0
  %317 = vmatpush2.msra.mxu0 0.0
  %318 = vmatprep.subr.mxu0 0.0
  %319 = vmatpush2.msra.mxu0 0.0
  %320 = vmatprep.subr.mxu0 0.0
  %321 = vmatpush2.msra.mxu0 0.0
  %322 = vmatprep.subr.mxu0 0.0
  %323 = vmatpush2.msra.mxu0 0.0
  %324 = vmatprep.subr.mxu0 0.0
  %325 = vmatpush2.msra.mxu0 0.0
  %326 = vmatprep.subr.mxu0 0.0
  %327 = vmatpush2.msra.mxu0 0.0
  %328 = vmatprep.mubr.f32.mxu0 0.0
  %329 = vmatmul.mubr.f32.gmra.mxu0 %v91
  %v330 = vpop.f32.mrf.mxu0
  %v331 = vadd.f32 0.0, %v330
  %v332 = vpop.f32.mrf.mxu0
  %v333 = vadd.f32 0.0, %v332
  %334 = vmatprep.mubr.f32.mxu0 0.0
  %335 = vmatmul.mubr.f32.gmra.mxu0 %v92
  %v336 = vpop.f32.mrf.mxu0
  %v337 = vadd.f32 0.0, %v336
  %v338 = vpop.f32.mrf.mxu0
  %v339 = vadd.f32 0.0, %v338
  %340 = vmatprep.mubr.f32.mxu0 0.0
  %341 = vmatmul.mubr.f32.gmra.mxu0 %v93
  %v342 = vpop.f32.mrf.mxu0
  %v343 = vadd.f32 0.0, %v342
  %v344 = vpop.f32.mrf.mxu0
  %v345 = vadd.f32 0.0, %v344
  %346 = vmatprep.mubr.f32.mxu0 0.0
  %347 = vmatmul.mubr.f32.gmra.mxu0 %v94
  %v348 = vpop.f32.mrf.mxu0
  %v349 = vadd.f32 0.0, %v348
  %v350 = vpop.f32.mrf.mxu0
  %v351 = vadd.f32 0.0, %v350
  %352 = vdwg.mxu0
  %353 = vmatprep.subr.mxu0 0.0
  %354 = vmatpush1.msra.mxu0 %v174
  %355 = vmatprep.subr.mxu0 0.0
  %356 = vmatpush1.msra.mxu0 %v169
  %357 = vmatprep.subr.mxu0 0.0
  %358 = vmatpush1.msra.mxu0 %v164
  %359 = vmatprep.subr.mxu0 0.0
  %360 = vmatpush1.msra.mxu0 %v159
  %361 = vmatprep.subr.mxu0 0.0
  %362 = vmatpush1.msra.mxu0 %v154
  %363 = vmatprep.subr.mxu0 0.0
  %364 = vmatpush1.msra.mxu0 %v149
  %365 = vmatprep.subr.mxu0 0.0
  %366 = vmatpush1.msra.mxu0 %v144
  %367 = vmatprep.subr.mxu0 0.0
  %368 = vmatpush1.msra.mxu0 %v139
  %369 = vmatprep.subr.mxu0 0.0
  %370 = vmatpush1.msra.mxu0 %v134
  %371 = vmatprep.subr.mxu0 0.0
  %372 = vmatpush1.msra.mxu0 %v129
  %373 = vmatprep.subr.mxu0 0.0
  %374 = vmatpush1.msra.mxu0 %v124
  %375 = vmatprep.subr.mxu0 0.0
  %376 = vmatpush1.msra.mxu0 %v119
  %377 = vmatprep.subr.mxu0 0.0
  %378 = vmatpush1.msra.mxu0 %v114
  %379 = vmatprep.subr.mxu0 0.0
  %380 = vmatpush1.msra.mxu0 %v109
  %381 = vmatprep.subr.mxu0 0.0
  %382 = vmatpush1.msra.mxu0 %v104
  %383 = vmatprep.subr.mxu0 0.0
  %384 = vmatpush1.msra.mxu0 %v99
  %385 = vmatprep.subr.mxu0 0.0
  %386 = vmatpush2.msra.mxu0 0.0
  %387 = vmatprep.subr.mxu0 0.0
  %388 = vmatpush2.msra.mxu0 0.0
  %389 = vmatprep.subr.mxu0 0.0
  %390 = vmatpush2.msra.mxu0 0.0
  %391 = vmatprep.subr.mxu0 0.0
  %392 = vmatpush2.msra.mxu0 0.0
  %393 = vmatprep.subr.mxu0 0.0
  %394 = vmatpush2.msra.mxu0 0.0
  %395 = vmatprep.subr.mxu0 0.0
  %396 = vmatpush2.msra.mxu0 0.0
  %397 = vmatprep.subr.mxu0 0.0
  %398 = vmatpush2.msra.mxu0 0.0
  %399 = vmatprep.subr.mxu0 0.0
  %400 = vmatpush2.msra.mxu0 0.0
  %401 = vmatprep.subr.mxu0 0.0
  %402 = vmatpush2.msra.mxu0 0.0
  %403 = vmatprep.subr.mxu0 0.0
  %404 = vmatpush2.msra.mxu0 0.0
  %405 = vmatprep.subr.mxu0 0.0
  %406 = vmatpush2.msra.mxu0 0.0
  %407 = vmatprep.subr.mxu0 0.0
  %408 = vmatpush2.msra.mxu0 0.0
  %409 = vmatprep.subr.mxu0 0.0
  %410 = vmatpush2.msra.mxu0 0.0
  %411 = vmatprep.subr.mxu0 0.0
  %412 = vmatpush2.msra.mxu0 0.0
  %413 = vmatprep.subr.mxu0 0.0
  %414 = vmatpush2.msra.mxu0 0.0
  %415 = vmatprep.subr.mxu0 0.0
  %416 = vmatpush2.msra.mxu0 0.0
  %417 = vmatprep.mubr.f32.mxu0 0.0
  %418 = vmatmul.mubr.f32.gmra.mxu0 %v91
  %v419 = vpop.f32.mrf.mxu0
  %v420 = vadd.f32 0.0, %v419
  %v421 = vpop.f32.mrf.mxu0
  %422 = vmatprep.mubr.f32.mxu0 0.0
  %423 = vmatmul.mubr.f32.gmra.mxu0 %v92
  %v424 = vpop.f32.mrf.mxu0
  %v425 = vadd.f32 0.0, %v424
  %v426 = vpop.f32.mrf.mxu0
  %427 = vmatprep.mubr.f32.mxu0 0.0
  %428 = vmatmul.mubr.f32.gmra.mxu0 %v93
  %v429 = vpop.f32.mrf.mxu0
  %v430 = vadd.f32 0.0, %v429
  %v431 = vpop.f32.mrf.mxu0
  %432 = vmatprep.mubr.f32.mxu0 0.0
  %433 = vmatmul.mubr.f32.gmra.mxu0 %v94
  %v434 = vpop.f32.mrf.mxu0
  %v435 = vadd.f32 0.0, %v434
  %v436 = vpop.f32.mrf.mxu0
  %437 = vdwg.mxu0
  %438 = vst [vmem:[%s5] sm:$0xff] %v242
  %439 = vst [vmem:[%s5 + $0x8] sm:$0xff] %v244
  %440 = vst [vmem:[%s5 + $0x10] sm:$0xff] %v331
  %441 = vst [vmem:[%s5 + $0x18] sm:$0xff] %v333
  %vm442 = vcmask 523264
  %443 = vst.msk [vmem:[%s5 + $0x20] sm:$0xff] %vm442, %v420
  %444 = vst [vmem:[%s5 + $0x28] sm:$0xff] %v248
  %445 = vst [vmem:[%s5 + $0x30] sm:$0xff] %v250
  %446 = vst [vmem:[%s5 + $0x38] sm:$0xff] %v337
  %447 = vst [vmem:[%s5 + $0x40] sm:$0xff] %v339
  %448 = vst.msk [vmem:[%s5 + $0x48] sm:$0xff] %vm442, %v425
  %449 = vst [vmem:[%s5 + $0x50] sm:$0xff] %v254
  %450 = vst [vmem:[%s5 + $0x58] sm:$0xff] %v256
  %451 = vst [vmem:[%s5 + $0x60] sm:$0xff] %v343
  %452 = vst [vmem:[%s5 + $0x68] sm:$0xff] %v345
  %453 = vst.msk [vmem:[%s5 + $0x70] sm:$0xff] %vm442, %v430
  %454 = vst [vmem:[%s5 + $0x78] sm:$0xff] %v260
  %455 = vst [vmem:[%s5 + $0x80] sm:$0xff] %v262
  %456 = vst [vmem:[%s5 + $0x88] sm:$0xff] %v349
  %457 = vst [vmem:[%s5 + $0x90] sm:$0xff] %v351
  %458 = vst.msk [vmem:[%s5 + $0x98] sm:$0xff] %vm442, %v435
  // Predicated region
  $region22: #{generator_forward.6} parent=0 // pred_check
    _
  $region23: #{generator_forward.6} parent=0 // pred_check_branch
    %460 = sbr.rel (0) target = $region25
  $region24: #{generator_forward.6} parent=0 // pred_region
    _
  $region25: #{generator_forward.6} parent=0 // pred_fallthru
    _
  // Predicated region
  $region26: #{generator_forward.6} parent=0 // pred_check
    _
  $region27: #{generator_forward.6} parent=0 // pred_check_branch
    %462 = sbr.rel (0) target = $region29
  $region28: #{generator_forward.6} parent=0 // pred_region
    _
  $region29: #{generator_forward.6} parent=0 // pred_fallthru
    _

// kernel: generator_forward.5
$region0: #{generator_forward.5}
  #allocation0 [shape = 'u32[]', space=smem, size = 0x4, offset = 0x4, fixed_abs, tag = 'smem constant byte address 0x4 - core index']
  #allocation1 [shape = 'u32[144,128]{1,0:T(1,128)}', space=vmem, size = 0x12000, scoped, tag = 'internal scratch']
  %s0 = inlined_call_operand.vmem [shape: f32[2,32], index: 0, kind: input, shape index: {}]
  %s1 = inlined_call_operand.vmem [shape: f32[32,128], index: 1, kind: input, shape index: {}]
  %s2 = inlined_call_operand.vmem [shape: f32[1,128], index: 2, kind: input, shape index: {}]
  %s3 = inlined_call_operand.vmem [shape: f32[128,2048], index: 3, kind: input, shape index: {}]
  %s4 = inlined_call_operand.vmem [shape: f32[2,2048], index: 4, kind: output, shape index: {}]
  %s5 = sld [smem:[#allocation0]]
  $region26: #{generator_forward.5} parent=0
    _
  %s7 = ssub.s32 1, %s5
  %s8 = scalar_select 0, %s7, %s5
  // Predicated region
  $region2: #{generator_forward.5} parent=0 // pred_check
    _
  $region3: #{generator_forward.5} parent=0 // pred_check_branch
    %10 = sbr.rel (0) target = $region5
  $region4: #{generator_forward.5} parent=0 // pred_region
    _
  $region5: #{generator_forward.5} parent=0 // pred_fallthru
    _
  // Predicated region
  $region6: #{generator_forward.5} parent=0 // pred_check
    _
  $region7: #{generator_forward.5} parent=0 // pred_check_branch
    %12 = sbr.rel (0) target = $region9
  $region8: #{generator_forward.5} parent=0 // pred_region
    _
  $region9: #{generator_forward.5} parent=0 // pred_fallthru
    _
  // Predicated region
  $region10: #{generator_forward.5} parent=0 // pred_check
    _
  $region11: #{generator_forward.5} parent=0 // pred_check_branch
    %14 = sbr.rel (0) target = $region13
  $region12: #{generator_forward.5} parent=0 // pred_region
    _
  $region13: #{generator_forward.5} parent=0 // pred_fallthru
    _
  // Predicated region
  $region14: #{generator_forward.5} parent=0 // pred_check
    _
  $region15: #{generator_forward.5} parent=0 // pred_check_branch
    %16 = sbr.rel (0) target = $region17
  $region16: #{generator_forward.5} parent=0 // pred_region
    _
  $region17: #{generator_forward.5} parent=0 // pred_fallthru
    _
  %v17 = vld [vmem:[%s0] sm:$0x3]
  %v18 = vld [vmem:[%s1] sm:$0xff]
  %v19 = vld [vmem:[%s1 + $0x8] sm:$0xff]
  %v20 = vld [vmem:[%s1 + $0x10] sm:$0xff]
  %v21 = vld [vmem:[%s1 + $0x18] sm:$0xff]
  %v22 = vld [vmem:[%s2] sm:$0x1]
  %v24 = vlaneseq
  %v25 = vshrl.u32 %v24, 7
  %v26 = vsub.s32 0, %v25
  %v27 = vrot.slane %v22, %v26
  %vm29 = vcmask 261120
  %v31 = vsel %vm29, %v17, 0
  %33 = vmatprep.subr.mxu0 0.0
  %34 = vmatpush1.msra.mxu0 0.0
  %35 = vmatprep.subr.mxu0 0.0
  %36 = vmatpush1.msra.mxu0 0.0
  %37 = vmatprep.subr.mxu0 0.0
  %38 = vmatpush1.msra.mxu0 0.0
  %39 = vmatprep.subr.mxu0 0.0
  %40 = vmatpush1.msra.mxu0 0.0
  %41 = vmatprep.subr.mxu0 0.0
  %42 = vmatpush1.msra.mxu0 0.0
  %43 = vmatprep.subr.mxu0 0.0
  %44 = vmatpush1.msra.mxu0 0.0
  %45 = vmatprep.subr.mxu0 0.0
  %46 = vmatpush1.msra.mxu0 0.0
  %47 = vmatprep.subr.mxu0 0.0
  %48 = vmatpush1.msra.mxu0 0.0
  %49 = vmatprep.subr.mxu0 0.0
  %50 = vmatpush1.msra.mxu0 0.0
  %51 = vmatprep.subr.mxu0 0.0
  %52 = vmatpush1.msra.mxu0 0.0
  %53 = vmatprep.subr.mxu0 0.0
  %54 = vmatpush1.msra.mxu0 0.0
  %55 = vmatprep.subr.mxu0 0.0
  %56 = vmatpush1.msra.mxu0 0.0
  %57 = vmatprep.subr.mxu0 0.0
  %58 = vmatpush1.msra.mxu0 %v21
  %59 = vmatprep.subr.mxu0 0.0
  %60 = vmatpush1.msra.mxu0 %v20
  %61 = vmatprep.subr.mxu0 0.0
  %62 = vmatpush1.msra.mxu0 %v19
  %63 = vmatprep.subr.mxu0 0.0
  %64 = vmatpush1.msra.mxu0 %v18
  %65 = vmatprep.subr.mxu0 0.0
  %66 = vmatpush2.msra.mxu0 0.0
  %67 = vmatprep.subr.mxu0 0.0
  %68 = vmatpush2.msra.mxu0 0.0
  %69 = vmatprep.subr.mxu0 0.0
  %70 = vmatpush2.msra.mxu0 0.0
  %71 = vmatprep.subr.mxu0 0.0
  %72 = vmatpush2.msra.mxu0 0.0
  %73 = vmatprep.subr.mxu0 0.0
  %74 = vmatpush2.msra.mxu0 0.0
  %75 = vmatprep.subr.mxu0 0.0
  %76 = vmatpush2.msra.mxu0 0.0
  %77 = vmatprep.subr.mxu0 0.0
  %78 = vmatpush2.msra.mxu0 0.0
  %79 = vmatprep.subr.mxu0 0.0
  %80 = vmatpush2.msra.mxu0 0.0
  %81 = vmatprep.subr.mxu0 0.0
  %82 = vmatpush2.msra.mxu0 0.0
  %83 = vmatprep.subr.mxu0 0.0
  %84 = vmatpush2.msra.mxu0 0.0
  %85 = vmatprep.subr.mxu0 0.0
  %86 = vmatpush2.msra.mxu0 0.0
  %87 = vmatprep.subr.mxu0 0.0
  %88 = vmatpush2.msra.mxu0 0.0
  %89 = vmatprep.subr.mxu0 0.0
  %90 = vmatpush2.msra.mxu0 0.0
  %91 = vmatprep.subr.mxu0 0.0
  %92 = vmatpush2.msra.mxu0 0.0
  %93 = vmatprep.subr.mxu0 0.0
  %94 = vmatpush2.msra.mxu0 0.0
  %95 = vmatprep.subr.mxu0 0.0
  %96 = vmatpush2.msra.mxu0 0.0
  %97 = vmatprep.mubr.f32.mxu0 0.0
  %98 = vmatmul.mubr.f32.gmra.mxu0 %v31
  %v99 = vpop.f32.mrf.mxu0
  %v100 = vadd.f32 %v27, %v99
  %v101 = vpop.f32.mrf.mxu0
  %102 = vdwg.mxu0
  %v103 = vld [vmem:[%s3] sm:$0xff]
  %v104 = vld [vmem:[%s3 + $0x8] sm:$0xff]
  %v105 = vld [vmem:[%s3 + $0x10] sm:$0xff]
  %v106 = vld [vmem:[%s3 + $0x18] sm:$0xff]
  %v107 = vld [vmem:[%s3 + $0x20] sm:$0xff]
  %v108 = vld [vmem:[%s3 + $0x28] sm:$0xff]
  %v109 = vld [vmem:[%s3 + $0x30] sm:$0xff]
  %v110 = vld [vmem:[%s3 + $0x38] sm:$0xff]
  %v111 = vld [vmem:[%s3 + $0x40] sm:$0xff]
  %v112 = vld [vmem:[%s3 + $0x48] sm:$0xff]
  %v113 = vld [vmem:[%s3 + $0x50] sm:$0xff]
  %v114 = vld [vmem:[%s3 + $0x58] sm:$0xff]
  %v115 = vld [vmem:[%s3 + $0x60] sm:$0xff]
  %v116 = vld [vmem:[%s3 + $0x68] sm:$0xff]
  %v117 = vld [vmem:[%s3 + $0x70] sm:$0xff]
  %v118 = vld [vmem:[%s3 + $0x78] sm:$0xff]
  %v119 = vld [vmem:[%s3 + $0x80] sm:$0xff]
  %v120 = vld [vmem:[%s3 + $0x88] sm:$0xff]
  %v121 = vld [vmem:[%s3 + $0x90] sm:$0xff]
  %v122 = vld [vmem:[%s3 + $0x98] sm:$0xff]
  %v123 = vld [vmem:[%s3 + $0xa0] sm:$0xff]
  %v124 = vld [vmem:[%s3 + $0xa8] sm:$0xff]
  %v125 = vld [vmem:[%s3 + $0xb0] sm:$0xff]
  %v126 = vld [vmem:[%s3 + $0xb8] sm:$0xff]
  %v127 = vld [vmem:[%s3 + $0xc0] sm:$0xff]
  %v128 = vld [vmem:[%s3 + $0xc8] sm:$0xff]
  %v129 = vld [vmem:[%s3 + $0xd0] sm:$0xff]
  %v130 = vld [vmem:[%s3 + $0xd8] sm:$0xff]
  %v131 = vld [vmem:[%s3 + $0xe0] sm:$0xff]
  %v132 = vld [vmem:[%s3 + $0xe8] sm:$0xff]
  %v133 = vld [vmem:[%s3 + $0xf0] sm:$0xff]
  %v134 = vld [vmem:[%s3 + $0xf8] sm:$0xff]
  %v135 = vld [vmem:[%s3 + $0x100] sm:$0xff]
  %v136 = vld [vmem:[%s3 + $0x108] sm:$0xff]
  %v137 = vld [vmem:[%s3 + $0x110] sm:$0xff]
  %v138 = vld [vmem:[%s3 + $0x118] sm:$0xff]
  %v139 = vld [vmem:[%s3 + $0x120] sm:$0xff]
  %v140 = vld [vmem:[%s3 + $0x128] sm:$0xff]
  %v141 = vld [vmem:[%s3 + $0x130] sm:$0xff]
  %v142 = vld [vmem:[%s3 + $0x138] sm:$0xff]
  %v143 = vld [vmem:[%s3 + $0x140] sm:$0xff]
  %v144 = vld [vmem:[%s3 + $0x148] sm:$0xff]
  %v145 = vld [vmem:[%s3 + $0x150] sm:$0xff]
  %v146 = vld [vmem:[%s3 + $0x158] sm:$0xff]
  %v147 = vld [vmem:[%s3 + $0x160] sm:$0xff]
  %v148 = vld [vmem:[%s3 + $0x168] sm:$0xff]
  %v149 = vld [vmem:[%s3 + $0x170] sm:$0xff]
  %v150 = vld [vmem:[%s3 + $0x178] sm:$0xff]
  %v151 = vld [vmem:[%s3 + $0x180] sm:$0xff]
  %v152 = vld [vmem:[%s3 + $0x188] sm:$0xff]
  %v153 = vld [vmem:[%s3 + $0x190] sm:$0xff]
  %v154 = vld [vmem:[%s3 + $0x198] sm:$0xff]
  %v155 = vld [vmem:[%s3 + $0x1a0] sm:$0xff]
  %v156 = vld [vmem:[%s3 + $0x1a8] sm:$0xff]
  %v157 = vld [vmem:[%s3 + $0x1b0] sm:$0xff]
  %v158 = vld [vmem:[%s3 + $0x1b8] sm:$0xff]
  %v159 = vld [vmem:[%s3 + $0x1c0] sm:$0xff]
  %v160 = vld [vmem:[%s3 + $0x1c8] sm:$0xff]
  %v161 = vld [vmem:[%s3 + $0x1d0] sm:$0xff]
  %v162 = vld [vmem:[%s3 + $0x1d8] sm:$0xff]
  %v163 = vld [vmem:[%s3 + $0x1e0] sm:$0xff]
  %v164 = vld [vmem:[%s3 + $0x1e8] sm:$0xff]
  %v165 = vld [vmem:[%s3 + $0x1f0] sm:$0xff]
  %v166 = vld [vmem:[%s3 + $0x1f8] sm:$0xff]
  %v167 = vld [vmem:[%s3 + $0x200] sm:$0xff]
  %v168 = vld [vmem:[%s3 + $0x208] sm:$0xff]
  %v169 = vld [vmem:[%s3 + $0x210] sm:$0xff]
  %v170 = vld [vmem:[%s3 + $0x218] sm:$0xff]
  %v171 = vld [vmem:[%s3 + $0x220] sm:$0xff]
  %v172 = vld [vmem:[%s3 + $0x228] sm:$0xff]
  %v173 = vld [vmem:[%s3 + $0x230] sm:$0xff]
  %v174 = vld [vmem:[%s3 + $0x238] sm:$0xff]
  %v175 = vld [vmem:[%s3 + $0x240] sm:$0xff]
  %v176 = vld [vmem:[%s3 + $0x248] sm:$0xff]
  %v177 = vld [vmem:[%s3 + $0x250] sm:$0xff]
  %v178 = vld [vmem:[%s3 + $0x258] sm:$0xff]
  %v179 = vld [vmem:[%s3 + $0x260] sm:$0xff]
  %v180 = vld [vmem:[%s3 + $0x268] sm:$0xff]
  %v181 = vld [vmem:[%s3 + $0x270] sm:$0xff]
  %v182 = vld [vmem:[%s3 + $0x278] sm:$0xff]
  %v183 = vld [vmem:[%s3 + $0x280] sm:$0xff]
  %v184 = vld [vmem:[%s3 + $0x288] sm:$0xff]
  %v185 = vld [vmem:[%s3 + $0x290] sm:$0xff]
  %v186 = vld [vmem:[%s3 + $0x298] sm:$0xff]
  %v187 = vld [vmem:[%s3 + $0x2a0] sm:$0xff]
  %v188 = vld [vmem:[%s3 + $0x2a8] sm:$0xff]
  %v189 = vld [vmem:[%s3 + $0x2b0] sm:$0xff]
  %v190 = vld [vmem:[%s3 + $0x2b8] sm:$0xff]
  %v191 = vld [vmem:[%s3 + $0x2c0] sm:$0xff]
  %v192 = vld [vmem:[%s3 + $0x2c8] sm:$0xff]
  %v193 = vld [vmem:[%s3 + $0x2d0] sm:$0xff]
  %v194 = vld [vmem:[%s3 + $0x2d8] sm:$0xff]
  %v195 = vld [vmem:[%s3 + $0x2e0] sm:$0xff]
  %v196 = vld [vmem:[%s3 + $0x2e8] sm:$0xff]
  %v197 = vld [vmem:[%s3 + $0x2f0] sm:$0xff]
  %v198 = vld [vmem:[%s3 + $0x2f8] sm:$0xff]
  %v199 = vld [vmem:[%s3 + $0x300] sm:$0xff]
  %v200 = vld [vmem:[%s3 + $0x308] sm:$0xff]
  %v201 = vld [vmem:[%s3 + $0x310] sm:$0xff]
  %v202 = vld [vmem:[%s3 + $0x318] sm:$0xff]
  %v203 = vld [vmem:[%s3 + $0x320] sm:$0xff]
  %v204 = vld [vmem:[%s3 + $0x328] sm:$0xff]
  %v205 = vld [vmem:[%s3 + $0x330] sm:$0xff]
  %v206 = vld [vmem:[%s3 + $0x338] sm:$0xff]
  %v207 = vld [vmem:[%s3 + $0x340] sm:$0xff]
  %v208 = vld [vmem:[%s3 + $0x348] sm:$0xff]
  %v209 = vld [vmem:[%s3 + $0x350] sm:$0xff]
  %v210 = vld [vmem:[%s3 + $0x358] sm:$0xff]
  %v211 = vld [vmem:[%s3 + $0x360] sm:$0xff]
  %v212 = vld [vmem:[%s3 + $0x368] sm:$0xff]
  %v213 = vld [vmem:[%s3 + $0x370] sm:$0xff]
  %v214 = vld [vmem:[%s3 + $0x378] sm:$0xff]
  %v215 = vld [vmem:[%s3 + $0x380] sm:$0xff]
  %v216 = vld [vmem:[%s3 + $0x388] sm:$0xff]
  %v217 = vld [vmem:[%s3 + $0x390] sm:$0xff]
  %v218 = vld [vmem:[%s3 + $0x398] sm:$0xff]
  %v219 = vld [vmem:[%s3 + $0x3a0] sm:$0xff]
  %v220 = vld [vmem:[%s3 + $0x3a8] sm:$0xff]
  %v221 = vld [vmem:[%s3 + $0x3b0] sm:$0xff]
  %v222 = vld [vmem:[%s3 + $0x3b8] sm:$0xff]
  %v223 = vld [vmem:[%s3 + $0x3c0] sm:$0xff]
  %v224 = vld [vmem:[%s3 + $0x3c8] sm:$0xff]
  %v225 = vld [vmem:[%s3 + $0x3d0] sm:$0xff]
  %v226 = vld [vmem:[%s3 + $0x3d8] sm:$0xff]
  %v227 = vld [vmem:[%s3 + $0x3e0] sm:$0xff]
  %v228 = vld [vmem:[%s3 + $0x3e8] sm:$0xff]
  %v229 = vld [vmem:[%s3 + $0x3f0] sm:$0xff]
  %v230 = vld [vmem:[%s3 + $0x3f8] sm:$0xff]
  %v231 = vld [vmem:[%s3 + $0x400] sm:$0xff]
  %v232 = vld [vmem:[%s3 + $0x408] sm:$0xff]
  %v233 = vld [vmem:[%s3 + $0x410] sm:$0xff]
  %v234 = vld [vmem:[%s3 + $0x418] sm:$0xff]
  %v235 = vld [vmem:[%s3 + $0x420] sm:$0xff]
  %v236 = vld [vmem:[%s3 + $0x428] sm:$0xff]
  %v237 = vld [vmem:[%s3 + $0x430] sm:$0xff]
  %v238 = vld [vmem:[%s3 + $0x438] sm:$0xff]
  %v239 = vld [vmem:[%s3 + $0x440] sm:$0xff]
  %v240 = vld [vmem:[%s3 + $0x448] sm:$0xff]
  %v241 = vld [vmem:[%s3 + $0x450] sm:$0xff]
  %v242 = vld [vmem:[%s3 + $0x458] sm:$0xff]
  %v243 = vld [vmem:[%s3 + $0x460] sm:$0xff]
  %v244 = vld [vmem:[%s3 + $0x468] sm:$0xff]
  %v245 = vld [vmem:[%s3 + $0x470] sm:$0xff]
  %v246 = vld [vmem:[%s3 + $0x478] sm:$0xff]
  %v247 = vld [vmem:[%s3 + $0x480] sm:$0xff]
  %v248 = vld [vmem:[%s3 + $0x488] sm:$0xff]
  %v249 = vld [vmem:[%s3 + $0x490] sm:$0xff]
  %v250 = vld [vmem:[%s3 + $0x498] sm:$0xff]
  %v251 = vld [vmem:[%s3 + $0x4a0] sm:$0xff]
  %v252 = vld [vmem:[%s3 + $0x4a8] sm:$0xff]
  %v253 = vld [vmem:[%s3 + $0x4b0] sm:$0xff]
  %v254 = vld [vmem:[%s3 + $0x4b8] sm:$0xff]
  %v255 = vld [vmem:[%s3 + $0x4c0] sm:$0xff]
  %v256 = vld [vmem:[%s3 + $0x4c8] sm:$0xff]
  %v257 = vld [vmem:[%s3 + $0x4d0] sm:$0xff]
  %v258 = vld [vmem:[%s3 + $0x4d8] sm:$0xff]
  %v259 = vld [vmem:[%s3 + $0x4e0] sm:$0xff]
  %v260 = vld [vmem:[%s3 + $0x4e8] sm:$0xff]
  %v261 = vld [vmem:[%s3 + $0x4f0] sm:$0xff]
  %v262 = vld [vmem:[%s3 + $0x4f8] sm:$0xff]
  %v263 = vld [vmem:[%s3 + $0x500] sm:$0xff]
  %v264 = vld [vmem:[%s3 + $0x508] sm:$0xff]
  %v265 = vld [vmem:[%s3 + $0x510] sm:$0xff]
  %v266 = vld [vmem:[%s3 + $0x518] sm:$0xff]
  %v267 = vld [vmem:[%s3 + $0x520] sm:$0xff]
  %v268 = vld [vmem:[%s3 + $0x528] sm:$0xff]
  %v269 = vld [vmem:[%s3 + $0x530] sm:$0xff]
  %v270 = vld [vmem:[%s3 + $0x538] sm:$0xff]
  %v271 = vld [vmem:[%s3 + $0x540] sm:$0xff]
  %v272 = vld [vmem:[%s3 + $0x548] sm:$0xff]
  %v273 = vld [vmem:[%s3 + $0x550] sm:$0xff]
  %v274 = vld [vmem:[%s3 + $0x558] sm:$0xff]
  %v275 = vld [vmem:[%s3 + $0x560] sm:$0xff]
  %v276 = vld [vmem:[%s3 + $0x568] sm:$0xff]
  %v277 = vld [vmem:[%s3 + $0x570] sm:$0xff]
  %v278 = vld [vmem:[%s3 + $0x578] sm:$0xff]
  %v279 = vld [vmem:[%s3 + $0x580] sm:$0xff]
  %v280 = vld [vmem:[%s3 + $0x588] sm:$0xff]
  %v281 = vld [vmem:[%s3 + $0x590] sm:$0xff]
  %v282 = vld [vmem:[%s3 + $0x598] sm:$0xff]
  %v283 = vld [vmem:[%s3 + $0x5a0] sm:$0xff]
  %v284 = vld [vmem:[%s3 + $0x5a8] sm:$0xff]
  %v285 = vld [vmem:[%s3 + $0x5b0] sm:$0xff]
  %v286 = vld [vmem:[%s3 + $0x5b8] sm:$0xff]
  %v287 = vld [vmem:[%s3 + $0x5c0] sm:$0xff]
  %v288 = vld [vmem:[%s3 + $0x5c8] sm:$0xff]
  %v289 = vld [vmem:[%s3 + $0x5d0] sm:$0xff]
  %v290 = vld [vmem:[%s3 + $0x5d8] sm:$0xff]
  %v291 = vld [vmem:[%s3 + $0x5e0] sm:$0xff]
  %v292 = vld [vmem:[%s3 + $0x5e8] sm:$0xff]
  %v293 = vld [vmem:[%s3 + $0x5f0] sm:$0xff]
  %v294 = vld [vmem:[%s3 + $0x5f8] sm:$0xff]
  %v295 = vld [vmem:[%s3 + $0x600] sm:$0xff]
  %v296 = vld [vmem:[%s3 + $0x608] sm:$0xff]
  %v297 = vld [vmem:[%s3 + $0x610] sm:$0xff]
  %v298 = vld [vmem:[%s3 + $0x618] sm:$0xff]
  %v299 = vld [vmem:[%s3 + $0x620] sm:$0xff]
  %v300 = vld [vmem:[%s3 + $0x628] sm:$0xff]
  %v301 = vld [vmem:[%s3 + $0x630] sm:$0xff]
  %v302 = vld [vmem:[%s3 + $0x638] sm:$0xff]
  %v303 = vld [vmem:[%s3 + $0x640] sm:$0xff]
  %v304 = vld [vmem:[%s3 + $0x648] sm:$0xff]
  %v305 = vld [vmem:[%s3 + $0x650] sm:$0xff]
  %v306 = vld [vmem:[%s3 + $0x658] sm:$0xff]
  %v307 = vld [vmem:[%s3 + $0x660] sm:$0xff]
  %v308 = vld [vmem:[%s3 + $0x668] sm:$0xff]
  %v309 = vld [vmem:[%s3 + $0x670] sm:$0xff]
  %v310 = vld [vmem:[%s3 + $0x678] sm:$0xff]
  %v311 = vld [vmem:[%s3 + $0x680] sm:$0xff]
  %v312 = vld [vmem:[%s3 + $0x688] sm:$0xff]
  %v313 = vld [vmem:[%s3 + $0x690] sm:$0xff]
  %v314 = vld [vmem:[%s3 + $0x698] sm:$0xff]
  %v315 = vld [vmem:[%s3 + $0x6a0] sm:$0xff]
  %v316 = vld [vmem:[%s3 + $0x6a8] sm:$0xff]
  %v317 = vld [vmem:[%s3 + $0x6b0] sm:$0xff]
  %v318 = vld [vmem:[%s3 + $0x6b8] sm:$0xff]
  %v319 = vld [vmem:[%s3 + $0x6c0] sm:$0xff]
  %v320 = vld [vmem:[%s3 + $0x6c8] sm:$0xff]
  %v321 = vld [vmem:[%s3 + $0x6d0] sm:$0xff]
  %v322 = vld [vmem:[%s3 + $0x6d8] sm:$0xff]
  %v323 = vld [vmem:[%s3 + $0x6e0] sm:$0xff]
  %v324 = vld [vmem:[%s3 + $0x6e8] sm:$0xff]
  %v325 = vld [vmem:[%s3 + $0x6f0] sm:$0xff]
  %v326 = vld [vmem:[%s3 + $0x6f8] sm:$0xff]
  %v327 = vld [vmem:[%s3 + $0x700] sm:$0xff]
  %v328 = vld [vmem:[%s3 + $0x708] sm:$0xff]
  %v329 = vld [vmem:[%s3 + $0x710] sm:$0xff]
  %v330 = vld [vmem:[%s3 + $0x718] sm:$0xff]
  %v331 = vld [vmem:[%s3 + $0x720] sm:$0xff]
  %v332 = vld [vmem:[%s3 + $0x728] sm:$0xff]
  %v333 = vld [vmem:[%s3 + $0x730] sm:$0xff]
  %v334 = vld [vmem:[%s3 + $0x738] sm:$0xff]
  %v335 = vld [vmem:[%s3 + $0x740] sm:$0xff]
  %v336 = vld [vmem:[%s3 + $0x748] sm:$0xff]
  %v337 = vld [vmem:[%s3 + $0x750] sm:$0xff]
  %v338 = vld [vmem:[%s3 + $0x758] sm:$0xff]
  %v339 = vld [vmem:[%s3 + $0x760] sm:$0xff]
  %v340 = vld [vmem:[%s3 + $0x768] sm:$0xff]
  %v341 = vld [vmem:[%s3 + $0x770] sm:$0xff]
  %v342 = vld [vmem:[%s3 + $0x778] sm:$0xff]
  %v343 = vld [vmem:[%s3 + $0x780] sm:$0xff]
  %v344 = vld [vmem:[%s3 + $0x788] sm:$0xff]
  %v345 = vld [vmem:[%s3 + $0x790] sm:$0xff]
  %v346 = vld [vmem:[%s3 + $0x798] sm:$0xff]
  %v347 = vld [vmem:[%s3 + $0x7a0] sm:$0xff]
  %v348 = vld [vmem:[%s3 + $0x7a8] sm:$0xff]
  %v349 = vld [vmem:[%s3 + $0x7b0] sm:$0xff]
  %v350 = vld [vmem:[%s3 + $0x7b8] sm:$0xff]
  %v351 = vld [vmem:[%s3 + $0x7c0] sm:$0xff]
  %v352 = vld [vmem:[%s3 + $0x7c8] sm:$0xff]
  %v353 = vld [vmem:[%s3 + $0x7d0] sm:$0xff]
  %v354 = vld [vmem:[%s3 + $0x7d8] sm:$0xff]
  %v355 = vld [vmem:[%s3 + $0x7e0] sm:$0xff]
  %v356 = vld [vmem:[%s3 + $0x7e8] sm:$0xff]
  %v357 = vld [vmem:[%s3 + $0x7f0] sm:$0xff]
  %v358 = vld [vmem:[%s3 + $0x7f8] sm:$0xff]
  %359 = vmatprep.subr.mxu0 %v344
  %360 = vmatpush1.msra.mxu0 %v343
  %361 = vmatprep.subr.mxu0 %v328
  %362 = vmatpush1.msra.mxu0 %v327
  %363 = vmatprep.subr.mxu0 %v312
  %364 = vmatpush1.msra.mxu0 %v311
  %365 = vmatprep.subr.mxu0 %v296
  %366 = vmatpush1.msra.mxu0 %v295
  %367 = vmatprep.subr.mxu0 %v280
  %368 = vmatpush1.msra.mxu0 %v279
  %369 = vmatprep.subr.mxu0 %v264
  %370 = vmatpush1.msra.mxu0 %v263
  %371 = vmatprep.subr.mxu0 %v248
  %372 = vmatpush1.msra.mxu0 %v247
  %373 = vmatprep.subr.mxu0 %v232
  %374 = vmatpush1.msra.mxu0 %v231
  %375 = vmatprep.subr.mxu0 %v216
  %376 = vmatpush1.msra.mxu0 %v215
  %377 = vmatprep.subr.mxu0 %v200
  %378 = vmatpush1.msra.mxu0 %v199
  %379 = vmatprep.subr.mxu0 %v184
  %380 = vmatpush1.msra.mxu0 %v183
  %381 = vmatprep.subr.mxu0 %v168
  %382 = vmatpush1.msra.mxu0 %v167
  %383 = vmatprep.subr.mxu0 %v152
  %384 = vmatpush1.msra.mxu0 %v151
  %385 = vmatprep.subr.mxu0 %v136
  %386 = vmatpush1.msra.mxu0 %v135
  %387 = vmatprep.subr.mxu0 %v120
  %388 = vmatpush1.msra.mxu0 %v119
  %389 = vmatprep.subr.mxu0 %v104
  %390 = vmatpush1.msra.mxu0 %v103
  %391 = vmatprep.subr.mxu0 0.0
  %392 = vmatpush2.msra.mxu0 0.0
  %393 = vmatprep.subr.mxu0 0.0
  %394 = vmatpush2.msra.mxu0 0.0
  %395 = vmatprep.subr.mxu0 0.0
  %396 = vmatpush2.msra.mxu0 0.0
  %397 = vmatprep.subr.mxu0 0.0
  %398 = vmatpush2.msra.mxu0 0.0
  %399 = vmatprep.subr.mxu0 0.0
  %400 = vmatpush2.msra.mxu0 0.0
  %401 = vmatprep.subr.mxu0 0.0
  %402 = vmatpush2.msra.mxu0 0.0
  %403 = vmatprep.subr.mxu0 0.0
  %404 = vmatpush2.msra.mxu0 0.0
  %405 = vmatprep.subr.mxu0 0.0
  %406 = vmatpush2.msra.mxu0 0.0
  %407 = vmatprep.subr.mxu0 0.0
  %408 = vmatpush2.msra.mxu0 0.0
  %409 = vmatprep.subr.mxu0 0.0
  %410 = vmatpush2.msra.mxu0 0.0
  %411 = vmatprep.subr.mxu0 0.0
  %412 = vmatpush2.msra.mxu0 0.0
  %413 = vmatprep.subr.mxu0 0.0
  %414 = vmatpush2.msra.mxu0 0.0
  %415 = vmatprep.subr.mxu0 0.0
  %416 = vmatpush2.msra.mxu0 0.0
  %417 = vmatprep.subr.mxu0 0.0
  %418 = vmatpush2.msra.mxu0 0.0
  %419 = vmatprep.subr.mxu0 0.0
  %420 = vmatpush2.msra.mxu0 0.0
  %421 = vmatprep.subr.mxu0 0.0
  %422 = vmatpush2.msra.mxu0 0.0
  %423 = vmatprep.mubr.f32.mxu0 0.0
  %424 = vmatmul.mubr.f32.gmra.mxu0 %v100
  %v425 = vpop.f32.mrf.mxu0
  %v426 = vadd.f32 0.0, %v425
  %v427 = vpop.f32.mrf.mxu0
  %v428 = vadd.f32 0.0, %v427
  %429 = vdwg.mxu0
  %430 = vmatprep.subr.mxu0 %v346
  %431 = vmatpush1.msra.mxu0 %v345
  %432 = vmatprep.subr.mxu0 %v330
  %433 = vmatpush1.msra.mxu0 %v329
  %434 = vmatprep.subr.mxu0 %v314
  %435 = vmatpush1.msra.mxu0 %v313
  %436 = vmatprep.subr.mxu0 %v298
  %437 = vmatpush1.msra.mxu0 %v297
  %438 = vmatprep.subr.mxu0 %v282
  %439 = vmatpush1.msra.mxu0 %v281
  %440 = vmatprep.subr.mxu0 %v266
  %441 = vmatpush1.msra.mxu0 %v265
  %442 = vmatprep.subr.mxu0 %v250
  %443 = vmatpush1.msra.mxu0 %v249
  %444 = vmatprep.subr.mxu0 %v234
  %445 = vmatpush1.msra.mxu0 %v233
  %446 = vmatprep.subr.mxu0 %v218
  %447 = vmatpush1.msra.mxu0 %v217
  %448 = vmatprep.subr.mxu0 %v202
  %449 = vmatpush1.msra.mxu0 %v201
  %450 = vmatprep.subr.mxu0 %v186
  %451 = vmatpush1.msra.mxu0 %v185
  %452 = vmatprep.subr.mxu0 %v170
  %453 = vmatpush1.msra.mxu0 %v169
  %454 = vmatprep.subr.mxu0 %v154
  %455 = vmatpush1.msra.mxu0 %v153
  %456 = vmatprep.subr.mxu0 %v138
  %457 = vmatpush1.msra.mxu0 %v137
  %458 = vmatprep.subr.mxu0 %v122
  %459 = vmatpush1.msra.mxu0 %v121
  %460 = vmatprep.subr.mxu0 %v106
  %461 = vmatpush1.msra.mxu0 %v105
  %462 = vmatprep.subr.mxu0 0.0
  %463 = vmatpush2.msra.mxu0 0.0
  %464 = vmatprep.subr.mxu0 0.0
  %465 = vmatpush2.msra.mxu0 0.0
  %466 = vmatprep.subr.mxu0 0.0
  %467 = vmatpush2.msra.mxu0 0.0
  %468 = vmatprep.subr.mxu0 0.0
  %469 = vmatpush2.msra.mxu0 0.0
  %470 = vmatprep.subr.mxu0 0.0
  %471 = vmatpush2.msra.mxu0 0.0
  %472 = vmatprep.subr.mxu0 0.0
  %473 = vmatpush2.msra.mxu0 0.0
  %474 = vmatprep.subr.mxu0 0.0
  %475 = vmatpush2.msra.mxu0 0.0
  %476 = vmatprep.subr.mxu0 0.0
  %477 = vmatpush2.msra.mxu0 0.0
  %478 = vmatprep.subr.mxu0 0.0
  %479 = vmatpush2.msra.mxu0 0.0
  %480 = vmatprep.subr.mxu0 0.0
  %481 = vmatpush2.msra.mxu0 0.0
  %482 = vmatprep.subr.mxu0 0.0
  %483 = vmatpush2.msra.mxu0 0.0
  %484 = vmatprep.subr.mxu0 0.0
  %485 = vmatpush2.msra.mxu0 0.0
  %486 = vmatprep.subr.mxu0 0.0
  %487 = vmatpush2.msra.mxu0 0.0
  %488 = vmatprep.subr.mxu0 0.0
  %489 = vmatpush2.msra.mxu0 0.0
  %490 = vmatprep.subr.mxu0 0.0
  %491 = vmatpush2.msra.mxu0 0.0
  %492 = vmatprep.subr.mxu0 0.0
  %493 = vmatpush2.msra.mxu0 0.0
  %494 = vmatprep.mubr.f32.mxu0 0.0
  %495 = vmatmul.mubr.f32.gmra.mxu0 %v100
  %v496 = vpop.f32.mrf.mxu0
  %v497 = vadd.f32 0.0, %v496
  %v498 = vpop.f32.mrf.mxu0
  %v499 = vadd.f32 0.0, %v498
  %500 = vdwg.mxu0
  %501 = vmatprep.subr.mxu0 %v348
  %502 = vmatpush1.msra.mxu0 %v347
  %503 = vmatprep.subr.mxu0 %v332
  %504 = vmatpush1.msra.mxu0 %v331
  %505 = vmatprep.subr.mxu0 %v316
  %506 = vmatpush1.msra.mxu0 %v315
  %507 = vmatprep.subr.mxu0 %v300
  %508 = vmatpush1.msra.mxu0 %v299
  %509 = vmatprep.subr.mxu0 %v284
  %510 = vmatpush1.msra.mxu0 %v283
  %511 = vmatprep.subr.mxu0 %v268
  %512 = vmatpush1.msra.mxu0 %v267
  %513 = vmatprep.subr.mxu0 %v252
  %514 = vmatpush1.msra.mxu0 %v251
  %515 = vmatprep.subr.mxu0 %v236
  %516 = vmatpush1.msra.mxu0 %v235
  %517 = vmatprep.subr.mxu0 %v220
  %518 = vmatpush1.msra.mxu0 %v219
  %519 = vmatprep.subr.mxu0 %v204
  %520 = vmatpush1.msra.mxu0 %v203
  %521 = vmatprep.subr.mxu0 %v188
  %522 = vmatpush1.msra.mxu0 %v187
  %523 = vmatprep.subr.mxu0 %v172
  %524 = vmatpush1.msra.mxu0 %v171
  %525 = vmatprep.subr.mxu0 %v156
  %526 = vmatpush1.msra.mxu0 %v155
  %527 = vmatprep.subr.mxu0 %v140
  %528 = vmatpush1.msra.mxu0 %v139
  %529 = vmatprep.subr.mxu0 %v124
  %530 = vmatpush1.msra.mxu0 %v123
  %531 = vmatprep.subr.mxu0 %v108
  %532 = vmatpush1.msra.mxu0 %v107
  %533 = vmatprep.subr.mxu0 0.0
  %534 = vmatpush2.msra.mxu0 0.0
  %535 = vmatprep.subr.mxu0 0.0
  %536 = vmatpush2.msra.mxu0 0.0
  %537 = vmatprep.subr.mxu0 0.0
  %538 = vmatpush2.msra.mxu0 0.0
  %539 = vmatprep.subr.mxu0 0.0
  %540 = vmatpush2.msra.mxu0 0.0
  %541 = vmatprep.subr.mxu0 0.0
  %542 = vmatpush2.msra.mxu0 0.0
  %543 = vmatprep.subr.mxu0 0.0
  %544 = vmatpush2.msra.mxu0 0.0
  %545 = vmatprep.subr.mxu0 0.0
  %546 = vmatpush2.msra.mxu0 0.0
  %547 = vmatprep.subr.mxu0 0.0
  %548 = vmatpush2.msra.mxu0 0.0
  %549 = vmatprep.subr.mxu0 0.0
  %550 = vmatpush2.msra.mxu0 0.0
  %551 = vmatprep.subr.mxu0 0.0
  %552 = vmatpush2.msra.mxu0 0.0
  %553 = vmatprep.subr.mxu0 0.0
  %554 = vmatpush2.msra.mxu0 0.0
  %555 = vmatprep.subr.mxu0 0.0
  %556 = vmatpush2.msra.mxu0 0.0
  %557 = vmatprep.subr.mxu0 0.0
  %558 = vmatpush2.msra.mxu0 0.0
  %559 = vmatprep.subr.mxu0 0.0
  %560 = vmatpush2.msra.mxu0 0.0
  %561 = vmatprep.subr.mxu0 0.0
  %562 = vmatpush2.msra.mxu0 0.0
  %563 = vmatprep.subr.mxu0 0.0
  %564 = vmatpush2.msra.mxu0 0.0
  %565 = vmatprep.mubr.f32.mxu0 0.0
  %566 = vmatmul.mubr.f32.gmra.mxu0 %v100
  %v567 = vpop.f32.mrf.mxu0
  %v568 = vadd.f32 0.0, %v567
  %v569 = vpop.f32.mrf.mxu0
  %v570 = vadd.f32 0.0, %v569
  %571 = vdwg.mxu0
  %572 = vmatprep.subr.mxu0 %v350
  %573 = vmatpush1.msra.mxu0 %v349
  %574 = vmatprep.subr.mxu0 %v334
  %575 = vmatpush1.msra.mxu0 %v333
  %576 = vmatprep.subr.mxu0 %v318
  %577 = vmatpush1.msra.mxu0 %v317
  %578 = vmatprep.subr.mxu0 %v302
  %579 = vmatpush1.msra.mxu0 %v301
  %580 = vmatprep.subr.mxu0 %v286
  %581 = vmatpush1.msra.mxu0 %v285
  %582 = vmatprep.subr.mxu0 %v270
  %583 = vmatpush1.msra.mxu0 %v269
  %584 = vmatprep.subr.mxu0 %v254
  %585 = vmatpush1.msra.mxu0 %v253
  %586 = vmatprep.subr.mxu0 %v238
  %587 = vmatpush1.msra.mxu0 %v237
  %588 = vmatprep.subr.mxu0 %v222
  %589 = vmatpush1.msra.mxu0 %v221
  %590 = vmatprep.subr.mxu0 %v206
  %591 = vmatpush1.msra.mxu0 %v205
  %592 = vmatprep.subr.mxu0 %v190
  %593 = vmatpush1.msra.mxu0 %v189
  %594 = vmatprep.subr.mxu0 %v174
  %595 = vmatpush1.msra.mxu0 %v173
  %596 = vmatprep.subr.mxu0 %v158
  %597 = vmatpush1.msra.mxu0 %v157
  %598 = vmatprep.subr.mxu0 %v142
  %599 = vmatpush1.msra.mxu0 %v141
  %600 = vmatprep.subr.mxu0 %v126
  %601 = vmatpush1.msra.mxu0 %v125
  %602 = vmatprep.subr.mxu0 %v110
  %603 = vmatpush1.msra.mxu0 %v109
  %604 = vmatprep.subr.mxu0 0.0
  %605 = vmatpush2.msra.mxu0 0.0
  %606 = vmatprep.subr.mxu0 0.0
  %607 = vmatpush2.msra.mxu0 0.0
  %608 = vmatprep.subr.mxu0 0.0
  %609 = vmatpush2.msra.mxu0 0.0
  %610 = vmatprep.subr.mxu0 0.0
  %611 = vmatpush2.msra.mxu0 0.0
  %612 = vmatprep.subr.mxu0 0.0
  %613 = vmatpush2.msra.mxu0 0.0
  %614 = vmatprep.subr.mxu0 0.0
  %615 = vmatpush2.msra.mxu0 0.0
  %616 = vmatprep.subr.mxu0 0.0
  %617 = vmatpush2.msra.mxu0 0.0
  %618 = vmatprep.subr.mxu0 0.0
  %619 = vmatpush2.msra.mxu0 0.0
  %620 = vmatprep.subr.mxu0 0.0
  %621 = vmatpush2.msra.mxu0 0.0
  %622 = vmatprep.subr.mxu0 0.0
  %623 = vmatpush2.msra.mxu0 0.0
  %624 = vmatprep.subr.mxu0 0.0
  %625 = vmatpush2.msra.mxu0 0.0
  %626 = vmatprep.subr.mxu0 0.0
  %627 = vmatpush2.msra.mxu0 0.0
  %628 = vmatprep.subr.mxu0 0.0
  %629 = vmatpush2.msra.mxu0 0.0
  %630 = vmatprep.subr.mxu0 0.0
  %631 = vmatpush2.msra.mxu0 0.0
  %632 = vmatprep.subr.mxu0 0.0
  %633 = vmatpush2.msra.mxu0 0.0
  %634 = vmatprep.subr.mxu0 0.0
  %635 = vmatpush2.msra.mxu0 0.0
  %636 = vmatprep.mubr.f32.mxu0 0.0
  %637 = vmatmul.mubr.f32.gmra.mxu0 %v100
  %v638 = vpop.f32.mrf.mxu0
  %v639 = vadd.f32 0.0, %v638
  %v640 = vpop.f32.mrf.mxu0
  %v641 = vadd.f32 0.0, %v640
  %642 = vdwg.mxu0
  %643 = vmatprep.subr.mxu0 %v352
  %644 = vmatpush1.msra.mxu0 %v351
  %645 = vmatprep.subr.mxu0 %v336
  %646 = vmatpush1.msra.mxu0 %v335
  %647 = vmatprep.subr.mxu0 %v320
  %648 = vmatpush1.msra.mxu0 %v319
  %649 = vmatprep.subr.mxu0 %v304
  %650 = vmatpush1.msra.mxu0 %v303
  %651 = vmatprep.subr.mxu0 %v288
  %652 = vmatpush1.msra.mxu0 %v287
  %653 = vmatprep.subr.mxu0 %v272
  %654 = vmatpush1.msra.mxu0 %v271
  %655 = vmatprep.subr.mxu0 %v256
  %656 = vmatpush1.msra.mxu0 %v255
  %657 = vmatprep.subr.mxu0 %v240
  %658 = vmatpush1.msra.mxu0 %v239
  %659 = vmatprep.subr.mxu0 %v224
  %660 = vmatpush1.msra.mxu0 %v223
  %661 = vmatprep.subr.mxu0 %v208
  %662 = vmatpush1.msra.mxu0 %v207
  %663 = vmatprep.subr.mxu0 %v192
  %664 = vmatpush1.msra.mxu0 %v191
  %665 = vmatprep.subr.mxu0 %v176
  %666 = vmatpush1.msra.mxu0 %v175
  %667 = vmatprep.subr.mxu0 %v160
  %668 = vmatpush1.msra.mxu0 %v159
  %669 = vmatprep.subr.mxu0 %v144
  %670 = vmatpush1.msra.mxu0 %v143
  %671 = vmatprep.subr.mxu0 %v128
  %672 = vmatpush1.msra.mxu0 %v127
  %673 = vmatprep.subr.mxu0 %v112
  %674 = vmatpush1.msra.mxu0 %v111
  %675 = vmatprep.subr.mxu0 0.0
  %676 = vmatpush2.msra.mxu0 0.0
  %677 = vmatprep.subr.mxu0 0.0
  %678 = vmatpush2.msra.mxu0 0.0
  %679 = vmatprep.subr.mxu0 0.0
  %680 = vmatpush2.msra.mxu0 0.0
  %681 = vmatprep.subr.mxu0 0.0
  %682 = vmatpush2.msra.mxu0 0.0
  %683 = vmatprep.subr.mxu0 0.0
  %684 = vmatpush2.msra.mxu0 0.0
  %685 = vmatprep.subr.mxu0 0.0
  %686 = vmatpush2.msra.mxu0 0.0
  %687 = vmatprep.subr.mxu0 0.0
  %688 = vmatpush2.msra.mxu0 0.0
  %689 = vmatprep.subr.mxu0 0.0
  %690 = vmatpush2.msra.mxu0 0.0
  %691 = vmatprep.subr.mxu0 0.0
  %692 = vmatpush2.msra.mxu0 0.0
  %693 = vmatprep.subr.mxu0 0.0
  %694 = vmatpush2.msra.mxu0 0.0
  %695 = vmatprep.subr.mxu0 0.0
  %696 = vmatpush2.msra.mxu0 0.0
  %697 = vmatprep.subr.mxu0 0.0
  %698 = vmatpush2.msra.mxu0 0.0
  %699 = vmatprep.subr.mxu0 0.0
  %700 = vmatpush2.msra.mxu0 0.0
  %701 = vmatprep.subr.mxu0 0.0
  %702 = vmatpush2.msra.mxu0 0.0
  %703 = vmatprep.subr.mxu0 0.0
  %704 = vmatpush2.msra.mxu0 0.0
  %705 = vmatprep.subr.mxu0 0.0
  %706 = vmatpush2.msra.mxu0 0.0
  %707 = vmatprep.mubr.f32.mxu0 0.0
  %708 = vmatmul.mubr.f32.gmra.mxu0 %v100
  %v709 = vpop.f32.mrf.mxu0
  %v710 = vadd.f32 0.0, %v709
  %v711 = vpop.f32.mrf.mxu0
  %v712 = vadd.f32 0.0, %v711
  %713 = vdwg.mxu0
  %714 = vmatprep.subr.mxu0 %v354
  %715 = vmatpush1.msra.mxu0 %v353
  %716 = vmatprep.subr.mxu0 %v338
  %717 = vmatpush1.msra.mxu0 %v337
  %718 = vmatprep.subr.mxu0 %v322
  %719 = vmatpush1.msra.mxu0 %v321
  %720 = vmatprep.subr.mxu0 %v306
  %721 = vmatpush1.msra.mxu0 %v305
  %722 = vmatprep.subr.mxu0 %v290
  %723 = vmatpush1.msra.mxu0 %v289
  %724 = vmatprep.subr.mxu0 %v274
  %725 = vmatpush1.msra.mxu0 %v273
  %726 = vmatprep.subr.mxu0 %v258
  %727 = vmatpush1.msra.mxu0 %v257
  %728 = vmatprep.subr.mxu0 %v242
  %729 = vmatpush1.msra.mxu0 %v241
  %730 = vmatprep.subr.mxu0 %v226
  %731 = vmatpush1.msra.mxu0 %v225
  %732 = vmatprep.subr.mxu0 %v210
  %733 = vmatpush1.msra.mxu0 %v209
  %734 = vmatprep.subr.mxu0 %v194
  %735 = vmatpush1.msra.mxu0 %v193
  %736 = vmatprep.subr.mxu0 %v178
  %737 = vmatpush1.msra.mxu0 %v177
  %738 = vmatprep.subr.mxu0 %v162
  %739 = vmatpush1.msra.mxu0 %v161
  %740 = vmatprep.subr.mxu0 %v146
  %741 = vmatpush1.msra.mxu0 %v145
  %742 = vmatprep.subr.mxu0 %v130
  %743 = vmatpush1.msra.mxu0 %v129
  %744 = vmatprep.subr.mxu0 %v114
  %745 = vmatpush1.msra.mxu0 %v113
  %746 = vmatprep.subr.mxu0 0.0
  %747 = vmatpush2.msra.mxu0 0.0
  %748 = vmatprep.subr.mxu0 0.0
  %749 = vmatpush2.msra.mxu0 0.0
  %750 = vmatprep.subr.mxu0 0.0
  %751 = vmatpush2.msra.mxu0 0.0
  %752 = vmatprep.subr.mxu0 0.0
  %753 = vmatpush2.msra.mxu0 0.0
  %754 = vmatprep.subr.mxu0 0.0
  %755 = vmatpush2.msra.mxu0 0.0
  %756 = vmatprep.subr.mxu0 0.0
  %757 = vmatpush2.msra.mxu0 0.0
  %758 = vmatprep.subr.mxu0 0.0
  %759 = vmatpush2.msra.mxu0 0.0
  %760 = vmatprep.subr.mxu0 0.0
  %761 = vmatpush2.msra.mxu0 0.0
  %762 = vmatprep.subr.mxu0 0.0
  %763 = vmatpush2.msra.mxu0 0.0
  %764 = vmatprep.subr.mxu0 0.0
  %765 = vmatpush2.msra.mxu0 0.0
  %766 = vmatprep.subr.mxu0 0.0
  %767 = vmatpush2.msra.mxu0 0.0
  %768 = vmatprep.subr.mxu0 0.0
  %769 = vmatpush2.msra.mxu0 0.0
  %770 = vmatprep.subr.mxu0 0.0
  %771 = vmatpush2.msra.mxu0 0.0
  %772 = vmatprep.subr.mxu0 0.0
  %773 = vmatpush2.msra.mxu0 0.0
  %774 = vmatprep.subr.mxu0 0.0
  %775 = vmatpush2.msra.mxu0 0.0
  %776 = vmatprep.subr.mxu0 0.0
  %777 = vmatpush2.msra.mxu0 0.0
  %778 = vmatprep.mubr.f32.mxu0 0.0
  %779 = vmatmul.mubr.f32.gmra.mxu0 %v100
  %v780 = vpop.f32.mrf.mxu0
  %v781 = vadd.f32 0.0, %v780
  %v782 = vpop.f32.mrf.mxu0
  %v783 = vadd.f32 0.0, %v782
  %784 = vdwg.mxu0
  %785 = vmatprep.subr.mxu0 %v356
  %786 = vmatpush1.msra.mxu0 %v355
  %787 = vmatprep.subr.mxu0 %v340
  %788 = vmatpush1.msra.mxu0 %v339
  %789 = vmatprep.subr.mxu0 %v324
  %790 = vmatpush1.msra.mxu0 %v323
  %791 = vmatprep.subr.mxu0 %v308
  %792 = vmatpush1.msra.mxu0 %v307
  %793 = vmatprep.subr.mxu0 %v292
  %794 = vmatpush1.msra.mxu0 %v291
  %795 = vmatprep.subr.mxu0 %v276
  %796 = vmatpush1.msra.mxu0 %v275
  %797 = vmatprep.subr.mxu0 %v260
  %798 = vmatpush1.msra.mxu0 %v259
  %799 = vmatprep.subr.mxu0 %v244
  %800 = vmatpush1.msra.mxu0 %v243
  %801 = vmatprep.subr.mxu0 %v228
  %802 = vmatpush1.msra.mxu0 %v227
  %803 = vmatprep.subr.mxu0 %v212
  %804 = vmatpush1.msra.mxu0 %v211
  %805 = vmatprep.subr.mxu0 %v196
  %806 = vmatpush1.msra.mxu0 %v195
  %807 = vmatprep.subr.mxu0 %v180
  %808 = vmatpush1.msra.mxu0 %v179
  %809 = vmatprep.subr.mxu0 %v164
  %810 = vmatpush1.msra.mxu0 %v163
  %811 = vmatprep.subr.mxu0 %v148
  %812 = vmatpush1.msra.mxu0 %v147
  %813 = vmatprep.subr.mxu0 %v132
  %814 = vmatpush1.msra.mxu0 %v131
  %815 = vmatprep.subr.mxu0 %v116
  %816 = vmatpush1.msra.mxu0 %v115
  %817 = vmatprep.subr.mxu0 0.0
  %818 = vmatpush2.msra.mxu0 0.0
  %819 = vmatprep.subr.mxu0 0.0
  %820 = vmatpush2.msra.mxu0 0.0
  %821 = vmatprep.subr.mxu0 0.0
  %822 = vmatpush2.msra.mxu0 0.0
  %823 = vmatprep.subr.mxu0 0.0
  %824 = vmatpush2.msra.mxu0 0.0
  %825 = vmatprep.subr.mxu0 0.0
  %826 = vmatpush2.msra.mxu0 0.0
  %827 = vmatprep.subr.mxu0 0.0
  %828 = vmatpush2.msra.mxu0 0.0
  %829 = vmatprep.subr.mxu0 0.0
  %830 = vmatpush2.msra.mxu0 0.0
  %831 = vmatprep.subr.mxu0 0.0
  %832 = vmatpush2.msra.mxu0 0.0
  %833 = vmatprep.subr.mxu0 0.0
  %834 = vmatpush2.msra.mxu0 0.0
  %835 = vmatprep.subr.mxu0 0.0
  %836 = vmatpush2.msra.mxu0 0.0
  %837 = vmatprep.subr.mxu0 0.0
  %838 = vmatpush2.msra.mxu0 0.0
  %839 = vmatprep.subr.mxu0 0.0
  %840 = vmatpush2.msra.mxu0 0.0
  %841 = vmatprep.subr.mxu0 0.0
  %842 = vmatpush2.msra.mxu0 0.0
  %843 = vmatprep.subr.mxu0 0.0
  %844 = vmatpush2.msra.mxu0 0.0
  %845 = vmatprep.subr.mxu0 0.0
  %846 = vmatpush2.msra.mxu0 0.0
  %847 = vmatprep.subr.mxu0 0.0
  %848 = vmatpush2.msra.mxu0 0.0
  %849 = vmatprep.mubr.f32.mxu0 0.0
  %850 = vmatmul.mubr.f32.gmra.mxu0 %v100
  %v851 = vpop.f32.mrf.mxu0
  %v852 = vadd.f32 0.0, %v851
  %v853 = vpop.f32.mrf.mxu0
  %v854 = vadd.f32 0.0, %v853
  %855 = vdwg.mxu0
  %856 = vmatprep.subr.mxu0 %v358
  %857 = vmatpush1.msra.mxu0 %v357
  %858 = vmatprep.subr.mxu0 %v342
  %859 = vmatpush1.msra.mxu0 %v341
  %860 = vmatprep.subr.mxu0 %v326
  %861 = vmatpush1.msra.mxu0 %v325
  %862 = vmatprep.subr.mxu0 %v310
  %863 = vmatpush1.msra.mxu0 %v309
  %864 = vmatprep.subr.mxu0 %v294
  %865 = vmatpush1.msra.mxu0 %v293
  %866 = vmatprep.subr.mxu0 %v278
  %867 = vmatpush1.msra.mxu0 %v277
  %868 = vmatprep.subr.mxu0 %v262
  %869 = vmatpush1.msra.mxu0 %v261
  %870 = vmatprep.subr.mxu0 %v246
  %871 = vmatpush1.msra.mxu0 %v245
  %872 = vmatprep.subr.mxu0 %v230
  %873 = vmatpush1.msra.mxu0 %v229
  %874 = vmatprep.subr.mxu0 %v214
  %875 = vmatpush1.msra.mxu0 %v213
  %876 = vmatprep.subr.mxu0 %v198
  %877 = vmatpush1.msra.mxu0 %v197
  %878 = vmatprep.subr.mxu0 %v182
  %879 = vmatpush1.msra.mxu0 %v181
  %880 = vmatprep.subr.mxu0 %v166
  %881 = vmatpush1.msra.mxu0 %v165
  %882 = vmatprep.subr.mxu0 %v150
  %883 = vmatpush1.msra.mxu0 %v149
  %884 = vmatprep.subr.mxu0 %v134
  %885 = vmatpush1.msra.mxu0 %v133
  %886 = vmatprep.subr.mxu0 %v118
  %887 = vmatpush1.msra.mxu0 %v117
  %888 = vmatprep.subr.mxu0 0.0
  %889 = vmatpush2.msra.mxu0 0.0
  %890 = vmatprep.subr.mxu0 0.0
  %891 = vmatpush2.msra.mxu0 0.0
  %892 = vmatprep.subr.mxu0 0.0
  %893 = vmatpush2.msra.mxu0 0.0
  %894 = vmatprep.subr.mxu0 0.0
  %895 = vmatpush2.msra.mxu0 0.0
  %896 = vmatprep.subr.mxu0 0.0
  %897 = vmatpush2.msra.mxu0 0.0
  %898 = vmatprep.subr.mxu0 0.0
  %899 = vmatpush2.msra.mxu0 0.0
  %900 = vmatprep.subr.mxu0 0.0
  %901 = vmatpush2.msra.mxu0 0.0
  %902 = vmatprep.subr.mxu0 0.0
  %903 = vmatpush2.msra.mxu0 0.0
  %904 = vmatprep.subr.mxu0 0.0
  %905 = vmatpush2.msra.mxu0 0.0
  %906 = vmatprep.subr.mxu0 0.0
  %907 = vmatpush2.msra.mxu0 0.0
  %908 = vmatprep.subr.mxu0 0.0
  %909 = vmatpush2.msra.mxu0 0.0
  %910 = vmatprep.subr.mxu0 0.0
  %911 = vmatpush2.msra.mxu0 0.0
  %912 = vmatprep.subr.mxu0 0.0
  %913 = vmatpush2.msra.mxu0 0.0
  %914 = vmatprep.subr.mxu0 0.0
  %915 = vmatpush2.msra.mxu0 0.0
  %916 = vmatprep.subr.mxu0 0.0
  %917 = vmatpush2.msra.mxu0 0.0
  %918 = vmatprep.subr.mxu0 0.0
  %919 = vmatpush2.msra.mxu0 0.0
  %920 = vmatprep.mubr.f32.mxu0 0.0
  %921 = vmatmul.mubr.f32.gmra.mxu0 %v100
  %v922 = vpop.f32.mrf.mxu0
  %v923 = vadd.f32 0.0, %v922
  %v924 = vpop.f32.mrf.mxu0
  %v925 = vadd.f32 0.0, %v924
  %926 = vdwg.mxu0
  %v943 = vcombine.low %v426, %v428
  %v944 = vcombine.low %v497, %v499
  %v946 = vunpack.c.l.s4 1983009808
  %v947 = vunpack.c.0.s8 %v946
  %v948 = vlaneseq
  %v949 = vshrl.u32 %v948, 7
  %v950 = vsub.s32 %v947, %v949
  %v951 = vrot.slane %v943, %v950
  %v953 = vunpack.c.l.s4 1983009808
  %v954 = vunpack.c.0.s8 %v953
  %v955 = vlaneseq
  %v956 = vshrl.u32 %v955, 7
  %v957 = vsub.s32 %v954, %v956
  %v958 = vrot.slane %v944, %v957
  %v959 = vcombine.low %v951, %v958
  %v960 = vcombine.low %v568, %v570
  %v961 = vcombine.low %v639, %v641
  %v963 = vunpack.c.l.s4 1983009808
  %v964 = vunpack.c.0.s8 %v963
  %v965 = vlaneseq
  %v966 = vshrl.u32 %v965, 7
  %v967 = vsub.s32 %v964, %v966
  %v968 = vrot.slane %v960, %v967
  %v970 = vunpack.c.l.s4 1983009808
  %v971 = vunpack.c.0.s8 %v970
  %v972 = vlaneseq
  %v973 = vshrl.u32 %v972, 7
  %v974 = vsub.s32 %v971, %v973
  %v975 = vrot.slane %v961, %v974
  %v976 = vcombine.low %v968, %v975
  %v977 = vcombine.low %v710, %v712
  %v978 = vcombine.low %v781, %v783
  %v980 = vunpack.c.l.s4 1983009808
  %v981 = vunpack.c.0.s8 %v980
  %v982 = vlaneseq
  %v983 = vshrl.u32 %v982, 7
  %v984 = vsub.s32 %v981, %v983
  %v985 = vrot.slane %v977, %v984
  %v987 = vunpack.c.l.s4 1983009808
  %v988 = vunpack.c.0.s8 %v987
  %v989 = vlaneseq
  %v990 = vshrl.u32 %v989, 7
  %v991 = vsub.s32 %v988, %v990
  %v992 = vrot.slane %v978, %v991
  %v993 = vcombine.low %v985, %v992
  %v994 = vcombine.low %v852, %v854
  %v995 = vcombine.low %v923, %v925
  %v997 = vunpack.c.l.s4 1983009808
  %v998 = vunpack.c.0.s8 %v997
  %v999 = vlaneseq
  %v1000 = vshrl.u32 %v999, 7
  %v1001 = vsub.s32 %v998, %v1000
  %v1002 = vrot.slane %v994, %v1001
  %v1004 = vunpack.c.l.s4 1983009808
  %v1005 = vunpack.c.0.s8 %v1004
  %v1006 = vlaneseq
  %v1007 = vshrl.u32 %v1006, 7
  %v1008 = vsub.s32 %v1005, %v1007
  %v1009 = vrot.slane %v995, %v1008
  %v1010 = vcombine.low %v1002, %v1009
  %1015 = vst [vmem:[%s4] sm:$0xff] %v959
  %1016 = vst [vmem:[%s4 + $0x8] sm:$0xff] %v976
  %1017 = vst [vmem:[%s4 + $0x10] sm:$0xff] %v993
  %1018 = vst [vmem:[%s4 + $0x18] sm:$0xff] %v1010
  // Predicated region
  $region18: #{generator_forward.5} parent=0 // pred_check
    _
  $region19: #{generator_forward.5} parent=0 // pred_check_branch
    %1020 = sbr.rel (0) target = $region21
  $region20: #{generator_forward.5} parent=0 // pred_region
    _
  $region21: #{generator_forward.5} parent=0 // pred_fallthru
    _
  // Predicated region
  $region22: #{generator_forward.5} parent=0 // pred_check
    _
  $region23: #{generator_forward.5} parent=0 // pred_check_branch
    %1022 = sbr.rel (0) target = $region25
  $region24: #{generator_forward.5} parent=0 // pred_region
    _
  $region25: #{generator_forward.5} parent=0 // pred_fallthru
    _

// kernel: generator_forward.7
$region0: #{generator_forward.7}
  #allocation0 [shape = 'u32[]', space=smem, size = 0x4, offset = 0x4, fixed_abs, tag = 'smem constant byte address 0x4 - core index']
  #allocation1 [shape = 'u32[144,128]{1,0:T(1,128)}', space=vmem, size = 0x12000, scoped, tag = 'internal scratch']
  %s0 = inlined_call_operand.vmem [shape: f32[98,64], index: 0, kind: input, shape index: {}]
  %s1 = inlined_call_operand.vmem [shape: f32[1,64], index: 1, kind: input, shape index: {}]
  %s2 = inlined_call_operand.vmem [shape: f32[1,64], index: 2, kind: input, shape index: {}]
  %s3 = inlined_call_operand.vmem [shape: f32[1,64], index: 3, kind: input, shape index: {}]
  %s4 = inlined_call_operand.vmem [shape: f32[64,512], index: 4, kind: input, shape index: {}]
  %s5 = inlined_call_operand.vmem [shape: f32[98,512], index: 5, kind: output, shape index: {}]
  %s6 = sld [smem:[#allocation0]]
  $region30: #{generator_forward.7} parent=0
    _
  %s8 = ssub.s32 1, %s6
  %s9 = scalar_select 0, %s8, %s6
  // Predicated region
  $region2: #{generator_forward.7} parent=0 // pred_check
    _
  $region3: #{generator_forward.7} parent=0 // pred_check_branch
    %11 = sbr.rel (0) target = $region5
  $region4: #{generator_forward.7} parent=0 // pred_region
    _
  $region5: #{generator_forward.7} parent=0 // pred_fallthru
    _
  // Predicated region
  $region6: #{generator_forward.7} parent=0 // pred_check
    _
  $region7: #{generator_forward.7} parent=0 // pred_check_branch
    %13 = sbr.rel (0) target = $region9
  $region8: #{generator_forward.7} parent=0 // pred_region
    _
  $region9: #{generator_forward.7} parent=0 // pred_fallthru
    _
  // Predicated region
  $region10: #{generator_forward.7} parent=0 // pred_check
    _
  $region11: #{generator_forward.7} parent=0 // pred_check_branch
    %15 = sbr.rel (0) target = $region13
  $region12: #{generator_forward.7} parent=0 // pred_region
    _
  $region13: #{generator_forward.7} parent=0 // pred_fallthru
    _
  // Predicated region
  $region14: #{generator_forward.7} parent=0 // pred_check
    _
  $region15: #{generator_forward.7} parent=0 // pred_check_branch
    %17 = sbr.rel (0) target = $region17
  $region16: #{generator_forward.7} parent=0 // pred_region
    _
  $region17: #{generator_forward.7} parent=0 // pred_fallthru
    _
  // Predicated region
  $region18: #{generator_forward.7} parent=0 // pred_check
    _
  $region19: #{generator_forward.7} parent=0 // pred_check_branch
    %19 = sbr.rel (0) target = $region21
  $region20: #{generator_forward.7} parent=0 // pred_region
    _
  $region21: #{generator_forward.7} parent=0 // pred_fallthru
    _
  %v20 = vld [vmem:[%s0] sm:$0xff]
  %v21 = vld [vmem:[%s0 + $0x8] sm:$0xff]
  %v22 = vld [vmem:[%s0 + $0x10] sm:$0xff]
  %v23 = vld [vmem:[%s0 + $0x18] sm:$0xff]
  %v24 = vld [vmem:[%s0 + $0x20] sm:$0xff]
  %v25 = vld [vmem:[%s0 + $0x28] sm:$0xff]
  %v26 = vld [vmem:[%s0 + $0x30] sm:$0xff]
  %v27 = vld [vmem:[%s0 + $0x38] sm:$0xff]
  %v28 = vld [vmem:[%s0 + $0x40] sm:$0xff]
  %v29 = vld [vmem:[%s0 + $0x48] sm:$0xff]
  %v30 = vld [vmem:[%s0 + $0x50] sm:$0xff]
  %v31 = vld [vmem:[%s0 + $0x58] sm:$0xff]
  %v32 = vld [vmem:[%s0 + $0x60] sm:$0x3]
  %v33 = vld [vmem:[%s1] sm:$0x1]
  %v35 = vlaneseq
  %v36 = vshrl.u32 %v35, 7
  %v37 = vsub.s32 0, %v36
  %v38 = vrot.slane %v33, %v37
  %v40 = vadd.f32 %v20, %v38
  %v41 = vadd.f32 %v21, %v38
  %v42 = vadd.f32 %v22, %v38
  %v43 = vadd.f32 %v23, %v38
  %v44 = vadd.f32 %v24, %v38
  %v45 = vadd.f32 %v25, %v38
  %v46 = vadd.f32 %v26, %v38
  %v47 = vadd.f32 %v27, %v38
  %v48 = vadd.f32 %v28, %v38
  %v49 = vadd.f32 %v29, %v38
  %v50 = vadd.f32 %v30, %v38
  %v51 = vadd.f32 %v31, %v38
  %v52 = vadd.f32 %v32, %v38
  %vm53 = vcmask 523264
  %v54 = vsel %vm53, %v40, 0.0
  %v55 = vsel %vm53, %v41, 0.0
  %v56 = vadd.f32 %v54, %v55
  %v57 = vsel %vm53, %v42, 0.0
  %v58 = vadd.f32 %v56, %v57
  %v59 = vsel %vm53, %v43, 0.0
  %v60 = vadd.f32 %v58, %v59
  %v61 = vsel %vm53, %v44, 0.0
  %v62 = vadd.f32 %v60, %v61
  %v63 = vsel %vm53, %v45, 0.0
  %v64 = vadd.f32 %v62, %v63
  %v65 = vsel %vm53, %v46, 0.0
  %v66 = vadd.f32 %v64, %v65
  %v67 = vsel %vm53, %v47, 0.0
  %v68 = vadd.f32 %v66, %v67
  %v69 = vsel %vm53, %v48, 0.0
  %v70 = vadd.f32 %v68, %v69
  %v71 = vsel %vm53, %v49, 0.0
  %v72 = vadd.f32 %v70, %v71
  %v73 = vsel %vm53, %v50, 0.0
  %v74 = vadd.f32 %v72, %v73
  %v75 = vsel %vm53, %v51, 0.0
  %v76 = vadd.f32 %v74, %v75
  %vm77 = vcmask 517120
  %v78 = vsel %vm77, %v52, 0.0
  %v79 = vadd.f32 %v76, %v78
  %v80 = vrot.slane %v79, 4
  %v81 = vadd.f32 %v79, %v80
  %v82 = vrot.slane %v81, 2
  %v83 = vadd.f32 %v81, %v82
  %v84 = vrot.slane %v83, 1
  %v85 = vadd.f32 %v83, %v84
  %v86 = vmul.f32 %v85, 0.010204081
  %v87 = vsub.f32 %v40, %v86
  %v88 = vsub.f32 %v41, %v86
  %v89 = vsub.f32 %v42, %v86
  %v90 = vsub.f32 %v43, %v86
  %v91 = vsub.f32 %v44, %v86
  %v92 = vsub.f32 %v45, %v86
  %v93 = vsub.f32 %v46, %v86
  %v94 = vsub.f32 %v47, %v86
  %v95 = vsub.f32 %v48, %v86
  %v96 = vsub.f32 %v49, %v86
  %v97 = vsub.f32 %v50, %v86
  %v98 = vsub.f32 %v51, %v86
  %v99 = vsub.f32 %v52, %v86
  %v100 = vmul.f32 %v87, %v87
  %v101 = vmul.f32 %v88, %v88
  %v102 = vmul.f32 %v89, %v89
  %v103 = vmul.f32 %v90, %v90
  %v104 = vmul.f32 %v91, %v91
  %v105 = vmul.f32 %v92, %v92
  %v106 = vmul.f32 %v93, %v93
  %v107 = vmul.f32 %v94, %v94
  %v108 = vmul.f32 %v95, %v95
  %v109 = vmul.f32 %v96, %v96
  %v110 = vmul.f32 %v97, %v97
  %v111 = vmul.f32 %v98, %v98
  %v112 = vmul.f32 %v99, %v99
  %v113 = vsel %vm53, %v100, 0.0
  %v114 = vsel %vm53, %v101, 0.0
  %v115 = vadd.f32 %v113, %v114
  %v116 = vsel %vm53, %v102, 0.0
  %v117 = vadd.f32 %v115, %v116
  %v118 = vsel %vm53, %v103, 0.0
  %v119 = vadd.f32 %v117, %v118
  %v120 = vsel %vm53, %v104, 0.0
  %v121 = vadd.f32 %v119, %v120
  %v122 = vsel %vm53, %v105, 0.0
  %v123 = vadd.f32 %v121, %v122
  %v124 = vsel %vm53, %v106, 0.0
  %v125 = vadd.f32 %v123, %v124
  %v126 = vsel %vm53, %v107, 0.0
  %v127 = vadd.f32 %v125, %v126
  %v128 = vsel %vm53, %v108, 0.0
  %v129 = vadd.f32 %v127, %v128
  %v130 = vsel %vm53, %v109, 0.0
  %v131 = vadd.f32 %v129, %v130
  %v132 = vsel %vm53, %v110, 0.0
  %v133 = vadd.f32 %v131, %v132
  %v134 = vsel %vm53, %v111, 0.0
  %v135 = vadd.f32 %v133, %v134
  %v136 = vsel %vm77, %v112, 0.0
  %v137 = vadd.f32 %v135, %v136
  %v138 = vrot.slane %v137, 4
  %v139 = vadd.f32 %v137, %v138
  %v140 = vrot.slane %v139, 2
  %v141 = vadd.f32 %v139, %v140
  %v142 = vrot.slane %v141, 1
  %v143 = vadd.f32 %v141, %v142
  %v144 = vmul.f32 %v143, 0.010204081
  %v145 = vadd.f32 %v144, 1e-05
  %v146 = vrsqrt.pop %v145
  %v147 = vmul.f32 %v87, %v146
  %v148 = vmul.f32 %v88, %v146
  %v149 = vmul.f32 %v89, %v146
  %v150 = vmul.f32 %v90, %v146
  %v151 = vmul.f32 %v91, %v146
  %v152 = vmul.f32 %v92, %v146
  %v153 = vmul.f32 %v93, %v146
  %v154 = vmul.f32 %v94, %v146
  %v155 = vmul.f32 %v95, %v146
  %v156 = vmul.f32 %v96, %v146
  %v157 = vmul.f32 %v97, %v146
  %v158 = vmul.f32 %v98, %v146
  %v159 = vmul.f32 %v99, %v146
  %v160 = vld [vmem:[%s2] sm:$0x1]
  %v162 = vlaneseq
  %v163 = vshrl.u32 %v162, 7
  %v164 = vsub.s32 0, %v163
  %v165 = vrot.slane %v160, %v164
  %v167 = vmul.f32 %v147, %v165
  %v168 = vmul.f32 %v148, %v165
  %v169 = vmul.f32 %v149, %v165
  %v170 = vmul.f32 %v150, %v165
  %v171 = vmul.f32 %v151, %v165
  %v172 = vmul.f32 %v152, %v165
  %v173 = vmul.f32 %v153, %v165
  %v174 = vmul.f32 %v154, %v165
  %v175 = vmul.f32 %v155, %v165
  %v176 = vmul.f32 %v156, %v165
  %v177 = vmul.f32 %v157, %v165
  %v178 = vmul.f32 %v158, %v165
  %v179 = vmul.f32 %v159, %v165
  %v180 = vld [vmem:[%s3] sm:$0x1]
  %v182 = vlaneseq
  %v183 = vshrl.u32 %v182, 7
  %v184 = vsub.s32 0, %v183
  %v185 = vrot.slane %v180, %v184
  %v187 = vadd.f32 %v167, %v185
  %v188 = vadd.f32 %v168, %v185
  %v189 = vadd.f32 %v169, %v185
  %v190 = vadd.f32 %v170, %v185
  %v191 = vadd.f32 %v171, %v185
  %v192 = vadd.f32 %v172, %v185
  %v193 = vadd.f32 %v173, %v185
  %v194 = vadd.f32 %v174, %v185
  %v195 = vadd.f32 %v175, %v185
  %v196 = vadd.f32 %v176, %v185
  %v197 = vadd.f32 %v177, %v185
  %v198 = vadd.f32 %v178, %v185
  %v199 = vadd.f32 %v179, %v185
  %v200 = vmax.f32 %v187, 0.0
  %v201 = vmax.f32 %v188, 0.0
  %v202 = vmax.f32 %v189, 0.0
  %v203 = vmax.f32 %v190, 0.0
  %v204 = vmax.f32 %v191, 0.0
  %v205 = vmax.f32 %v192, 0.0
  %v206 = vmax.f32 %v193, 0.0
  %v207 = vmax.f32 %v194, 0.0
  %v208 = vmax.f32 %v195, 0.0
  %v209 = vmax.f32 %v196, 0.0
  %v210 = vmax.f32 %v197, 0.0
  %v211 = vmax.f32 %v198, 0.0
  %v212 = vmax.f32 %v199, 0.0
  %v213 = vld [vmem:[%s4] sm:$0xff]
  %v214 = vld [vmem:[%s4 + $0x8] sm:$0xff]
  %v215 = vld [vmem:[%s4 + $0x10] sm:$0xff]
  %v216 = vld [vmem:[%s4 + $0x18] sm:$0xff]
  %v217 = vld [vmem:[%s4 + $0x20] sm:$0xff]
  %v218 = vld [vmem:[%s4 + $0x28] sm:$0xff]
  %v219 = vld [vmem:[%s4 + $0x30] sm:$0xff]
  %v220 = vld [vmem:[%s4 + $0x38] sm:$0xff]
  %v221 = vld [vmem:[%s4 + $0x40] sm:$0xff]
  %v222 = vld [vmem:[%s4 + $0x48] sm:$0xff]
  %v223 = vld [vmem:[%s4 + $0x50] sm:$0xff]
  %v224 = vld [vmem:[%s4 + $0x58] sm:$0xff]
  %v225 = vld [vmem:[%s4 + $0x60] sm:$0xff]
  %v226 = vld [vmem:[%s4 + $0x68] sm:$0xff]
  %v227 = vld [vmem:[%s4 + $0x70] sm:$0xff]
  %v228 = vld [vmem:[%s4 + $0x78] sm:$0xff]
  %v229 = vld [vmem:[%s4 + $0x80] sm:$0xff]
  %v230 = vld [vmem:[%s4 + $0x88] sm:$0xff]
  %v231 = vld [vmem:[%s4 + $0x90] sm:$0xff]
  %v232 = vld [vmem:[%s4 + $0x98] sm:$0xff]
  %v233 = vld [vmem:[%s4 + $0xa0] sm:$0xff]
  %v234 = vld [vmem:[%s4 + $0xa8] sm:$0xff]
  %v235 = vld [vmem:[%s4 + $0xb0] sm:$0xff]
  %v236 = vld [vmem:[%s4 + $0xb8] sm:$0xff]
  %v237 = vld [vmem:[%s4 + $0xc0] sm:$0xff]
  %v238 = vld [vmem:[%s4 + $0xc8] sm:$0xff]
  %v239 = vld [vmem:[%s4 + $0xd0] sm:$0xff]
  %v240 = vld [vmem:[%s4 + $0xd8] sm:$0xff]
  %v241 = vld [vmem:[%s4 + $0xe0] sm:$0xff]
  %v242 = vld [vmem:[%s4 + $0xe8] sm:$0xff]
  %v243 = vld [vmem:[%s4 + $0xf0] sm:$0xff]
  %v244 = vld [vmem:[%s4 + $0xf8] sm:$0xff]
  %v246 = vsel %vm53, %v200, 0
  %v249 = vsel %vm53, %v201, 0
  %v252 = vsel %vm53, %v202, 0
  %v255 = vsel %vm53, %v203, 0
  %v258 = vsel %vm53, %v204, 0
  %v261 = vsel %vm53, %v205, 0
  %v264 = vsel %vm53, %v206, 0
  %v267 = vsel %vm53, %v207, 0
  %v270 = vsel %vm53, %v208, 0
  %v273 = vsel %vm53, %v209, 0
  %v276 = vsel %vm53, %v210, 0
  %v279 = vsel %vm53, %v211, 0
  %v282 = vsel %vm53, %v212, 0
  %284 = vmatprep.subr.mxu0 0.0
  %285 = vmatpush1.msra.mxu0 0.0
  %286 = vmatprep.subr.mxu0 0.0
  %287 = vmatpush1.msra.mxu0 0.0
  %288 = vmatprep.subr.mxu0 0.0
  %289 = vmatpush1.msra.mxu0 0.0
  %290 = vmatprep.subr.mxu0 0.0
  %291 = vmatpush1.msra.mxu0 0.0
  %292 = vmatprep.subr.mxu0 0.0
  %293 = vmatpush1.msra.mxu0 0.0
  %294 = vmatprep.subr.mxu0 0.0
  %295 = vmatpush1.msra.mxu0 0.0
  %296 = vmatprep.subr.mxu0 0.0
  %297 = vmatpush1.msra.mxu0 0.0
  %298 = vmatprep.subr.mxu0 0.0
  %299 = vmatpush1.msra.mxu0 0.0
  %300 = vmatprep.subr.mxu0 %v242
  %301 = vmatpush1.msra.mxu0 %v241
  %302 = vmatprep.subr.mxu0 %v238
  %303 = vmatpush1.msra.mxu0 %v237
  %304 = vmatprep.subr.mxu0 %v234
  %305 = vmatpush1.msra.mxu0 %v233
  %306 = vmatprep.subr.mxu0 %v230
  %307 = vmatpush1.msra.mxu0 %v229
  %308 = vmatprep.subr.mxu0 %v226
  %309 = vmatpush1.msra.mxu0 %v225
  %310 = vmatprep.subr.mxu0 %v222
  %311 = vmatpush1.msra.mxu0 %v221
  %312 = vmatprep.subr.mxu0 %v218
  %313 = vmatpush1.msra.mxu0 %v217
  %314 = vmatprep.subr.mxu0 %v214
  %315 = vmatpush1.msra.mxu0 %v213
  %316 = vmatprep.subr.mxu0 0.0
  %317 = vmatpush2.msra.mxu0 0.0
  %318 = vmatprep.subr.mxu0 0.0
  %319 = vmatpush2.msra.mxu0 0.0
  %320 = vmatprep.subr.mxu0 0.0
  %321 = vmatpush2.msra.mxu0 0.0
  %322 = vmatprep.subr.mxu0 0.0
  %323 = vmatpush2.msra.mxu0 0.0
  %324 = vmatprep.subr.mxu0 0.0
  %325 = vmatpush2.msra.mxu0 0.0
  %326 = vmatprep.subr.mxu0 0.0
  %327 = vmatpush2.msra.mxu0 0.0
  %328 = vmatprep.subr.mxu0 0.0
  %329 = vmatpush2.msra.mxu0 0.0
  %330 = vmatprep.subr.mxu0 0.0
  %331 = vmatpush2.msra.mxu0 0.0
  %332 = vmatprep.subr.mxu0 0.0
  %333 = vmatpush2.msra.mxu0 0.0
  %334 = vmatprep.subr.mxu0 0.0
  %335 = vmatpush2.msra.mxu0 0.0
  %336 = vmatprep.subr.mxu0 0.0
  %337 = vmatpush2.msra.mxu0 0.0
  %338 = vmatprep.subr.mxu0 0.0
  %339 = vmatpush2.msra.mxu0 0.0
  %340 = vmatprep.subr.mxu0 0.0
  %341 = vmatpush2.msra.mxu0 0.0
  %342 = vmatprep.subr.mxu0 0.0
  %343 = vmatpush2.msra.mxu0 0.0
  %344 = vmatprep.subr.mxu0 0.0
  %345 = vmatpush2.msra.mxu0 0.0
  %346 = vmatprep.subr.mxu0 0.0
  %347 = vmatpush2.msra.mxu0 0.0
  %348 = vmatprep.mubr.f32.mxu0 0.0
  %349 = vmatmul.mubr.f32.gmra.mxu0 %v246
  %v350 = vpop.f32.mrf.mxu0
  %v351 = vadd.f32 0.0, %v350
  %v352 = vpop.f32.mrf.mxu0
  %v353 = vadd.f32 0.0, %v352
  %354 = vmatprep.mubr.f32.mxu0 0.0
  %355 = vmatmul.mubr.f32.gmra.mxu0 %v249
  %v356 = vpop.f32.mrf.mxu0
  %v357 = vadd.f32 0.0, %v356
  %v358 = vpop.f32.mrf.mxu0
  %v359 = vadd.f32 0.0, %v358
  %360 = vmatprep.mubr.f32.mxu0 0.0
  %361 = vmatmul.mubr.f32.gmra.mxu0 %v252
  %v362 = vpop.f32.mrf.mxu0
  %v363 = vadd.f32 0.0, %v362
  %v364 = vpop.f32.mrf.mxu0
  %v365 = vadd.f32 0.0, %v364
  %366 = vmatprep.mubr.f32.mxu0 0.0
  %367 = vmatmul.mubr.f32.gmra.mxu0 %v255
  %v368 = vpop.f32.mrf.mxu0
  %v369 = vadd.f32 0.0, %v368
  %v370 = vpop.f32.mrf.mxu0
  %v371 = vadd.f32 0.0, %v370
  %372 = vmatprep.mubr.f32.mxu0 0.0
  %373 = vmatmul.mubr.f32.gmra.mxu0 %v258
  %v374 = vpop.f32.mrf.mxu0
  %v375 = vadd.f32 0.0, %v374
  %v376 = vpop.f32.mrf.mxu0
  %v377 = vadd.f32 0.0, %v376
  %378 = vmatprep.mubr.f32.mxu0 0.0
  %379 = vmatmul.mubr.f32.gmra.mxu0 %v261
  %v380 = vpop.f32.mrf.mxu0
  %v381 = vadd.f32 0.0, %v380
  %v382 = vpop.f32.mrf.mxu0
  %v383 = vadd.f32 0.0, %v382
  %384 = vmatprep.mubr.f32.mxu0 0.0
  %385 = vmatmul.mubr.f32.gmra.mxu0 %v264
  %v386 = vpop.f32.mrf.mxu0
  %v387 = vadd.f32 0.0, %v386
  %v388 = vpop.f32.mrf.mxu0
  %v389 = vadd.f32 0.0, %v388
  %390 = vmatprep.mubr.f32.mxu0 0.0
  %391 = vmatmul.mubr.f32.gmra.mxu0 %v267
  %v392 = vpop.f32.mrf.mxu0
  %v393 = vadd.f32 0.0, %v392
  %v394 = vpop.f32.mrf.mxu0
  %v395 = vadd.f32 0.0, %v394
  %396 = vmatprep.mubr.f32.mxu0 0.0
  %397 = vmatmul.mubr.f32.gmra.mxu0 %v270
  %v398 = vpop.f32.mrf.mxu0
  %v399 = vadd.f32 0.0, %v398
  %v400 = vpop.f32.mrf.mxu0
  %v401 = vadd.f32 0.0, %v400
  %402 = vmatprep.mubr.f32.mxu0 0.0
  %403 = vmatmul.mubr.f32.gmra.mxu0 %v273
  %v404 = vpop.f32.mrf.mxu0
  %v405 = vadd.f32 0.0, %v404
  %v406 = vpop.f32.mrf.mxu0
  %v407 = vadd.f32 0.0, %v406
  %408 = vmatprep.mubr.f32.mxu0 0.0
  %409 = vmatmul.mubr.f32.gmra.mxu0 %v276
  %v410 = vpop.f32.mrf.mxu0
  %v411 = vadd.f32 0.0, %v410
  %v412 = vpop.f32.mrf.mxu0
  %v413 = vadd.f32 0.0, %v412
  %414 = vmatprep.mubr.f32.mxu0 0.0
  %415 = vmatmul.mubr.f32.gmra.mxu0 %v279
  %v416 = vpop.f32.mrf.mxu0
  %v417 = vadd.f32 0.0, %v416
  %v418 = vpop.f32.mrf.mxu0
  %v419 = vadd.f32 0.0, %v418
  %420 = vmatprep.mubr.f32.mxu0 0.0
  %421 = vmatmul.mubr.f32.gmra.mxu0 %v282
  %v422 = vpop.f32.mrf.mxu0
  %v423 = vadd.f32 0.0, %v422
  %v424 = vpop.f32.mrf.mxu0
  %v425 = vadd.f32 0.0, %v424
  %426 = vdwg.mxu0
  %427 = vmatprep.subr.mxu0 0.0
  %428 = vmatpush1.msra.mxu0 0.0
  %429 = vmatprep.subr.mxu0 0.0
  %430 = vmatpush1.msra.mxu0 0.0
  %431 = vmatprep.subr.mxu0 0.0
  %432 = vmatpush1.msra.mxu0 0.0
  %433 = vmatprep.subr.mxu0 0.0
  %434 = vmatpush1.msra.mxu0 0.0
  %435 = vmatprep.subr.mxu0 0.0
  %436 = vmatpush1.msra.mxu0 0.0
  %437 = vmatprep.subr.mxu0 0.0
  %438 = vmatpush1.msra.mxu0 0.0
  %439 = vmatprep.subr.mxu0 0.0
  %440 = vmatpush1.msra.mxu0 0.0
  %441 = vmatprep.subr.mxu0 0.0
  %442 = vmatpush1.msra.mxu0 0.0
  %443 = vmatprep.subr.mxu0 %v244
  %444 = vmatpush1.msra.mxu0 %v243
  %445 = vmatprep.subr.mxu0 %v240
  %446 = vmatpush1.msra.mxu0 %v239
  %447 = vmatprep.subr.mxu0 %v236
  %448 = vmatpush1.msra.mxu0 %v235
  %449 = vmatprep.subr.mxu0 %v232
  %450 = vmatpush1.msra.mxu0 %v231
  %451 = vmatprep.subr.mxu0 %v228
  %452 = vmatpush1.msra.mxu0 %v227
  %453 = vmatprep.subr.mxu0 %v224
  %454 = vmatpush1.msra.mxu0 %v223
  %455 = vmatprep.subr.mxu0 %v220
  %456 = vmatpush1.msra.mxu0 %v219
  %457 = vmatprep.subr.mxu0 %v216
  %458 = vmatpush1.msra.mxu0 %v215
  %459 = vmatprep.subr.mxu0 0.0
  %460 = vmatpush2.msra.mxu0 0.0
  %461 = vmatprep.subr.mxu0 0.0
  %462 = vmatpush2.msra.mxu0 0.0
  %463 = vmatprep.subr.mxu0 0.0
  %464 = vmatpush2.msra.mxu0 0.0
  %465 = vmatprep.subr.mxu0 0.0
  %466 = vmatpush2.msra.mxu0 0.0
  %467 = vmatprep.subr.mxu0 0.0
  %468 = vmatpush2.msra.mxu0 0.0
  %469 = vmatprep.subr.mxu0 0.0
  %470 = vmatpush2.msra.mxu0 0.0
  %471 = vmatprep.subr.mxu0 0.0
  %472 = vmatpush2.msra.mxu0 0.0
  %473 = vmatprep.subr.mxu0 0.0
  %474 = vmatpush2.msra.mxu0 0.0
  %475 = vmatprep.subr.mxu0 0.0
  %476 = vmatpush2.msra.mxu0 0.0
  %477 = vmatprep.subr.mxu0 0.0
  %478 = vmatpush2.msra.mxu0 0.0
  %479 = vmatprep.subr.mxu0 0.0
  %480 = vmatpush2.msra.mxu0 0.0
  %481 = vmatprep.subr.mxu0 0.0
  %482 = vmatpush2.msra.mxu0 0.0
  %483 = vmatprep.subr.mxu0 0.0
  %484 = vmatpush2.msra.mxu0 0.0
  %485 = vmatprep.subr.mxu0 0.0
  %486 = vmatpush2.msra.mxu0 0.0
  %487 = vmatprep.subr.mxu0 0.0
  %488 = vmatpush2.msra.mxu0 0.0
  %489 = vmatprep.subr.mxu0 0.0
  %490 = vmatpush2.msra.mxu0 0.0
  %491 = vmatprep.mubr.f32.mxu0 0.0
  %492 = vmatmul.mubr.f32.gmra.mxu0 %v246
  %v493 = vpop.f32.mrf.mxu0
  %v494 = vadd.f32 0.0, %v493
  %v495 = vpop.f32.mrf.mxu0
  %v496 = vadd.f32 0.0, %v495
  %497 = vmatprep.mubr.f32.mxu0 0.0
  %498 = vmatmul.mubr.f32.gmra.mxu0 %v249
  %v499 = vpop.f32.mrf.mxu0
  %v500 = vadd.f32 0.0, %v499
  %v501 = vpop.f32.mrf.mxu0
  %v502 = vadd.f32 0.0, %v501
  %503 = vmatprep.mubr.f32.mxu0 0.0
  %504 = vmatmul.mubr.f32.gmra.mxu0 %v252
  %v505 = vpop.f32.mrf.mxu0
  %v506 = vadd.f32 0.0, %v505
  %v507 = vpop.f32.mrf.mxu0
  %v508 = vadd.f32 0.0, %v507
  %509 = vmatprep.mubr.f32.mxu0 0.0
  %510 = vmatmul.mubr.f32.gmra.mxu0 %v255
  %v511 = vpop.f32.mrf.mxu0
  %v512 = vadd.f32 0.0, %v511
  %v513 = vpop.f32.mrf.mxu0
  %v514 = vadd.f32 0.0, %v513
  %515 = vmatprep.mubr.f32.mxu0 0.0
  %516 = vmatmul.mubr.f32.gmra.mxu0 %v258
  %v517 = vpop.f32.mrf.mxu0
  %v518 = vadd.f32 0.0, %v517
  %v519 = vpop.f32.mrf.mxu0
  %v520 = vadd.f32 0.0, %v519
  %521 = vmatprep.mubr.f32.mxu0 0.0
  %522 = vmatmul.mubr.f32.gmra.mxu0 %v261
  %v523 = vpop.f32.mrf.mxu0
  %v524 = vadd.f32 0.0, %v523
  %v525 = vpop.f32.mrf.mxu0
  %v526 = vadd.f32 0.0, %v525
  %527 = vmatprep.mubr.f32.mxu0 0.0
  %528 = vmatmul.mubr.f32.gmra.mxu0 %v264
  %v529 = vpop.f32.mrf.mxu0
  %v530 = vadd.f32 0.0, %v529
  %v531 = vpop.f32.mrf.mxu0
  %v532 = vadd.f32 0.0, %v531
  %533 = vmatprep.mubr.f32.mxu0 0.0
  %534 = vmatmul.mubr.f32.gmra.mxu0 %v267
  %v535 = vpop.f32.mrf.mxu0
  %v536 = vadd.f32 0.0, %v535
  %v537 = vpop.f32.mrf.mxu0
  %v538 = vadd.f32 0.0, %v537
  %539 = vmatprep.mubr.f32.mxu0 0.0
  %540 = vmatmul.mubr.f32.gmra.mxu0 %v270
  %v541 = vpop.f32.mrf.mxu0
  %v542 = vadd.f32 0.0, %v541
  %v543 = vpop.f32.mrf.mxu0
  %v544 = vadd.f32 0.0, %v543
  %545 = vmatprep.mubr.f32.mxu0 0.0
  %546 = vmatmul.mubr.f32.gmra.mxu0 %v273
  %v547 = vpop.f32.mrf.mxu0
  %v548 = vadd.f32 0.0, %v547
  %v549 = vpop.f32.mrf.mxu0
  %v550 = vadd.f32 0.0, %v549
  %551 = vmatprep.mubr.f32.mxu0 0.0
  %552 = vmatmul.mubr.f32.gmra.mxu0 %v276
  %v553 = vpop.f32.mrf.mxu0
  %v554 = vadd.f32 0.0, %v553
  %v555 = vpop.f32.mrf.mxu0
  %v556 = vadd.f32 0.0, %v555
  %557 = vmatprep.mubr.f32.mxu0 0.0
  %558 = vmatmul.mubr.f32.gmra.mxu0 %v279
  %v559 = vpop.f32.mrf.mxu0
  %v560 = vadd.f32 0.0, %v559
  %v561 = vpop.f32.mrf.mxu0
  %v562 = vadd.f32 0.0, %v561
  %563 = vmatprep.mubr.f32.mxu0 0.0
  %564 = vmatmul.mubr.f32.gmra.mxu0 %v282
  %v565 = vpop.f32.mrf.mxu0
  %v566 = vadd.f32 0.0, %v565
  %v567 = vpop.f32.mrf.mxu0
  %v568 = vadd.f32 0.0, %v567
  %569 = vdwg.mxu0
  %570 = vst [vmem:[%s5] sm:$0xff] %v351
  %571 = vst [vmem:[%s5 + $0x8] sm:$0xff] %v353
  %572 = vst [vmem:[%s5 + $0x10] sm:$0xff] %v494
  %573 = vst [vmem:[%s5 + $0x18] sm:$0xff] %v496
  %574 = vst [vmem:[%s5 + $0x20] sm:$0xff] %v357
  %575 = vst [vmem:[%s5 + $0x28] sm:$0xff] %v359
  %576 = vst [vmem:[%s5 + $0x30] sm:$0xff] %v500
  %577 = vst [vmem:[%s5 + $0x38] sm:$0xff] %v502
  %578 = vst [vmem:[%s5 + $0x40] sm:$0xff] %v363
  %579 = vst [vmem:[%s5 + $0x48] sm:$0xff] %v365
  %580 = vst [vmem:[%s5 + $0x50] sm:$0xff] %v506
  %581 = vst [vmem:[%s5 + $0x58] sm:$0xff] %v508
  %582 = vst [vmem:[%s5 + $0x60] sm:$0xff] %v369
  %583 = vst [vmem:[%s5 + $0x68] sm:$0xff] %v371
  %584 = vst [vmem:[%s5 + $0x70] sm:$0xff] %v512
  %585 = vst [vmem:[%s5 + $0x78] sm:$0xff] %v514
  %586 = vst [vmem:[%s5 + $0x80] sm:$0xff] %v375
  %587 = vst [vmem:[%s5 + $0x88] sm:$0xff] %v377
  %588 = vst [vmem:[%s5 + $0x90] sm:$0xff] %v518
  %589 = vst [vmem:[%s5 + $0x98] sm:$0xff] %v520
  %590 = vst [vmem:[%s5 + $0xa0] sm:$0xff] %v381
  %591 = vst [vmem:[%s5 + $0xa8] sm:$0xff] %v383
  %592 = vst [vmem:[%s5 + $0xb0] sm:$0xff] %v524
  %593 = vst [vmem:[%s5 + $0xb8] sm:$0xff] %v526
  %594 = vst [vmem:[%s5 + $0xc0] sm:$0xff] %v387
  %595 = vst [vmem:[%s5 + $0xc8] sm:$0xff] %v389
  %596 = vst [vmem:[%s5 + $0xd0] sm:$0xff] %v530
  %597 = vst [vmem:[%s5 + $0xd8] sm:$0xff] %v532
  %598 = vst [vmem:[%s5 + $0xe0] sm:$0xff] %v393
  %599 = vst [vmem:[%s5 + $0xe8] sm:$0xff] %v395
  %600 = vst [vmem:[%s5 + $0xf0] sm:$0xff] %v536
  %601 = vst [vmem:[%s5 + $0xf8] sm:$0xff] %v538
  %602 = vst [vmem:[%s5 + $0x100] sm:$0xff] %v399
  %603 = vst [vmem:[%s5 + $0x108] sm:$0xff] %v401
  %604 = vst [vmem:[%s5 + $0x110] sm:$0xff] %v542
  %605 = vst [vmem:[%s5 + $0x118] sm:$0xff] %v544
  %606 = vst [vmem:[%s5 + $0x120] sm:$0xff] %v405
  %607 = vst [vmem:[%s5 + $0x128] sm:$0xff] %v407
  %608 = vst [vmem:[%s5 + $0x130] sm:$0xff] %v548
  %609 = vst [vmem:[%s5 + $0x138] sm:$0xff] %v550
  %610 = vst [vmem:[%s5 + $0x140] sm:$0xff] %v411
  %611 = vst [vmem:[%s5 + $0x148] sm:$0xff] %v413
  %612 = vst [vmem:[%s5 + $0x150] sm:$0xff] %v554
  %613 = vst [vmem:[%s5 + $0x158] sm:$0xff] %v556
  %614 = vst [vmem:[%s5 + $0x160] sm:$0xff] %v417
  %615 = vst [vmem:[%s5 + $0x168] sm:$0xff] %v419
  %616 = vst [vmem:[%s5 + $0x170] sm:$0xff] %v560
  %617 = vst [vmem:[%s5 + $0x178] sm:$0xff] %v562
  %618 = vst [vmem:[%s5 + $0x180] sm:$0x3] %v423
  %619 = vst [vmem:[%s5 + $0x188] sm:$0x3] %v425
  %620 = vst [vmem:[%s5 + $0x190] sm:$0x3] %v566
  %621 = vst [vmem:[%s5 + $0x198] sm:$0x3] %v568
  // Predicated region
  $region22: #{generator_forward.7} parent=0 // pred_check
    _
  $region23: #{generator_forward.7} parent=0 // pred_check_branch
    %623 = sbr.rel (0) target = $region25
  $region24: #{generator_forward.7} parent=0 // pred_region
    _
  $region25: #{generator_forward.7} parent=0 // pred_fallthru
    _
  // Predicated region
  $region26: #{generator_forward.7} parent=0 // pred_check
    _
  $region27: #{generator_forward.7} parent=0 // pred_check_branch
    %625 = sbr.rel (0) target = $region29
  $region28: #{generator_forward.7} parent=0 // pred_region
    _
  $region29: #{generator_forward.7} parent=0 // pred_fallthru
    _

// kernel: generator_forward.8
$region0: #{generator_forward.8}
  #allocation0 [shape = 'u32[]', space=smem, size = 0x4, offset = 0x4, fixed_abs, tag = 'smem constant byte address 0x4 - core index']
  #allocation1 [shape = 'u32[144,128]{1,0:T(1,128)}', space=vmem, size = 0x12000, scoped, tag = 'internal scratch']
  %s0 = inlined_call_operand.vmem [shape: f32[392,32], index: 0, kind: input, shape index: {}]
  %s1 = inlined_call_operand.vmem [shape: f32[1,32], index: 1, kind: input, shape index: {}]
  %s2 = inlined_call_operand.vmem [shape: f32[1,32], index: 2, kind: input, shape index: {}]
  %s3 = inlined_call_operand.vmem [shape: f32[1,32], index: 3, kind: input, shape index: {}]
  %s4 = inlined_call_operand.vmem [shape: f32[32,16], index: 4, kind: input, shape index: {}]
  %s5 = inlined_call_operand.vmem [shape: f32[392,16], index: 5, kind: output, shape index: {}]
  %s6 = sld [smem:[#allocation0]]
  $region30: #{generator_forward.8} parent=0
    _
  %s8 = ssub.s32 1, %s6
  %s9 = scalar_select 0, %s8, %s6
  // Predicated region
  $region2: #{generator_forward.8} parent=0 // pred_check
    _
  $region3: #{generator_forward.8} parent=0 // pred_check_branch
    %11 = sbr.rel (0) target = $region5
  $region4: #{generator_forward.8} parent=0 // pred_region
    _
  $region5: #{generator_forward.8} parent=0 // pred_fallthru
    _
  // Predicated region
  $region6: #{generator_forward.8} parent=0 // pred_check
    _
  $region7: #{generator_forward.8} parent=0 // pred_check_branch
    %13 = sbr.rel (0) target = $region9
  $region8: #{generator_forward.8} parent=0 // pred_region
    _
  $region9: #{generator_forward.8} parent=0 // pred_fallthru
    _
  // Predicated region
  $region10: #{generator_forward.8} parent=0 // pred_check
    _
  $region11: #{generator_forward.8} parent=0 // pred_check_branch
    %15 = sbr.rel (0) target = $region13
  $region12: #{generator_forward.8} parent=0 // pred_region
    _
  $region13: #{generator_forward.8} parent=0 // pred_fallthru
    _
  // Predicated region
  $region14: #{generator_forward.8} parent=0 // pred_check
    _
  $region15: #{generator_forward.8} parent=0 // pred_check_branch
    %17 = sbr.rel (0) target = $region17
  $region16: #{generator_forward.8} parent=0 // pred_region
    _
  $region17: #{generator_forward.8} parent=0 // pred_fallthru
    _
  // Predicated region
  $region18: #{generator_forward.8} parent=0 // pred_check
    _
  $region19: #{generator_forward.8} parent=0 // pred_check_branch
    %19 = sbr.rel (0) target = $region21
  $region20: #{generator_forward.8} parent=0 // pred_region
    _
  $region21: #{generator_forward.8} parent=0 // pred_fallthru
    _
  %v20 = vld [vmem:[%s0] sm:$0xff]
  %v21 = vld [vmem:[%s0 + $0x8] sm:$0xff]
  %v22 = vld [vmem:[%s0 + $0x10] sm:$0xff]
  %v23 = vld [vmem:[%s0 + $0x18] sm:$0xff]
  %v24 = vld [vmem:[%s0 + $0x20] sm:$0xff]
  %v25 = vld [vmem:[%s0 + $0x28] sm:$0xff]
  %v26 = vld [vmem:[%s0 + $0x30] sm:$0xff]
  %v27 = vld [vmem:[%s0 + $0x38] sm:$0xff]
  %v28 = vld [vmem:[%s0 + $0x40] sm:$0xff]
  %v29 = vld [vmem:[%s0 + $0x48] sm:$0xff]
  %v30 = vld [vmem:[%s0 + $0x50] sm:$0xff]
  %v31 = vld [vmem:[%s0 + $0x58] sm:$0xff]
  %v32 = vld [vmem:[%s0 + $0x60] sm:$0xff]
  %v33 = vld [vmem:[%s0 + $0x68] sm:$0xff]
  %v34 = vld [vmem:[%s0 + $0x70] sm:$0xff]
  %v35 = vld [vmem:[%s0 + $0x78] sm:$0xff]
  %v36 = vld [vmem:[%s0 + $0x80] sm:$0xff]
  %v37 = vld [vmem:[%s0 + $0x88] sm:$0xff]
  %v38 = vld [vmem:[%s0 + $0x90] sm:$0xff]
  %v39 = vld [vmem:[%s0 + $0x98] sm:$0xff]
  %v40 = vld [vmem:[%s0 + $0xa0] sm:$0xff]
  %v41 = vld [vmem:[%s0 + $0xa8] sm:$0xff]
  %v42 = vld [vmem:[%s0 + $0xb0] sm:$0xff]
  %v43 = vld [vmem:[%s0 + $0xb8] sm:$0xff]
  %v44 = vld [vmem:[%s0 + $0xc0] sm:$0xff]
  %v45 = vld [vmem:[%s0 + $0xc8] sm:$0xff]
  %v46 = vld [vmem:[%s0 + $0xd0] sm:$0xff]
  %v47 = vld [vmem:[%s0 + $0xd8] sm:$0xff]
  %v48 = vld [vmem:[%s0 + $0xe0] sm:$0xff]
  %v49 = vld [vmem:[%s0 + $0xe8] sm:$0xff]
  %v50 = vld [vmem:[%s0 + $0xf0] sm:$0xff]
  %v51 = vld [vmem:[%s0 + $0xf8] sm:$0xff]
  %v52 = vld [vmem:[%s0 + $0x100] sm:$0xff]
  %v53 = vld [vmem:[%s0 + $0x108] sm:$0xff]
  %v54 = vld [vmem:[%s0 + $0x110] sm:$0xff]
  %v55 = vld [vmem:[%s0 + $0x118] sm:$0xff]
  %v56 = vld [vmem:[%s0 + $0x120] sm:$0xff]
  %v57 = vld [vmem:[%s0 + $0x128] sm:$0xff]
  %v58 = vld [vmem:[%s0 + $0x130] sm:$0xff]
  %v59 = vld [vmem:[%s0 + $0x138] sm:$0xff]
  %v60 = vld [vmem:[%s0 + $0x140] sm:$0xff]
  %v61 = vld [vmem:[%s0 + $0x148] sm:$0xff]
  %v62 = vld [vmem:[%s0 + $0x150] sm:$0xff]
  %v63 = vld [vmem:[%s0 + $0x158] sm:$0xff]
  %v64 = vld [vmem:[%s0 + $0x160] sm:$0xff]
  %v65 = vld [vmem:[%s0 + $0x168] sm:$0xff]
  %v66 = vld [vmem:[%s0 + $0x170] sm:$0xff]
  %v67 = vld [vmem:[%s0 + $0x178] sm:$0xff]
  %v68 = vld [vmem:[%s0 + $0x180] sm:$0xff]
  %v69 = vld [vmem:[%s1] sm:$0x1]
  %v71 = vlaneseq
  %v72 = vshrl.u32 %v71, 7
  %v73 = vsub.s32 0, %v72
  %v74 = vrot.slane %v69, %v73
  %v76 = vadd.f32 %v20, %v74
  %v77 = vadd.f32 %v21, %v74
  %v78 = vadd.f32 %v22, %v74
  %v79 = vadd.f32 %v23, %v74
  %v80 = vadd.f32 %v24, %v74
  %v81 = vadd.f32 %v25, %v74
  %v82 = vadd.f32 %v26, %v74
  %v83 = vadd.f32 %v27, %v74
  %v84 = vadd.f32 %v28, %v74
  %v85 = vadd.f32 %v29, %v74
  %v86 = vadd.f32 %v30, %v74
  %v87 = vadd.f32 %v31, %v74
  %v88 = vadd.f32 %v32, %v74
  %v89 = vadd.f32 %v33, %v74
  %v90 = vadd.f32 %v34, %v74
  %v91 = vadd.f32 %v35, %v74
  %v92 = vadd.f32 %v36, %v74
  %v93 = vadd.f32 %v37, %v74
  %v94 = vadd.f32 %v38, %v74
  %v95 = vadd.f32 %v39, %v74
  %v96 = vadd.f32 %v40, %v74
  %v97 = vadd.f32 %v41, %v74
  %v98 = vadd.f32 %v42, %v74
  %v99 = vadd.f32 %v43, %v74
  %v100 = vadd.f32 %v44, %v74
  %v101 = vadd.f32 %v45, %v74
  %v102 = vadd.f32 %v46, %v74
  %v103 = vadd.f32 %v47, %v74
  %v104 = vadd.f32 %v48, %v74
  %v105 = vadd.f32 %v49, %v74
  %v106 = vadd.f32 %v50, %v74
  %v107 = vadd.f32 %v51, %v74
  %v108 = vadd.f32 %v52, %v74
  %v109 = vadd.f32 %v53, %v74
  %v110 = vadd.f32 %v54, %v74
  %v111 = vadd.f32 %v55, %v74
  %v112 = vadd.f32 %v56, %v74
  %v113 = vadd.f32 %v57, %v74
  %v114 = vadd.f32 %v58, %v74
  %v115 = vadd.f32 %v59, %v74
  %v116 = vadd.f32 %v60, %v74
  %v117 = vadd.f32 %v61, %v74
  %v118 = vadd.f32 %v62, %v74
  %v119 = vadd.f32 %v63, %v74
  %v120 = vadd.f32 %v64, %v74
  %v121 = vadd.f32 %v65, %v74
  %v122 = vadd.f32 %v66, %v74
  %v123 = vadd.f32 %v67, %v74
  %v124 = vadd.f32 %v68, %v74
  %vm125 = vcmask 261120
  %v126 = vsel %vm125, %v76, 0.0
  %v127 = vsel %vm125, %v77, 0.0
  %v128 = vadd.f32 %v126, %v127
  %v129 = vsel %vm125, %v78, 0.0
  %v130 = vadd.f32 %v128, %v129
  %v131 = vsel %vm125, %v79, 0.0
  %v132 = vadd.f32 %v130, %v131
  %v133 = vsel %vm125, %v80, 0.0
  %v134 = vadd.f32 %v132, %v133
  %v135 = vsel %vm125, %v81, 0.0
  %v136 = vadd.f32 %v134, %v135
  %v137 = vsel %vm125, %v82, 0.0
  %v138 = vadd.f32 %v136, %v137
  %v139 = vsel %vm125, %v83, 0.0
  %v140 = vadd.f32 %v138, %v139
  %v141 = vsel %vm125, %v84, 0.0
  %v142 = vadd.f32 %v140, %v141
  %v143 = vsel %vm125, %v85, 0.0
  %v144 = vadd.f32 %v142, %v143
  %v145 = vsel %vm125, %v86, 0.0
  %v146 = vadd.f32 %v144, %v145
  %v147 = vsel %vm125, %v87, 0.0
  %v148 = vadd.f32 %v146, %v147
  %v149 = vsel %vm125, %v88, 0.0
  %v150 = vadd.f32 %v148, %v149
  %v151 = vsel %vm125, %v89, 0.0
  %v152 = vadd.f32 %v150, %v151
  %v153 = vsel %vm125, %v90, 0.0
  %v154 = vadd.f32 %v152, %v153
  %v155 = vsel %vm125, %v91, 0.0
  %v156 = vadd.f32 %v154, %v155
  %v157 = vsel %vm125, %v92, 0.0
  %v158 = vadd.f32 %v156, %v157
  %v159 = vsel %vm125, %v93, 0.0
  %v160 = vadd.f32 %v158, %v159
  %v161 = vsel %vm125, %v94, 0.0
  %v162 = vadd.f32 %v160, %v161
  %v163 = vsel %vm125, %v95, 0.0
  %v164 = vadd.f32 %v162, %v163
  %v165 = vsel %vm125, %v96, 0.0
  %v166 = vadd.f32 %v164, %v165
  %v167 = vsel %vm125, %v97, 0.0
  %v168 = vadd.f32 %v166, %v167
  %v169 = vsel %vm125, %v98, 0.0
  %v170 = vadd.f32 %v168, %v169
  %v171 = vsel %vm125, %v99, 0.0
  %v172 = vadd.f32 %v170, %v171
  %v173 = vsel %vm125, %v100, 0.0
  %v174 = vadd.f32 %v172, %v173
  %v175 = vsel %vm125, %v101, 0.0
  %v176 = vadd.f32 %v174, %v175
  %v177 = vsel %vm125, %v102, 0.0
  %v178 = vadd.f32 %v176, %v177
  %v179 = vsel %vm125, %v103, 0.0
  %v180 = vadd.f32 %v178, %v179
  %v181 = vsel %vm125, %v104, 0.0
  %v182 = vadd.f32 %v180, %v181
  %v183 = vsel %vm125, %v105, 0.0
  %v184 = vadd.f32 %v182, %v183
  %v185 = vsel %vm125, %v106, 0.0
  %v186 = vadd.f32 %v184, %v185
  %v187 = vsel %vm125, %v107, 0.0
  %v188 = vadd.f32 %v186, %v187
  %v189 = vsel %vm125, %v108, 0.0
  %v190 = vadd.f32 %v188, %v189
  %v191 = vsel %vm125, %v109, 0.0
  %v192 = vadd.f32 %v190, %v191
  %v193 = vsel %vm125, %v110, 0.0
  %v194 = vadd.f32 %v192, %v193
  %v195 = vsel %vm125, %v111, 0.0
  %v196 = vadd.f32 %v194, %v195
  %v197 = vsel %vm125, %v112, 0.0
  %v198 = vadd.f32 %v196, %v197
  %v199 = vsel %vm125, %v113, 0.0
  %v200 = vadd.f32 %v198, %v199
  %v201 = vsel %vm125, %v114, 0.0
  %v202 = vadd.f32 %v200, %v201
  %v203 = vsel %vm125, %v115, 0.0
  %v204 = vadd.f32 %v202, %v203
  %v205 = vsel %vm125, %v116, 0.0
  %v206 = vadd.f32 %v204, %v205
  %v207 = vsel %vm125, %v117, 0.0
  %v208 = vadd.f32 %v206, %v207
  %v209 = vsel %vm125, %v118, 0.0
  %v210 = vadd.f32 %v208, %v209
  %v211 = vsel %vm125, %v119, 0.0
  %v212 = vadd.f32 %v210, %v211
  %v213 = vsel %vm125, %v120, 0.0
  %v214 = vadd.f32 %v212, %v213
  %v215 = vsel %vm125, %v121, 0.0
  %v216 = vadd.f32 %v214, %v215
  %v217 = vsel %vm125, %v122, 0.0
  %v218 = vadd.f32 %v216, %v217
  %v219 = vsel %vm125, %v123, 0.0
  %v220 = vadd.f32 %v218, %v219
  %v221 = vsel %vm125, %v124, 0.0
  %v222 = vadd.f32 %v220, %v221
  %v223 = vrot.slane %v222, 4
  %v224 = vadd.f32 %v222, %v223
  %v225 = vrot.slane %v224, 2
  %v226 = vadd.f32 %v224, %v225
  %v227 = vrot.slane %v226, 1
  %v228 = vadd.f32 %v226, %v227
  %v229 = vmul.f32 %v228, 0.0025510204
  %v230 = vsub.f32 %v76, %v229
  %v231 = vsub.f32 %v77, %v229
  %v232 = vsub.f32 %v78, %v229
  %v233 = vsub.f32 %v79, %v229
  %v234 = vsub.f32 %v80, %v229
  %v235 = vsub.f32 %v81, %v229
  %v236 = vsub.f32 %v82, %v229
  %v237 = vsub.f32 %v83, %v229
  %v238 = vsub.f32 %v84, %v229
  %v239 = vsub.f32 %v85, %v229
  %v240 = vsub.f32 %v86, %v229
  %v241 = vsub.f32 %v87, %v229
  %v242 = vsub.f32 %v88, %v229
  %v243 = vsub.f32 %v89, %v229
  %v244 = vsub.f32 %v90, %v229
  %v245 = vsub.f32 %v91, %v229
  %v246 = vsub.f32 %v92, %v229
  %v247 = vsub.f32 %v93, %v229
  %v248 = vsub.f32 %v94, %v229
  %v249 = vsub.f32 %v95, %v229
  %v250 = vsub.f32 %v96, %v229
  %v251 = vsub.f32 %v97, %v229
  %v252 = vsub.f32 %v98, %v229
  %v253 = vsub.f32 %v99, %v229
  %v254 = vsub.f32 %v100, %v229
  %v255 = vsub.f32 %v101, %v229
  %v256 = vsub.f32 %v102, %v229
  %v257 = vsub.f32 %v103, %v229
  %v258 = vsub.f32 %v104, %v229
  %v259 = vsub.f32 %v105, %v229
  %v260 = vsub.f32 %v106, %v229
  %v261 = vsub.f32 %v107, %v229
  %v262 = vsub.f32 %v108, %v229
  %v263 = vsub.f32 %v109, %v229
  %v264 = vsub.f32 %v110, %v229
  %v265 = vsub.f32 %v111, %v229
  %v266 = vsub.f32 %v112, %v229
  %v267 = vsub.f32 %v113, %v229
  %v268 = vsub.f32 %v114, %v229
  %v269 = vsub.f32 %v115, %v229
  %v270 = vsub.f32 %v116, %v229
  %v271 = vsub.f32 %v117, %v229
  %v272 = vsub.f32 %v118, %v229
  %v273 = vsub.f32 %v119, %v229
  %v274 = vsub.f32 %v120, %v229
  %v275 = vsub.f32 %v121, %v229
  %v276 = vsub.f32 %v122, %v229
  %v277 = vsub.f32 %v123, %v229
  %v278 = vsub.f32 %v124, %v229
  %v279 = vmul.f32 %v230, %v230
  %v280 = vmul.f32 %v231, %v231
  %v281 = vmul.f32 %v232, %v232
  %v282 = vmul.f32 %v233, %v233
  %v283 = vmul.f32 %v234, %v234
  %v284 = vmul.f32 %v235, %v235
  %v285 = vmul.f32 %v236, %v236
  %v286 = vmul.f32 %v237, %v237
  %v287 = vmul.f32 %v238, %v238
  %v288 = vmul.f32 %v239, %v239
  %v289 = vmul.f32 %v240, %v240
  %v290 = vmul.f32 %v241, %v241
  %v291 = vmul.f32 %v242, %v242
  %v292 = vmul.f32 %v243, %v243
  %v293 = vmul.f32 %v244, %v244
  %v294 = vmul.f32 %v245, %v245
  %v295 = vmul.f32 %v246, %v246
  %v296 = vmul.f32 %v247, %v247
  %v297 = vmul.f32 %v248, %v248
  %v298 = vmul.f32 %v249, %v249
  %v299 = vmul.f32 %v250, %v250
  %v300 = vmul.f32 %v251, %v251
  %v301 = vmul.f32 %v252, %v252
  %v302 = vmul.f32 %v253, %v253
  %v303 = vmul.f32 %v254, %v254
  %v304 = vmul.f32 %v255, %v255
  %v305 = vmul.f32 %v256, %v256
  %v306 = vmul.f32 %v257, %v257
  %v307 = vmul.f32 %v258, %v258
  %v308 = vmul.f32 %v259, %v259
  %v309 = vmul.f32 %v260, %v260
  %v310 = vmul.f32 %v261, %v261
  %v311 = vmul.f32 %v262, %v262
  %v312 = vmul.f32 %v263, %v263
  %v313 = vmul.f32 %v264, %v264
  %v314 = vmul.f32 %v265, %v265
  %v315 = vmul.f32 %v266, %v266
  %v316 = vmul.f32 %v267, %v267
  %v317 = vmul.f32 %v268, %v268
  %v318 = vmul.f32 %v269, %v269
  %v319 = vmul.f32 %v270, %v270
  %v320 = vmul.f32 %v271, %v271
  %v321 = vmul.f32 %v272, %v272
  %v322 = vmul.f32 %v273, %v273
  %v323 = vmul.f32 %v274, %v274
  %v324 = vmul.f32 %v275, %v275
  %v325 = vmul.f32 %v276, %v276
  %v326 = vmul.f32 %v277, %v277
  %v327 = vmul.f32 %v278, %v278
  %v328 = vsel %vm125, %v279, 0.0
  %v329 = vsel %vm125, %v280, 0.0
  %v330 = vadd.f32 %v328, %v329
  %v331 = vsel %vm125, %v281, 0.0
  %v332 = vadd.f32 %v330, %v331
  %v333 = vsel %vm125, %v282, 0.0
  %v334 = vadd.f32 %v332, %v333
  %v335 = vsel %vm125, %v283, 0.0
  %v336 = vadd.f32 %v334, %v335
  %v337 = vsel %vm125, %v284, 0.0
  %v338 = vadd.f32 %v336, %v337
  %v339 = vsel %vm125, %v285, 0.0
  %v340 = vadd.f32 %v338, %v339
  %v341 = vsel %vm125, %v286, 0.0
  %v342 = vadd.f32 %v340, %v341
  %v343 = vsel %vm125, %v287, 0.0
  %v344 = vadd.f32 %v342, %v343
  %v345 = vsel %vm125, %v288, 0.0
  %v346 = vadd.f32 %v344, %v345
  %v347 = vsel %vm125, %v289, 0.0
  %v348 = vadd.f32 %v346, %v347
  %v349 = vsel %vm125, %v290, 0.0
  %v350 = vadd.f32 %v348, %v349
  %v351 = vsel %vm125, %v291, 0.0
  %v352 = vadd.f32 %v350, %v351
  %v353 = vsel %vm125, %v292, 0.0
  %v354 = vadd.f32 %v352, %v353
  %v355 = vsel %vm125, %v293, 0.0
  %v356 = vadd.f32 %v354, %v355
  %v357 = vsel %vm125, %v294, 0.0
  %v358 = vadd.f32 %v356, %v357
  %v359 = vsel %vm125, %v295, 0.0
  %v360 = vadd.f32 %v358, %v359
  %v361 = vsel %vm125, %v296, 0.0
  %v362 = vadd.f32 %v360, %v361
  %v363 = vsel %vm125, %v297, 0.0
  %v364 = vadd.f32 %v362, %v363
  %v365 = vsel %vm125, %v298, 0.0
  %v366 = vadd.f32 %v364, %v365
  %v367 = vsel %vm125, %v299, 0.0
  %v368 = vadd.f32 %v366, %v367
  %v369 = vsel %vm125, %v300, 0.0
  %v370 = vadd.f32 %v368, %v369
  %v371 = vsel %vm125, %v301, 0.0
  %v372 = vadd.f32 %v370, %v371
  %v373 = vsel %vm125, %v302, 0.0
  %v374 = vadd.f32 %v372, %v373
  %v375 = vsel %vm125, %v303, 0.0
  %v376 = vadd.f32 %v374, %v375
  %v377 = vsel %vm125, %v304, 0.0
  %v378 = vadd.f32 %v376, %v377
  %v379 = vsel %vm125, %v305, 0.0
  %v380 = vadd.f32 %v378, %v379
  %v381 = vsel %vm125, %v306, 0.0
  %v382 = vadd.f32 %v380, %v381
  %v383 = vsel %vm125, %v307, 0.0
  %v384 = vadd.f32 %v382, %v383
  %v385 = vsel %vm125, %v308, 0.0
  %v386 = vadd.f32 %v384, %v385
  %v387 = vsel %vm125, %v309, 0.0
  %v388 = vadd.f32 %v386, %v387
  %v389 = vsel %vm125, %v310, 0.0
  %v390 = vadd.f32 %v388, %v389
  %v391 = vsel %vm125, %v311, 0.0
  %v392 = vadd.f32 %v390, %v391
  %v393 = vsel %vm125, %v312, 0.0
  %v394 = vadd.f32 %v392, %v393
  %v395 = vsel %vm125, %v313, 0.0
  %v396 = vadd.f32 %v394, %v395
  %v397 = vsel %vm125, %v314, 0.0
  %v398 = vadd.f32 %v396, %v397
  %v399 = vsel %vm125, %v315, 0.0
  %v400 = vadd.f32 %v398, %v399
  %v401 = vsel %vm125, %v316, 0.0
  %v402 = vadd.f32 %v400, %v401
  %v403 = vsel %vm125, %v317, 0.0
  %v404 = vadd.f32 %v402, %v403
  %v405 = vsel %vm125, %v318, 0.0
  %v406 = vadd.f32 %v404, %v405
  %v407 = vsel %vm125, %v319, 0.0
  %v408 = vadd.f32 %v406, %v407
  %v409 = vsel %vm125, %v320, 0.0
  %v410 = vadd.f32 %v408, %v409
  %v411 = vsel %vm125, %v321, 0.0
  %v412 = vadd.f32 %v410, %v411
  %v413 = vsel %vm125, %v322, 0.0
  %v414 = vadd.f32 %v412, %v413
  %v415 = vsel %vm125, %v323, 0.0
  %v416 = vadd.f32 %v414, %v415
  %v417 = vsel %vm125, %v324, 0.0
  %v418 = vadd.f32 %v416, %v417
  %v419 = vsel %vm125, %v325, 0.0
  %v420 = vadd.f32 %v418, %v419
  %v421 = vsel %vm125, %v326, 0.0
  %v422 = vadd.f32 %v420, %v421
  %v423 = vsel %vm125, %v327, 0.0
  %v424 = vadd.f32 %v422, %v423
  %v425 = vrot.slane %v424, 4
  %v426 = vadd.f32 %v424, %v425
  %v427 = vrot.slane %v426, 2
  %v428 = vadd.f32 %v426, %v427
  %v429 = vrot.slane %v428, 1
  %v430 = vadd.f32 %v428, %v429
  %v431 = vmul.f32 %v430, 0.0025510204
  %v432 = vadd.f32 %v431, 1e-05
  %v433 = vrsqrt.pop %v432
  %v434 = vmul.f32 %v230, %v433
  %v435 = vmul.f32 %v231, %v433
  %v436 = vmul.f32 %v232, %v433
  %v437 = vmul.f32 %v233, %v433
  %v438 = vmul.f32 %v234, %v433
  %v439 = vmul.f32 %v235, %v433
  %v440 = vmul.f32 %v236, %v433
  %v441 = vmul.f32 %v237, %v433
  %v442 = vmul.f32 %v238, %v433
  %v443 = vmul.f32 %v239, %v433
  %v444 = vmul.f32 %v240, %v433
  %v445 = vmul.f32 %v241, %v433
  %v446 = vmul.f32 %v242, %v433
  %v447 = vmul.f32 %v243, %v433
  %v448 = vmul.f32 %v244, %v433
  %v449 = vmul.f32 %v245, %v433
  %v450 = vmul.f32 %v246, %v433
  %v451 = vmul.f32 %v247, %v433
  %v452 = vmul.f32 %v248, %v433
  %v453 = vmul.f32 %v249, %v433
  %v454 = vmul.f32 %v250, %v433
  %v455 = vmul.f32 %v251, %v433
  %v456 = vmul.f32 %v252, %v433
  %v457 = vmul.f32 %v253, %v433
  %v458 = vmul.f32 %v254, %v433
  %v459 = vmul.f32 %v255, %v433
  %v460 = vmul.f32 %v256, %v433
  %v461 = vmul.f32 %v257, %v433
  %v462 = vmul.f32 %v258, %v433
  %v463 = vmul.f32 %v259, %v433
  %v464 = vmul.f32 %v260, %v433
  %v465 = vmul.f32 %v261, %v433
  %v466 = vmul.f32 %v262, %v433
  %v467 = vmul.f32 %v263, %v433
  %v468 = vmul.f32 %v264, %v433
  %v469 = vmul.f32 %v265, %v433
  %v470 = vmul.f32 %v266, %v433
  %v471 = vmul.f32 %v267, %v433
  %v472 = vmul.f32 %v268, %v433
  %v473 = vmul.f32 %v269, %v433
  %v474 = vmul.f32 %v270, %v433
  %v475 = vmul.f32 %v271, %v433
  %v476 = vmul.f32 %v272, %v433
  %v477 = vmul.f32 %v273, %v433
  %v478 = vmul.f32 %v274, %v433
  %v479 = vmul.f32 %v275, %v433
  %v480 = vmul.f32 %v276, %v433
  %v481 = vmul.f32 %v277, %v433
  %v482 = vmul.f32 %v278, %v433
  %v483 = vld [vmem:[%s2] sm:$0x1]
  %v485 = vlaneseq
  %v486 = vshrl.u32 %v485, 7
  %v487 = vsub.s32 0, %v486
  %v488 = vrot.slane %v483, %v487
  %v490 = vmul.f32 %v434, %v488
  %v491 = vmul.f32 %v435, %v488
  %v492 = vmul.f32 %v436, %v488
  %v493 = vmul.f32 %v437, %v488
  %v494 = vmul.f32 %v438, %v488
  %v495 = vmul.f32 %v439, %v488
  %v496 = vmul.f32 %v440, %v488
  %v497 = vmul.f32 %v441, %v488
  %v498 = vmul.f32 %v442, %v488
  %v499 = vmul.f32 %v443, %v488
  %v500 = vmul.f32 %v444, %v488
  %v501 = vmul.f32 %v445, %v488
  %v502 = vmul.f32 %v446, %v488
  %v503 = vmul.f32 %v447, %v488
  %v504 = vmul.f32 %v448, %v488
  %v505 = vmul.f32 %v449, %v488
  %v506 = vmul.f32 %v450, %v488
  %v507 = vmul.f32 %v451, %v488
  %v508 = vmul.f32 %v452, %v488
  %v509 = vmul.f32 %v453, %v488
  %v510 = vmul.f32 %v454, %v488
  %v511 = vmul.f32 %v455, %v488
  %v512 = vmul.f32 %v456, %v488
  %v513 = vmul.f32 %v457, %v488
  %v514 = vmul.f32 %v458, %v488
  %v515 = vmul.f32 %v459, %v488
  %v516 = vmul.f32 %v460, %v488
  %v517 = vmul.f32 %v461, %v488
  %v518 = vmul.f32 %v462, %v488
  %v519 = vmul.f32 %v463, %v488
  %v520 = vmul.f32 %v464, %v488
  %v521 = vmul.f32 %v465, %v488
  %v522 = vmul.f32 %v466, %v488
  %v523 = vmul.f32 %v467, %v488
  %v524 = vmul.f32 %v468, %v488
  %v525 = vmul.f32 %v469, %v488
  %v526 = vmul.f32 %v470, %v488
  %v527 = vmul.f32 %v471, %v488
  %v528 = vmul.f32 %v472, %v488
  %v529 = vmul.f32 %v473, %v488
  %v530 = vmul.f32 %v474, %v488
  %v531 = vmul.f32 %v475, %v488
  %v532 = vmul.f32 %v476, %v488
  %v533 = vmul.f32 %v477, %v488
  %v534 = vmul.f32 %v478, %v488
  %v535 = vmul.f32 %v479, %v488
  %v536 = vmul.f32 %v480, %v488
  %v537 = vmul.f32 %v481, %v488
  %v538 = vmul.f32 %v482, %v488
  %v539 = vld [vmem:[%s3] sm:$0x1]
  %v541 = vlaneseq
  %v542 = vshrl.u32 %v541, 7
  %v543 = vsub.s32 0, %v542
  %v544 = vrot.slane %v539, %v543
  %v546 = vadd.f32 %v490, %v544
  %v547 = vadd.f32 %v491, %v544
  %v548 = vadd.f32 %v492, %v544
  %v549 = vadd.f32 %v493, %v544
  %v550 = vadd.f32 %v494, %v544
  %v551 = vadd.f32 %v495, %v544
  %v552 = vadd.f32 %v496, %v544
  %v553 = vadd.f32 %v497, %v544
  %v554 = vadd.f32 %v498, %v544
  %v555 = vadd.f32 %v499, %v544
  %v556 = vadd.f32 %v500, %v544
  %v557 = vadd.f32 %v501, %v544
  %v558 = vadd.f32 %v502, %v544
  %v559 = vadd.f32 %v503, %v544
  %v560 = vadd.f32 %v504, %v544
  %v561 = vadd.f32 %v505, %v544
  %v562 = vadd.f32 %v506, %v544
  %v563 = vadd.f32 %v507, %v544
  %v564 = vadd.f32 %v508, %v544
  %v565 = vadd.f32 %v509, %v544
  %v566 = vadd.f32 %v510, %v544
  %v567 = vadd.f32 %v511, %v544
  %v568 = vadd.f32 %v512, %v544
  %v569 = vadd.f32 %v513, %v544
  %v570 = vadd.f32 %v514, %v544
  %v571 = vadd.f32 %v515, %v544
  %v572 = vadd.f32 %v516, %v544
  %v573 = vadd.f32 %v517, %v544
  %v574 = vadd.f32 %v518, %v544
  %v575 = vadd.f32 %v519, %v544
  %v576 = vadd.f32 %v520, %v544
  %v577 = vadd.f32 %v521, %v544
  %v578 = vadd.f32 %v522, %v544
  %v579 = vadd.f32 %v523, %v544
  %v580 = vadd.f32 %v524, %v544
  %v581 = vadd.f32 %v525, %v544
  %v582 = vadd.f32 %v526, %v544
  %v583 = vadd.f32 %v527, %v544
  %v584 = vadd.f32 %v528, %v544
  %v585 = vadd.f32 %v529, %v544
  %v586 = vadd.f32 %v530, %v544
  %v587 = vadd.f32 %v531, %v544
  %v588 = vadd.f32 %v532, %v544
  %v589 = vadd.f32 %v533, %v544
  %v590 = vadd.f32 %v534, %v544
  %v591 = vadd.f32 %v535, %v544
  %v592 = vadd.f32 %v536, %v544
  %v593 = vadd.f32 %v537, %v544
  %v594 = vadd.f32 %v538, %v544
  %v595 = vmax.f32 %v546, 0.0
  %v596 = vmax.f32 %v547, 0.0
  %v597 = vmax.f32 %v548, 0.0
  %v598 = vmax.f32 %v549, 0.0
  %v599 = vmax.f32 %v550, 0.0
  %v600 = vmax.f32 %v551, 0.0
  %v601 = vmax.f32 %v552, 0.0
  %v602 = vmax.f32 %v553, 0.0
  %v603 = vmax.f32 %v554, 0.0
  %v604 = vmax.f32 %v555, 0.0
  %v605 = vmax.f32 %v556, 0.0
  %v606 = vmax.f32 %v557, 0.0
  %v607 = vmax.f32 %v558, 0.0
  %v608 = vmax.f32 %v559, 0.0
  %v609 = vmax.f32 %v560, 0.0
  %v610 = vmax.f32 %v561, 0.0
  %v611 = vmax.f32 %v562, 0.0
  %v612 = vmax.f32 %v563, 0.0
  %v613 = vmax.f32 %v564, 0.0
  %v614 = vmax.f32 %v565, 0.0
  %v615 = vmax.f32 %v566, 0.0
  %v616 = vmax.f32 %v567, 0.0
  %v617 = vmax.f32 %v568, 0.0
  %v618 = vmax.f32 %v569, 0.0
  %v619 = vmax.f32 %v570, 0.0
  %v620 = vmax.f32 %v571, 0.0
  %v621 = vmax.f32 %v572, 0.0
  %v622 = vmax.f32 %v573, 0.0
  %v623 = vmax.f32 %v574, 0.0
  %v624 = vmax.f32 %v575, 0.0
  %v625 = vmax.f32 %v576, 0.0
  %v626 = vmax.f32 %v577, 0.0
  %v627 = vmax.f32 %v578, 0.0
  %v628 = vmax.f32 %v579, 0.0
  %v629 = vmax.f32 %v580, 0.0
  %v630 = vmax.f32 %v581, 0.0
  %v631 = vmax.f32 %v582, 0.0
  %v632 = vmax.f32 %v583, 0.0
  %v633 = vmax.f32 %v584, 0.0
  %v634 = vmax.f32 %v585, 0.0
  %v635 = vmax.f32 %v586, 0.0
  %v636 = vmax.f32 %v587, 0.0
  %v637 = vmax.f32 %v588, 0.0
  %v638 = vmax.f32 %v589, 0.0
  %v639 = vmax.f32 %v590, 0.0
  %v640 = vmax.f32 %v591, 0.0
  %v641 = vmax.f32 %v592, 0.0
  %v642 = vmax.f32 %v593, 0.0
  %v643 = vmax.f32 %v594, 0.0
  %v644 = vld [vmem:[%s4] sm:$0xff]
  %v645 = vld [vmem:[%s4 + $0x8] sm:$0xff]
  %v646 = vld [vmem:[%s4 + $0x10] sm:$0xff]
  %v647 = vld [vmem:[%s4 + $0x18] sm:$0xff]
  %v649 = vsel %vm125, %v595, 0
  %v652 = vsel %vm125, %v596, 0
  %v655 = vsel %vm125, %v597, 0
  %v658 = vsel %vm125, %v598, 0
  %v661 = vsel %vm125, %v599, 0
  %v664 = vsel %vm125, %v600, 0
  %v667 = vsel %vm125, %v601, 0
  %v670 = vsel %vm125, %v602, 0
  %v673 = vsel %vm125, %v603, 0
  %v676 = vsel %vm125, %v604, 0
  %v679 = vsel %vm125, %v605, 0
  %v682 = vsel %vm125, %v606, 0
  %v685 = vsel %vm125, %v607, 0
  %v688 = vsel %vm125, %v608, 0
  %v691 = vsel %vm125, %v609, 0
  %v694 = vsel %vm125, %v610, 0
  %v697 = vsel %vm125, %v611, 0
  %v700 = vsel %vm125, %v612, 0
  %v703 = vsel %vm125, %v613, 0
  %v706 = vsel %vm125, %v614, 0
  %v709 = vsel %vm125, %v615, 0
  %v712 = vsel %vm125, %v616, 0
  %v715 = vsel %vm125, %v617, 0
  %v718 = vsel %vm125, %v618, 0
  %v721 = vsel %vm125, %v619, 0
  %v724 = vsel %vm125, %v620, 0
  %v727 = vsel %vm125, %v621, 0
  %v730 = vsel %vm125, %v622, 0
  %v733 = vsel %vm125, %v623, 0
  %v736 = vsel %vm125, %v624, 0
  %v739 = vsel %vm125, %v625, 0
  %v742 = vsel %vm125, %v626, 0
  %v745 = vsel %vm125, %v627, 0
  %v748 = vsel %vm125, %v628, 0
  %v751 = vsel %vm125, %v629, 0
  %v754 = vsel %vm125, %v630, 0
  %v757 = vsel %vm125, %v631, 0
  %v760 = vsel %vm125, %v632, 0
  %v763 = vsel %vm125, %v633, 0
  %v766 = vsel %vm125, %v634, 0
  %v769 = vsel %vm125, %v635, 0
  %v772 = vsel %vm125, %v636, 0
  %v775 = vsel %vm125, %v637, 0
  %v778 = vsel %vm125, %v638, 0
  %v781 = vsel %vm125, %v639, 0
  %v784 = vsel %vm125, %v640, 0
  %v787 = vsel %vm125, %v641, 0
  %v790 = vsel %vm125, %v642, 0
  %v793 = vsel %vm125, %v643, 0
  %795 = vmatprep.subr.mxu0 0.0
  %796 = vmatpush1.msra.mxu0 0.0
  %797 = vmatprep.subr.mxu0 0.0
  %798 = vmatpush1.msra.mxu0 0.0
  %799 = vmatprep.subr.mxu0 0.0
  %800 = vmatpush1.msra.mxu0 0.0
  %801 = vmatprep.subr.mxu0 0.0
  %802 = vmatpush1.msra.mxu0 0.0
  %803 = vmatprep.subr.mxu0 0.0
  %804 = vmatpush1.msra.mxu0 0.0
  %805 = vmatprep.subr.mxu0 0.0
  %806 = vmatpush1.msra.mxu0 0.0
  %807 = vmatprep.subr.mxu0 0.0
  %808 = vmatpush1.msra.mxu0 0.0
  %809 = vmatprep.subr.mxu0 0.0
  %810 = vmatpush1.msra.mxu0 0.0
  %811 = vmatprep.subr.mxu0 0.0
  %812 = vmatpush1.msra.mxu0 0.0
  %813 = vmatprep.subr.mxu0 0.0
  %814 = vmatpush1.msra.mxu0 0.0
  %815 = vmatprep.subr.mxu0 0.0
  %816 = vmatpush1.msra.mxu0 0.0
  %817 = vmatprep.subr.mxu0 0.0
  %818 = vmatpush1.msra.mxu0 0.0
  %819 = vmatprep.subr.mxu0 0.0
  %820 = vmatpush1.msra.mxu0 %v647
  %821 = vmatprep.subr.mxu0 0.0
  %822 = vmatpush1.msra.mxu0 %v646
  %823 = vmatprep.subr.mxu0 0.0
  %824 = vmatpush1.msra.mxu0 %v645
  %825 = vmatprep.subr.mxu0 0.0
  %826 = vmatpush1.msra.mxu0 %v644
  %827 = vmatprep.subr.mxu0 0.0
  %828 = vmatpush2.msra.mxu0 0.0
  %829 = vmatprep.subr.mxu0 0.0
  %830 = vmatpush2.msra.mxu0 0.0
  %831 = vmatprep.subr.mxu0 0.0
  %832 = vmatpush2.msra.mxu0 0.0
  %833 = vmatprep.subr.mxu0 0.0
  %834 = vmatpush2.msra.mxu0 0.0
  %835 = vmatprep.subr.mxu0 0.0
  %836 = vmatpush2.msra.mxu0 0.0
  %837 = vmatprep.subr.mxu0 0.0
  %838 = vmatpush2.msra.mxu0 0.0
  %839 = vmatprep.subr.mxu0 0.0
  %840 = vmatpush2.msra.mxu0 0.0
  %841 = vmatprep.subr.mxu0 0.0
  %842 = vmatpush2.msra.mxu0 0.0
  %843 = vmatprep.subr.mxu0 0.0
  %844 = vmatpush2.msra.mxu0 0.0
  %845 = vmatprep.subr.mxu0 0.0
  %846 = vmatpush2.msra.mxu0 0.0
  %847 = vmatprep.subr.mxu0 0.0
  %848 = vmatpush2.msra.mxu0 0.0
  %849 = vmatprep.subr.mxu0 0.0
  %850 = vmatpush2.msra.mxu0 0.0
  %851 = vmatprep.subr.mxu0 0.0
  %852 = vmatpush2.msra.mxu0 0.0
  %853 = vmatprep.subr.mxu0 0.0
  %854 = vmatpush2.msra.mxu0 0.0
  %855 = vmatprep.subr.mxu0 0.0
  %856 = vmatpush2.msra.mxu0 0.0
  %857 = vmatprep.subr.mxu0 0.0
  %858 = vmatpush2.msra.mxu0 0.0
  %859 = vmatprep.mubr.f32.mxu0 0.0
  %860 = vmatmul.mubr.f32.gmra.mxu0 %v649
  %v861 = vpop.f32.mrf.mxu0
  %v862 = vadd.f32 0.0, %v861
  %v863 = vpop.f32.mrf.mxu0
  %864 = vmatprep.mubr.f32.mxu0 0.0
  %865 = vmatmul.mubr.f32.gmra.mxu0 %v652
  %v866 = vpop.f32.mrf.mxu0
  %v867 = vadd.f32 0.0, %v866
  %v868 = vpop.f32.mrf.mxu0
  %869 = vmatprep.mubr.f32.mxu0 0.0
  %870 = vmatmul.mubr.f32.gmra.mxu0 %v655
  %v871 = vpop.f32.mrf.mxu0
  %v872 = vadd.f32 0.0, %v871
  %v873 = vpop.f32.mrf.mxu0
  %874 = vmatprep.mubr.f32.mxu0 0.0
  %875 = vmatmul.mubr.f32.gmra.mxu0 %v658
  %v876 = vpop.f32.mrf.mxu0
  %v877 = vadd.f32 0.0, %v876
  %v878 = vpop.f32.mrf.mxu0
  %879 = vmatprep.mubr.f32.mxu0 0.0
  %880 = vmatmul.mubr.f32.gmra.mxu0 %v661
  %v881 = vpop.f32.mrf.mxu0
  %v882 = vadd.f32 0.0, %v881
  %v883 = vpop.f32.mrf.mxu0
  %884 = vmatprep.mubr.f32.mxu0 0.0
  %885 = vmatmul.mubr.f32.gmra.mxu0 %v664
  %v886 = vpop.f32.mrf.mxu0
  %v887 = vadd.f32 0.0, %v886
  %v888 = vpop.f32.mrf.mxu0
  %889 = vmatprep.mubr.f32.mxu0 0.0
  %890 = vmatmul.mubr.f32.gmra.mxu0 %v667
  %v891 = vpop.f32.mrf.mxu0
  %v892 = vadd.f32 0.0, %v891
  %v893 = vpop.f32.mrf.mxu0
  %894 = vmatprep.mubr.f32.mxu0 0.0
  %895 = vmatmul.mubr.f32.gmra.mxu0 %v670
  %v896 = vpop.f32.mrf.mxu0
  %v897 = vadd.f32 0.0, %v896
  %v898 = vpop.f32.mrf.mxu0
  %899 = vmatprep.mubr.f32.mxu0 0.0
  %900 = vmatmul.mubr.f32.gmra.mxu0 %v673
  %v901 = vpop.f32.mrf.mxu0
  %v902 = vadd.f32 0.0, %v901
  %v903 = vpop.f32.mrf.mxu0
  %904 = vmatprep.mubr.f32.mxu0 0.0
  %905 = vmatmul.mubr.f32.gmra.mxu0 %v676
  %v906 = vpop.f32.mrf.mxu0
  %v907 = vadd.f32 0.0, %v906
  %v908 = vpop.f32.mrf.mxu0
  %909 = vmatprep.mubr.f32.mxu0 0.0
  %910 = vmatmul.mubr.f32.gmra.mxu0 %v679
  %v911 = vpop.f32.mrf.mxu0
  %v912 = vadd.f32 0.0, %v911
  %v913 = vpop.f32.mrf.mxu0
  %914 = vmatprep.mubr.f32.mxu0 0.0
  %915 = vmatmul.mubr.f32.gmra.mxu0 %v682
  %v916 = vpop.f32.mrf.mxu0
  %v917 = vadd.f32 0.0, %v916
  %v918 = vpop.f32.mrf.mxu0
  %919 = vmatprep.mubr.f32.mxu0 0.0
  %920 = vmatmul.mubr.f32.gmra.mxu0 %v685
  %v921 = vpop.f32.mrf.mxu0
  %v922 = vadd.f32 0.0, %v921
  %v923 = vpop.f32.mrf.mxu0
  %924 = vmatprep.mubr.f32.mxu0 0.0
  %925 = vmatmul.mubr.f32.gmra.mxu0 %v688
  %v926 = vpop.f32.mrf.mxu0
  %v927 = vadd.f32 0.0, %v926
  %v928 = vpop.f32.mrf.mxu0
  %929 = vmatprep.mubr.f32.mxu0 0.0
  %930 = vmatmul.mubr.f32.gmra.mxu0 %v691
  %v931 = vpop.f32.mrf.mxu0
  %v932 = vadd.f32 0.0, %v931
  %v933 = vpop.f32.mrf.mxu0
  %934 = vmatprep.mubr.f32.mxu0 0.0
  %935 = vmatmul.mubr.f32.gmra.mxu0 %v694
  %v936 = vpop.f32.mrf.mxu0
  %v937 = vadd.f32 0.0, %v936
  %v938 = vpop.f32.mrf.mxu0
  %939 = vmatprep.mubr.f32.mxu0 0.0
  %940 = vmatmul.mubr.f32.gmra.mxu0 %v697
  %v941 = vpop.f32.mrf.mxu0
  %v942 = vadd.f32 0.0, %v941
  %v943 = vpop.f32.mrf.mxu0
  %944 = vmatprep.mubr.f32.mxu0 0.0
  %945 = vmatmul.mubr.f32.gmra.mxu0 %v700
  %v946 = vpop.f32.mrf.mxu0
  %v947 = vadd.f32 0.0, %v946
  %v948 = vpop.f32.mrf.mxu0
  %949 = vmatprep.mubr.f32.mxu0 0.0
  %950 = vmatmul.mubr.f32.gmra.mxu0 %v703
  %v951 = vpop.f32.mrf.mxu0
  %v952 = vadd.f32 0.0, %v951
  %v953 = vpop.f32.mrf.mxu0
  %954 = vmatprep.mubr.f32.mxu0 0.0
  %955 = vmatmul.mubr.f32.gmra.mxu0 %v706
  %v956 = vpop.f32.mrf.mxu0
  %v957 = vadd.f32 0.0, %v956
  %v958 = vpop.f32.mrf.mxu0
  %959 = vmatprep.mubr.f32.mxu0 0.0
  %960 = vmatmul.mubr.f32.gmra.mxu0 %v709
  %v961 = vpop.f32.mrf.mxu0
  %v962 = vadd.f32 0.0, %v961
  %v963 = vpop.f32.mrf.mxu0
  %964 = vmatprep.mubr.f32.mxu0 0.0
  %965 = vmatmul.mubr.f32.gmra.mxu0 %v712
  %v966 = vpop.f32.mrf.mxu0
  %v967 = vadd.f32 0.0, %v966
  %v968 = vpop.f32.mrf.mxu0
  %969 = vmatprep.mubr.f32.mxu0 0.0
  %970 = vmatmul.mubr.f32.gmra.mxu0 %v715
  %v971 = vpop.f32.mrf.mxu0
  %v972 = vadd.f32 0.0, %v971
  %v973 = vpop.f32.mrf.mxu0
  %974 = vmatprep.mubr.f32.mxu0 0.0
  %975 = vmatmul.mubr.f32.gmra.mxu0 %v718
  %v976 = vpop.f32.mrf.mxu0
  %v977 = vadd.f32 0.0, %v976
  %v978 = vpop.f32.mrf.mxu0
  %979 = vmatprep.mubr.f32.mxu0 0.0
  %980 = vmatmul.mubr.f32.gmra.mxu0 %v721
  %v981 = vpop.f32.mrf.mxu0
  %v982 = vadd.f32 0.0, %v981
  %v983 = vpop.f32.mrf.mxu0
  %984 = vmatprep.mubr.f32.mxu0 0.0
  %985 = vmatmul.mubr.f32.gmra.mxu0 %v724
  %v986 = vpop.f32.mrf.mxu0
  %v987 = vadd.f32 0.0, %v986
  %v988 = vpop.f32.mrf.mxu0
  %989 = vmatprep.mubr.f32.mxu0 0.0
  %990 = vmatmul.mubr.f32.gmra.mxu0 %v727
  %v991 = vpop.f32.mrf.mxu0
  %v992 = vadd.f32 0.0, %v991
  %v993 = vpop.f32.mrf.mxu0
  %994 = vmatprep.mubr.f32.mxu0 0.0
  %995 = vmatmul.mubr.f32.gmra.mxu0 %v730
  %v996 = vpop.f32.mrf.mxu0
  %v997 = vadd.f32 0.0, %v996
  %v998 = vpop.f32.mrf.mxu0
  %999 = vmatprep.mubr.f32.mxu0 0.0
  %1000 = vmatmul.mubr.f32.gmra.mxu0 %v733
  %v1001 = vpop.f32.mrf.mxu0
  %v1002 = vadd.f32 0.0, %v1001
  %v1003 = vpop.f32.mrf.mxu0
  %1004 = vmatprep.mubr.f32.mxu0 0.0
  %1005 = vmatmul.mubr.f32.gmra.mxu0 %v736
  %v1006 = vpop.f32.mrf.mxu0
  %v1007 = vadd.f32 0.0, %v1006
  %v1008 = vpop.f32.mrf.mxu0
  %1009 = vmatprep.mubr.f32.mxu0 0.0
  %1010 = vmatmul.mubr.f32.gmra.mxu0 %v739
  %v1011 = vpop.f32.mrf.mxu0
  %v1012 = vadd.f32 0.0, %v1011
  %v1013 = vpop.f32.mrf.mxu0
  %1014 = vmatprep.mubr.f32.mxu0 0.0
  %1015 = vmatmul.mubr.f32.gmra.mxu0 %v742
  %v1016 = vpop.f32.mrf.mxu0
  %v1017 = vadd.f32 0.0, %v1016
  %v1018 = vpop.f32.mrf.mxu0
  %1019 = vmatprep.mubr.f32.mxu0 0.0
  %1020 = vmatmul.mubr.f32.gmra.mxu0 %v745
  %v1021 = vpop.f32.mrf.mxu0
  %v1022 = vadd.f32 0.0, %v1021
  %v1023 = vpop.f32.mrf.mxu0
  %1024 = vmatprep.mubr.f32.mxu0 0.0
  %1025 = vmatmul.mubr.f32.gmra.mxu0 %v748
  %v1026 = vpop.f32.mrf.mxu0
  %v1027 = vadd.f32 0.0, %v1026
  %v1028 = vpop.f32.mrf.mxu0
  %1029 = vmatprep.mubr.f32.mxu0 0.0
  %1030 = vmatmul.mubr.f32.gmra.mxu0 %v751
  %v1031 = vpop.f32.mrf.mxu0
  %v1032 = vadd.f32 0.0, %v1031
  %v1033 = vpop.f32.mrf.mxu0
  %1034 = vmatprep.mubr.f32.mxu0 0.0
  %1035 = vmatmul.mubr.f32.gmra.mxu0 %v754
  %v1036 = vpop.f32.mrf.mxu0
  %v1037 = vadd.f32 0.0, %v1036
  %v1038 = vpop.f32.mrf.mxu0
  %1039 = vmatprep.mubr.f32.mxu0 0.0
  %1040 = vmatmul.mubr.f32.gmra.mxu0 %v757
  %v1041 = vpop.f32.mrf.mxu0
  %v1042 = vadd.f32 0.0, %v1041
  %v1043 = vpop.f32.mrf.mxu0
  %1044 = vmatprep.mubr.f32.mxu0 0.0
  %1045 = vmatmul.mubr.f32.gmra.mxu0 %v760
  %v1046 = vpop.f32.mrf.mxu0
  %v1047 = vadd.f32 0.0, %v1046
  %v1048 = vpop.f32.mrf.mxu0
  %1049 = vmatprep.mubr.f32.mxu0 0.0
  %1050 = vmatmul.mubr.f32.gmra.mxu0 %v763
  %v1051 = vpop.f32.mrf.mxu0
  %v1052 = vadd.f32 0.0, %v1051
  %v1053 = vpop.f32.mrf.mxu0
  %1054 = vmatprep.mubr.f32.mxu0 0.0
  %1055 = vmatmul.mubr.f32.gmra.mxu0 %v766
  %v1056 = vpop.f32.mrf.mxu0
  %v1057 = vadd.f32 0.0, %v1056
  %v1058 = vpop.f32.mrf.mxu0
  %1059 = vmatprep.mubr.f32.mxu0 0.0
  %1060 = vmatmul.mubr.f32.gmra.mxu0 %v769
  %v1061 = vpop.f32.mrf.mxu0
  %v1062 = vadd.f32 0.0, %v1061
  %v1063 = vpop.f32.mrf.mxu0
  %1064 = vmatprep.mubr.f32.mxu0 0.0
  %1065 = vmatmul.mubr.f32.gmra.mxu0 %v772
  %v1066 = vpop.f32.mrf.mxu0
  %v1067 = vadd.f32 0.0, %v1066
  %v1068 = vpop.f32.mrf.mxu0
  %1069 = vmatprep.mubr.f32.mxu0 0.0
  %1070 = vmatmul.mubr.f32.gmra.mxu0 %v775
  %v1071 = vpop.f32.mrf.mxu0
  %v1072 = vadd.f32 0.0, %v1071
  %v1073 = vpop.f32.mrf.mxu0
  %1074 = vmatprep.mubr.f32.mxu0 0.0
  %1075 = vmatmul.mubr.f32.gmra.mxu0 %v778
  %v1076 = vpop.f32.mrf.mxu0
  %v1077 = vadd.f32 0.0, %v1076
  %v1078 = vpop.f32.mrf.mxu0
  %1079 = vmatprep.mubr.f32.mxu0 0.0
  %1080 = vmatmul.mubr.f32.gmra.mxu0 %v781
  %v1081 = vpop.f32.mrf.mxu0
  %v1082 = vadd.f32 0.0, %v1081
  %v1083 = vpop.f32.mrf.mxu0
  %1084 = vmatprep.mubr.f32.mxu0 0.0
  %1085 = vmatmul.mubr.f32.gmra.mxu0 %v784
  %v1086 = vpop.f32.mrf.mxu0
  %v1087 = vadd.f32 0.0, %v1086
  %v1088 = vpop.f32.mrf.mxu0
  %1089 = vmatprep.mubr.f32.mxu0 0.0
  %1090 = vmatmul.mubr.f32.gmra.mxu0 %v787
  %v1091 = vpop.f32.mrf.mxu0
  %v1092 = vadd.f32 0.0, %v1091
  %v1093 = vpop.f32.mrf.mxu0
  %1094 = vmatprep.mubr.f32.mxu0 0.0
  %1095 = vmatmul.mubr.f32.gmra.mxu0 %v790
  %v1096 = vpop.f32.mrf.mxu0
  %v1097 = vadd.f32 0.0, %v1096
  %v1098 = vpop.f32.mrf.mxu0
  %1099 = vmatprep.mubr.f32.mxu0 0.0
  %1100 = vmatmul.mubr.f32.gmra.mxu0 %v793
  %v1101 = vpop.f32.mrf.mxu0
  %v1102 = vadd.f32 0.0, %v1101
  %v1103 = vpop.f32.mrf.mxu0
  %1104 = vdwg.mxu0
  %vm1105 = vcmask 130048
  %1106 = vst.msk [vmem:[%s5] sm:$0xff] %vm1105, %v862
  %1107 = vst.msk [vmem:[%s5 + $0x8] sm:$0xff] %vm1105, %v867
  %1108 = vst.msk [vmem:[%s5 + $0x10] sm:$0xff] %vm1105, %v872
  %1109 = vst.msk [vmem:[%s5 + $0x18] sm:$0xff] %vm1105, %v877
  %1110 = vst.msk [vmem:[%s5 + $0x20] sm:$0xff] %vm1105, %v882
  %1111 = vst.msk [vmem:[%s5 + $0x28] sm:$0xff] %vm1105, %v887
  %1112 = vst.msk [vmem:[%s5 + $0x30] sm:$0xff] %vm1105, %v892
  %1113 = vst.msk [vmem:[%s5 + $0x38] sm:$0xff] %vm1105, %v897
  %1114 = vst.msk [vmem:[%s5 + $0x40] sm:$0xff] %vm1105, %v902
  %1115 = vst.msk [vmem:[%s5 + $0x48] sm:$0xff] %vm1105, %v907
  %1116 = vst.msk [vmem:[%s5 + $0x50] sm:$0xff] %vm1105, %v912
  %1117 = vst.msk [vmem:[%s5 + $0x58] sm:$0xff] %vm1105, %v917
  %1118 = vst.msk [vmem:[%s5 + $0x60] sm:$0xff] %vm1105, %v922
  %1119 = vst.msk [vmem:[%s5 + $0x68] sm:$0xff] %vm1105, %v927
  %1120 = vst.msk [vmem:[%s5 + $0x70] sm:$0xff] %vm1105, %v932
  %1121 = vst.msk [vmem:[%s5 + $0x78] sm:$0xff] %vm1105, %v937
  %1122 = vst.msk [vmem:[%s5 + $0x80] sm:$0xff] %vm1105, %v942
  %1123 = vst.msk [vmem:[%s5 + $0x88] sm:$0xff] %vm1105, %v947
  %1124 = vst.msk [vmem:[%s5 + $0x90] sm:$0xff] %vm1105, %v952
  %1125 = vst.msk [vmem:[%s5 + $0x98] sm:$0xff] %vm1105, %v957
  %1126 = vst.msk [vmem:[%s5 + $0xa0] sm:$0xff] %vm1105, %v962
  %1127 = vst.msk [vmem:[%s5 + $0xa8] sm:$0xff] %vm1105, %v967
  %1128 = vst.msk [vmem:[%s5 + $0xb0] sm:$0xff] %vm1105, %v972
  %1129 = vst.msk [vmem:[%s5 + $0xb8] sm:$0xff] %vm1105, %v977
  %1130 = vst.msk [vmem:[%s5 + $0xc0] sm:$0xff] %vm1105, %v982
  %1131 = vst.msk [vmem:[%s5 + $0xc8] sm:$0xff] %vm1105, %v987
  %1132 = vst.msk [vmem:[%s5 + $0xd0] sm:$0xff] %vm1105, %v992
  %1133 = vst.msk [vmem:[%s5 + $0xd8] sm:$0xff] %vm1105, %v997
  %1134 = vst.msk [vmem:[%s5 + $0xe0] sm:$0xff] %vm1105, %v1002
  %1135 = vst.msk [vmem:[%s5 + $0xe8] sm:$0xff] %vm1105, %v1007
  %1136 = vst.msk [vmem:[%s5 + $0xf0] sm:$0xff] %vm1105, %v1012
  %1137 = vst.msk [vmem:[%s5 + $0xf8] sm:$0xff] %vm1105, %v1017
  %1138 = vst.msk [vmem:[%s5 + $0x100] sm:$0xff] %vm1105, %v1022
  %1139 = vst.msk [vmem:[%s5 + $0x108] sm:$0xff] %vm1105, %v1027
  %1140 = vst.msk [vmem:[%s5 + $0x110] sm:$0xff] %vm1105, %v1032
  %1141 = vst.msk [vmem:[%s5 + $0x118] sm:$0xff] %vm1105, %v1037
  %1142 = vst.msk [vmem:[%s5 + $0x120] sm:$0xff] %vm1105, %v1042
  %1143 = vst.msk [vmem:[%s5 + $0x128] sm:$0xff] %vm1105, %v1047
  %1144 = vst.msk [vmem:[%s5 + $0x130] sm:$0xff] %vm1105, %v1052
  %1145 = vst.msk [vmem:[%s5 + $0x138] sm:$0xff] %vm1105, %v1057
  %1146 = vst.msk [vmem:[%s5 + $0x140] sm:$0xff] %vm1105, %v1062
  %1147 = vst.msk [vmem:[%s5 + $0x148] sm:$0xff] %vm1105, %v1067
  %1148 = vst.msk [vmem:[%s5 + $0x150] sm:$0xff] %vm1105, %v1072
  %1149 = vst.msk [vmem:[%s5 + $0x158] sm:$0xff] %vm1105, %v1077
  %1150 = vst.msk [vmem:[%s5 + $0x160] sm:$0xff] %vm1105, %v1082
  %1151 = vst.msk [vmem:[%s5 + $0x168] sm:$0xff] %vm1105, %v1087
  %1152 = vst.msk [vmem:[%s5 + $0x170] sm:$0xff] %vm1105, %v1092
  %1153 = vst.msk [vmem:[%s5 + $0x178] sm:$0xff] %vm1105, %v1097
  %1154 = vst.msk [vmem:[%s5 + $0x180] sm:$0xff] %vm1105, %v1102
  // Predicated region
  $region22: #{generator_forward.8} parent=0 // pred_check
    _
  $region23: #{generator_forward.8} parent=0 // pred_check_branch
    %1156 = sbr.rel (0) target = $region25
  $region24: #{generator_forward.8} parent=0 // pred_region
    _
  $region25: #{generator_forward.8} parent=0 // pred_fallthru
    _
  // Predicated region
  $region26: #{generator_forward.8} parent=0 // pred_check
    _
  $region27: #{generator_forward.8} parent=0 // pred_check_branch
    %1158 = sbr.rel (0) target = $region29
  $region28: #{generator_forward.8} parent=0 // pred_region
    _
  $region29: #{generator_forward.8} parent=0 // pred_fallthru
    _

// kernel: generator_forward.9
$region0: #{generator_forward.9}
  #allocation0 [shape = 'u32[]', space=smem, size = 0x4, offset = 0x4, fixed_abs, tag = 'smem constant byte address 0x4 - core index']
  #allocation1 [shape = 'u32[144,128]{1,0:T(1,128)}', space=vmem, size = 0x12000, scoped, tag = 'internal scratch']
  #allocation2 [shape = 'f32[1,1,1]{2,1,0:T(1,128)S(1)}', space=vmem, size = 0x200, scoped, tag = 'scoped memory for generator_forward.9']
  %s0 = inlined_call_operand.vmem [shape: f32[2,28,28], index: 0, kind: input, shape index: {}]
  %s1 = inlined_call_operand.<no memory space> [shape: f32[1,1,1], index: 1, kind: input, shape index: {}]
  %s2 = inlined_call_operand.vmem [shape: f32[2,28,28], index: 2, kind: output, shape index: {}]
  %s3 = sld [smem:[#allocation0]]
  $region18: #{generator_forward.9} parent=0
    _
  %s5 = ssub.s32 1, %s3
  %s6 = scalar_select 0, %s5, %s3
  %v7 = vstv %s1
  %8 = vst [vmem:[#allocation2] sm:$0x1] %v7
  // Predicated region
  $region2: #{generator_forward.9} parent=0 // pred_check
    _
  $region3: #{generator_forward.9} parent=0 // pred_check_branch
    %10 = sbr.rel (0) target = $region5
  $region4: #{generator_forward.9} parent=0 // pred_region
    _
  $region5: #{generator_forward.9} parent=0 // pred_fallthru
    _
  // Predicated region
  $region6: #{generator_forward.9} parent=0 // pred_check
    _
  $region7: #{generator_forward.9} parent=0 // pred_check_branch
    %12 = sbr.rel (0) target = $region9
  $region8: #{generator_forward.9} parent=0 // pred_region
    _
  $region9: #{generator_forward.9} parent=0 // pred_fallthru
    _
  %v13 = vld [vmem:[%s0] sm:$0xff]
  %v14 = vld [vmem:[%s0 + $0x8] sm:$0xff]
  %v15 = vld [vmem:[%s0 + $0x10] sm:$0xff]
  %v16 = vld [vmem:[%s0 + $0x18] sm:$0xf]
  %v17 = vld [vmem:[%s0 + $0x20] sm:$0xff]
  %v18 = vld [vmem:[%s0 + $0x28] sm:$0xff]
  %v19 = vld [vmem:[%s0 + $0x30] sm:$0xff]
  %v20 = vld [vmem:[%s0 + $0x38] sm:$0xf]
  %v21 = vld [vmem:[#allocation2] sm:$0x1]
  %v23 = vlaneseq
  %v24 = vshrl.u32 %v23, 7
  %v25 = vsub.s32 0, %v24
  %v26 = vrot.slane %v21, %v25
  %27 = vset.pattern.permute.xlu0 0
  %28 = vperm.xlu0 %27, %v26
  %v29 = vpop.permute.xlu0 %28
  %v31 = vadd.f32 %v13, %v29
  %v32 = vadd.f32 %v14, %v29
  %v33 = vadd.f32 %v15, %v29
  %v34 = vadd.f32 %v16, %v29
  %v35 = vadd.f32 %v17, %v29
  %v36 = vadd.f32 %v18, %v29
  %v37 = vadd.f32 %v19, %v29
  %v38 = vadd.f32 %v20, %v29
  %v39 = vtanh.pop %v31
  %v40 = vtanh.pop %v32
  %v41 = vtanh.pop %v33
  %v42 = vtanh.pop %v34
  %v43 = vtanh.pop %v35
  %v44 = vtanh.pop %v36
  %v45 = vtanh.pop %v37
  %v46 = vtanh.pop %v38
  %vm47 = vcmask 228352
  %48 = vst.msk [vmem:[%s2] sm:$0xff] %vm47, %v39
  %49 = vst.msk [vmem:[%s2 + $0x8] sm:$0xff] %vm47, %v40
  %50 = vst.msk [vmem:[%s2 + $0x10] sm:$0xff] %vm47, %v41
  %vm51 = vcmask 224256
  %52 = vst.msk [vmem:[%s2 + $0x18] sm:$0xf] %vm51, %v42
  %53 = vst.msk [vmem:[%s2 + $0x20] sm:$0xff] %vm47, %v43
  %54 = vst.msk [vmem:[%s2 + $0x28] sm:$0xff] %vm47, %v44
  %55 = vst.msk [vmem:[%s2 + $0x30] sm:$0xff] %vm47, %v45
  %56 = vst.msk [vmem:[%s2 + $0x38] sm:$0xf] %vm51, %v46
  // Predicated region
  $region10: #{generator_forward.9} parent=0 // pred_check
    _
  $region11: #{generator_forward.9} parent=0 // pred_check_branch
    %58 = sbr.rel (0) target = $region13
  $region12: #{generator_forward.9} parent=0 // pred_region
    _
  $region13: #{generator_forward.9} parent=0 // pred_fallthru
    _
  // Predicated region
  $region14: #{generator_forward.9} parent=0 // pred_check
    _
  $region15: #{generator_forward.9} parent=0 // pred_check_branch
    %60 = sbr.rel (0) target = $region17
  $region16: #{generator_forward.9} parent=0 // pred_region
    _
  $region17: #{generator_forward.9} parent=0 // pred_fallthru
    _

</llo_original>
